<compile_context>
chip_gen: v7x
topology: tpu7x:2x2x1
jax: 0.10.0
libtpu: 0.0.40
codegen_flags: <defaults>
</compile_context>

<pallas_src>
import numpy as np

import jax
import jax.numpy as jnp
from jax.experimental import pallas as pl
from jax.experimental.pallas import tpu as pltpu


# ------------------------------ fused kernel -------------------------------

def _lenet_kernel(x_ref, w1_ref, b1_ref, p1_ref, w2_ref, b2_ref, p2_ref,
                  wf1_ref, bf1_ref, wf2_ref, bf2_ref, wf3_ref, bf3_ref,
                  osel_ref, o_ref):
    f32, bf16 = jnp.float32, jnp.bfloat16

    def band_accumulate(y, kh, rows_out, blk):
        # y: (R, kh*blk).  acc[r, :] = sum_i y[r + i, i*blk:(i+1)*blk].
        # Lane offsets i*blk are 128-aligned -> only cheap sublane shifts remain.
        acc = y[0:rows_out, 0:blk]
        for i in range(1, kh):
            acc = acc + y[i:i + rows_out, i * blk:(i + 1) * blk]
        return acc

    def pool_2x2(c, p_ref, half_rows):
        # Width half of the 2x2 pool: the two 128-lane halves hold the two
        # width parities (folded into the band matrices' output permutation).
        wmax = jnp.maximum(c[:, 0:128], c[:, 128:256]).astype(bf16)
        # Height half + per-image row compaction: one 0/1 block-diagonal
        # selection matmul (exact in bf16), then a sublane-half max.
        r = jnp.dot(p_ref[...], wmax, preferred_element_type=f32)
        return jnp.maximum(r[0:half_rows], r[half_rows:2 * half_rows])

    x = x_ref[...]                                        # (BT*32, 32) bf16
    rows = x.shape[0]                                     # BT*32

    # conv1 + relu: banded-weight matmul; 5 kernel-row contributions combined
    # with 128-aligned shifted slices.  Valid rows: b*32 + ho, ho < 28.
    y1 = jnp.dot(x, w1_ref[...], preferred_element_type=f32)            # (BT*32, 1280)
    c1 = jnp.maximum(band_accumulate(y1, 5, rows - 4, 256) + b1_ref[...], 0.0)

    # pool1 -> (BT*16, 128): rows b*16 + hp (hp < 14 valid), lanes w*6 + c.
    s2 = pool_2x2(c1, p1_ref, rows // 2)

    # conv2 + relu.  Valid rows: b*16 + ho, ho < 10.
    y2 = jnp.dot(s2.astype(bf16), w2_ref[...], preferred_element_type=f32)   # (BT*16, 1280)
    c3 = jnp.maximum(band_accumulate(y2, 5, rows // 2 - 4, 256) + b2_ref[...], 0.0)

    # pool2 -> (BT*8, 128): rows b*8 + hp (hp < 5 valid), lanes w*16 + c.
    s4 = pool_2x2(c3, p2_ref, rows // 4)

    # fc1: contraction over (h, w, c).  Lane block h of the fused weight holds
    # flatten-row h, so the same shifted-slice accumulation applies; the fc1
    # pre-activation for image b ends up in row b*8.
    t = jnp.dot(s4.astype(bf16), wf1_ref[...], preferred_element_type=f32)   # (BT*8, 640)
    f5_pre = band_accumulate(t, 5, rows // 4 - 4, 128)                       # (BT*8-4, 128)

    # Compact to one row per image (exact 0/1 selection in f32), then fc1/fc2/fc3.
    f5 = jnp.maximum(
        jnp.dot(osel_ref[...], f5_pre, preferred_element_type=f32)
        + bf1_ref[...], 0.0)                                                 # (BT, 128)
    f6 = jnp.maximum(
        jnp.dot(f5.astype(bf16), wf2_ref[...], preferred_element_type=f32)
        + bf2_ref[...], 0.0)                                                 # (BT, 128)
    o_ref[...] = (jnp.dot(f6.astype(bf16), wf3_ref[...], preferred_element_type=f32)
                  + bf3_ref[...])                                            # (BT, 128)


# ------------------------- one-time weight preparation ----------------------

def prepare_params(params, b_tile=8):
    """Precompute matmul-ready, 128-lane-aligned weight layouts for a given
    batch tile (once, OUTSIDE the jitted forward)."""
    f32 = np.float32
    bt = int(b_tile)
    assert bt >= 1

    def conv_band(w_oihw, w_in, k_pad=None, blk=256):
        # (Cout, Cin, KH, KW) -> (k_pad or W_in*Cin, KH*blk) banded matrix.
        # Output lanes of kernel-row block i are permuted to
        # (w_parity)*128 + (w//2)*Cout + cout so the width half of the
        # following 2x2 max-pool becomes a 128-aligned lane-split max.
        w = np.asarray(w_oihw, f32)
        cout, cin, kh, kw = w.shape
        w_out = w_in - kw + 1
        band = np.zeros((w_in * cin, kh, blk), f32)
        for i in range(kh):
            for wo in range(w_out):
                o0 = (wo % 2) * (blk // 2) + (wo // 2) * cout
                for j in range(kw):
                    wi = wo + j
                    band[wi * cin:(wi + 1) * cin, i, o0:o0 + cout] = w[:, :, i, j].T
        mat = band.reshape(w_in * cin, kh * blk)
        if k_pad is not None and k_pad > mat.shape[0]:
            mat = np.concatenate(
                [mat, np.zeros((k_pad - mat.shape[0], mat.shape[1]), f32)], axis=0)
        return mat

    def conv_bias(b, w_half, blk=256):
        b = np.asarray(b, f32)
        cout = b.shape[0]
        out = np.zeros((1, blk), f32)
        for p in range(2):
            for q in range(w_half):
                out[0, p * (blk // 2) + q * cout:p * (blk // 2) + (q + 1) * cout] = b
        return out

    def pool_select(h_in_blk, h_in_valid, h_out_blk):
        # 0/1 block-diagonal selector: per image b, gathers input row
        # b*h_in_blk + 2*hp + part into output row part*bt*h_out_blk +
        # b*h_out_blk + hp (the kernel maxes the two 'part' halves).  Columns
        # match the (bt*h_in_blk - 4) rows of the conv shift-accumulate output.
        n_in = bt * h_in_blk - 4
        s = np.zeros((2 * bt * h_out_blk, n_in), f32)
        for part in range(2):
            for b in range(bt):
                for hp in range(h_in_valid // 2):
                    s[part * bt * h_out_blk + b * h_out_blk + hp,
                      b * h_in_blk + 2 * hp + part] = 1.0
        return s

    # fc1 fused weight: lane block h (128 wide) holds flatten-row h; contraction
    # rows are the s4 lanes (w*16 + c).  Torch flatten order is c*25 + h*5 + w.
    fc1_w = np.asarray(params["fc1_w"], f32)                  # (120, 400)
    wf1 = np.zeros((128, 5 * 128), f32)
    for h in range(5):
        for w in range(5):
            for c in range(16):
                wf1[w * 16 + c, h * 128:h * 128 + 120] = fc1_w[:, c * 25 + h * 5 + w]

    bf1 = np.zeros((1, 128), f32); bf1[0, :120] = np.asarray(params["fc1_b"], f32)
    wf2 = np.zeros((128, 128), f32); wf2[:120, :84] = np.asarray(params["fc2_w"], f32).T
    bf2 = np.zeros((1, 128), f32); bf2[0, :84] = np.asarray(params["fc2_b"], f32)
    wf3 = np.zeros((128, 128), f32); wf3[:84, :10] = np.asarray(params["fc3_w"], f32).T
    bf3 = np.zeros((1, 128), f32); bf3[0, :10] = np.asarray(params["fc3_b"], f32)

    # Output-row compaction: picks row b*8 (the valid fc1 row of image b).
    osel = np.zeros((bt, bt * 8 - 4), f32)
    for b in range(bt):
        osel[b, b * 8] = 1.0

    bf16 = jnp.bfloat16
    return dict(
        w1=jnp.asarray(conv_band(params["conv1_w"], 32), bf16),              # (32, 1280)
        b1=jnp.asarray(conv_bias(params["conv1_b"], 14)),                    # (1, 256)
        p1=jnp.asarray(pool_select(32, 28, 16), bf16),                       # (32bt, 32bt-4)
        w2=jnp.asarray(conv_band(params["conv2_w"], 14, k_pad=128), bf16),   # (128, 1280)
        b2=jnp.asarray(conv_bias(params["conv2_b"], 5)),                     # (1, 256)
        p2=jnp.asarray(pool_select(16, 10, 8), bf16),                        # (16bt, 16bt-4)
        wf1=jnp.asarray(wf1, bf16),                                          # (128, 640)
        bf1=jnp.asarray(bf1),                                                # (1, 128)
        wf2=jnp.asarray(wf2, bf16),                                          # (128, 128)
        bf2=jnp.asarray(bf2),                                                # (1, 128)
        wf3=jnp.asarray(wf3, bf16),                                          # (128, 128)
        bf3=jnp.asarray(bf3),                                                # (1, 128)
        osel=jnp.asarray(osel),                                              # (bt, 8bt-4)
    )


# ------------------------------ forward pass --------------------------------

def net_forward(x_nchw, prep):
    """Fused LeNet forward.  x_nchw: (B, 1, 32, 32) -> (B, 10)."""
    B = x_nchw.shape[0]
    assert x_nchw.shape[1:] == (1, 32, 32), "LeNet geometry requires 1x32x32 input"
    bt = prep["osel"].shape[0]                       # batch tile (static)
    b_pad = ((B + bt - 1) // bt) * bt
    grid_steps = b_pad // bt

    x = x_nchw.reshape(B, 32, 32).astype(jnp.bfloat16)
    if b_pad != B:
        x = jnp.concatenate(
            [x, jnp.zeros((b_pad - B, 32, 32), jnp.bfloat16)], axis=0)
    x2d = x.reshape(b_pad * 32, 32)                  # images stacked along rows

    const = lambda i: (0, 0)   # weights: same block every step -> VMEM-resident
    weight_keys = ("w1", "b1", "p1", "w2", "b2", "p2",
                   "wf1", "bf1", "wf2", "bf2", "wf3", "bf3", "osel")
    out = pl.pallas_call(
        _lenet_kernel,
        out_shape=jax.ShapeDtypeStruct((b_pad, 128), jnp.float32),
        grid=(grid_steps,),
        in_specs=[pl.BlockSpec((bt * 32, 32), lambda i: (i, 0))]
                 + [pl.BlockSpec(tuple(prep[k].shape), const) for k in weight_keys],
        out_specs=pl.BlockSpec((bt, 128), lambda i: (i, 0)),
        compiler_params=pltpu.CompilerParams(
            dimension_semantics=("parallel",)),      # v7x: batch tiles split across TCs
    )(x2d, *[prep[k] for k in weight_keys])
    return out[:B, :10]


# --------------------------- pure-JAX reference ------------------------------

def net_forward_ref(x, p):
    def conv(x, w, b):
        y = jax.lax.conv_general_dilated(
            x, w, (1, 1), "VALID", dimension_numbers=("NCHW", "OIHW", "NCHW"))
        return jax.nn.relu(y + b[None, :, None, None])

    def pool(x):
        B, C, H, W = x.shape
        return jnp.max(x.reshape(B, C, H // 2, 2, W // 2, 2), axis=(3, 5))

    c1 = conv(x, p["conv1_w"], p["conv1_b"])
    s2 = pool(c1)
    c3 = conv(s2, p["conv2_w"], p["conv2_b"])
    s4 = pool(c3).reshape(x.shape[0], -1)
    f5 = jax.nn.relu(s4 @ p["fc1_w"].T + p["fc1_b"])
    f6 = jax.nn.relu(f5 @ p["fc2_w"].T + p["fc2_b"])
    return f6 @ p["fc3_w"].T + p["fc3_b"]


# ----------------------------------- main ------------------------------------

if __name__ == "__main__":
    key = jax.random.PRNGKey(0)
    ks = jax.random.split(key, 11)
    params = {
        "conv1_w": jax.random.normal(ks[0], (6, 1, 5, 5), jnp.float32) * 0.1,
        "conv1_b": jax.random.normal(ks[1], (6,), jnp.float32) * 0.1,
        "conv2_w": jax.random.normal(ks[2], (16, 6, 5, 5), jnp.float32) * 0.1,
        "conv2_b": jax.random.normal(ks[3], (16,), jnp.float32) * 0.1,
        "fc1_w": jax.random.normal(ks[4], (120, 400), jnp.float32) * 0.05,
        "fc1_b": jax.random.normal(ks[5], (120,), jnp.float32) * 0.05,
        "fc2_w": jax.random.normal(ks[6], (84, 120), jnp.float32) * 0.05,
        "fc2_b": jax.random.normal(ks[7], (84,), jnp.float32) * 0.05,
        "fc3_w": jax.random.normal(ks[8], (10, 84), jnp.float32) * 0.05,
        "fc3_b": jax.random.normal(ks[9], (10,), jnp.float32) * 0.05,
    }
    # LeNet geometry requires 32x32 spatial input (conv5->pool2->conv5->pool2 -> 5x5).
    # B=16 with B_TILE=8 gives an even, >=2 step grid (keeps both v7x TCs busy)
    # while staying small.
    B, B_TILE = 16, 8
    x = jax.random.normal(ks[10], (B, 1, 32, 32), jnp.float32)

    prep = prepare_params(params, b_tile=B_TILE)   # one-time, outside the jitted forward
    fwd = jax.jit(net_forward)
    out = jax.block_until_ready(fwd(x, prep))
    assert out.shape == (B, 10), out.shape

    ref = net_forward_ref(x, params)
    # bf16 matmul operands (f32 accumulation) -> ~1e-2 relative error vs the f32
    # reference is expected; 5e-2 tolerance is intentional for inference.
    if not bool(jnp.allclose(out, ref, atol=5e-2, rtol=5e-2)):
        raise AssertionError(
            f"Pallas output mismatch vs reference; max abs diff = "
            f"{float(jnp.max(jnp.abs(out - ref)))}")

    print("KERNEL_OK")
</pallas_src>

<mosaic_0001>
module attributes {stable_mosaic.version = 11 : i64} {
  func.func @_lenet_kernel(%arg0: i32, %arg1: memref<256x32xbf16, #tpu.memory_space<vmem>>, %arg2: memref<32x1280xbf16, #tpu.memory_space<vmem>>, %arg3: memref<1x256xf32, #tpu.memory_space<vmem>>, %arg4: memref<256x252xbf16, #tpu.memory_space<vmem>>, %arg5: memref<128x1280xbf16, #tpu.memory_space<vmem>>, %arg6: memref<1x256xf32, #tpu.memory_space<vmem>>, %arg7: memref<128x124xbf16, #tpu.memory_space<vmem>>, %arg8: memref<128x640xbf16, #tpu.memory_space<vmem>>, %arg9: memref<1x128xf32, #tpu.memory_space<vmem>>, %arg10: memref<128x128xbf16, #tpu.memory_space<vmem>>, %arg11: memref<1x128xf32, #tpu.memory_space<vmem>>, %arg12: memref<128x128xbf16, #tpu.memory_space<vmem>>, %arg13: memref<1x128xf32, #tpu.memory_space<vmem>>, %arg14: memref<8x60xf32, #tpu.memory_space<vmem>>, %arg15: memref<8x128xf32, #tpu.memory_space<vmem>>) attributes {dimension_semantics = [#tpu.dimension_semantics<parallel>], iteration_bounds = array<i64: 2>, scalar_prefetch = 0 : i64, scratch_operands = 0 : i64, tpu.core_type = #tpu.core_type<tc>, window_params = [{transform_indices = @transform_0, window_bounds = array<i64: 256, 32>}, {pipeline_mode = #tpu.pipeline_mode<synchronous>, transform_indices = @transform_1, window_bounds = array<i64: 32, 1280>}, {pipeline_mode = #tpu.pipeline_mode<synchronous>, transform_indices = @transform_2, window_bounds = array<i64: 1, 256>}, {pipeline_mode = #tpu.pipeline_mode<synchronous>, transform_indices = @transform_3, window_bounds = array<i64: 256, 252>}, {pipeline_mode = #tpu.pipeline_mode<synchronous>, transform_indices = @transform_4, window_bounds = array<i64: 128, 1280>}, {pipeline_mode = #tpu.pipeline_mode<synchronous>, transform_indices = @transform_5, window_bounds = array<i64: 1, 256>}, {pipeline_mode = #tpu.pipeline_mode<synchronous>, transform_indices = @transform_6, window_bounds = array<i64: 128, 124>}, {pipeline_mode = #tpu.pipeline_mode<synchronous>, transform_indices = @transform_7, window_bounds = array<i64: 128, 640>}, {pipeline_mode = #tpu.pipeline_mode<synchronous>, transform_indices = @transform_8, window_bounds = array<i64: 1, 128>}, {pipeline_mode = #tpu.pipeline_mode<synchronous>, transform_indices = @transform_9, window_bounds = array<i64: 128, 128>}, {pipeline_mode = #tpu.pipeline_mode<synchronous>, transform_indices = @transform_10, window_bounds = array<i64: 1, 128>}, {pipeline_mode = #tpu.pipeline_mode<synchronous>, transform_indices = @transform_11, window_bounds = array<i64: 128, 128>}, {pipeline_mode = #tpu.pipeline_mode<synchronous>, transform_indices = @transform_12, window_bounds = array<i64: 1, 128>}, {pipeline_mode = #tpu.pipeline_mode<synchronous>, transform_indices = @transform_13, window_bounds = array<i64: 8, 60>}, {transform_indices = @transform_14, window_bounds = array<i64: 8, 128>}]} {
    %c0 = arith.constant 0 : index
    %c0_0 = arith.constant 0 : index
    %0 = vector.load %arg1[%c0, %c0_0] : memref<256x32xbf16, #tpu.memory_space<vmem>>, vector<256x32xbf16>
    %c0_1 = arith.constant 0 : index
    %c0_2 = arith.constant 0 : index
    %1 = vector.load %arg2[%c0_1, %c0_2] : memref<32x1280xbf16, #tpu.memory_space<vmem>>, vector<32x1280xbf16>
    %cst = arith.constant dense<0.000000e+00> : vector<256x1280xf32>
    %2 = tpu.matmul %0, %1, %cst {dimension_numbers = #tpu.dot_dimension_numbers<[1], [0], [0], [1], [0, 0, 1, 1], [], []>} : vector<256x32xbf16>, vector<32x1280xbf16>, vector<256x1280xf32> -> vector<256x1280xf32>
    %3 = vector.extract_strided_slice %2 {offsets = [0, 0], sizes = [252, 256], strides = [1, 1]} : vector<256x1280xf32> to vector<252x256xf32>
    %4 = vector.extract_strided_slice %2 {offsets = [1, 256], sizes = [252, 256], strides = [1, 1]} : vector<256x1280xf32> to vector<252x256xf32>
    %5 = arith.addf %3, %4 : vector<252x256xf32>
    %6 = vector.extract_strided_slice %2 {offsets = [2, 512], sizes = [252, 256], strides = [1, 1]} : vector<256x1280xf32> to vector<252x256xf32>
    %7 = arith.addf %5, %6 : vector<252x256xf32>
    %8 = vector.extract_strided_slice %2 {offsets = [3, 768], sizes = [252, 256], strides = [1, 1]} : vector<256x1280xf32> to vector<252x256xf32>
    %9 = arith.addf %7, %8 : vector<252x256xf32>
    %10 = vector.extract_strided_slice %2 {offsets = [4, 1024], sizes = [252, 256], strides = [1, 1]} : vector<256x1280xf32> to vector<252x256xf32>
    %11 = arith.addf %9, %10 : vector<252x256xf32>
    %c0_3 = arith.constant 0 : index
    %c0_4 = arith.constant 0 : index
    %12 = vector.load %arg3[%c0_3, %c0_4] : memref<1x256xf32, #tpu.memory_space<vmem>>, vector<1x256xf32>
    %13 = vector.broadcast %12 : vector<1x256xf32> to vector<252x256xf32>
    %14 = arith.addf %11, %13 : vector<252x256xf32>
    %cst_5 = arith.constant 0.000000e+00 : f32
    %15 = vector.broadcast %cst_5 : f32 to vector<252x256xf32>
    %16 = arith.maximumf %14, %15 : vector<252x256xf32>
    %17 = vector.extract_strided_slice %16 {offsets = [0, 0], sizes = [252, 128], strides = [1, 1]} : vector<252x256xf32> to vector<252x128xf32>
    %18 = vector.extract_strided_slice %16 {offsets = [0, 128], sizes = [252, 128], strides = [1, 1]} : vector<252x256xf32> to vector<252x128xf32>
    %19 = arith.maximumf %17, %18 : vector<252x128xf32>
    %20 = arith.truncf %19 : vector<252x128xf32> to vector<252x128xbf16>
    %c0_6 = arith.constant 0 : index
    %c0_7 = arith.constant 0 : index
    %21 = vector.load %arg4[%c0_6, %c0_7] : memref<256x252xbf16, #tpu.memory_space<vmem>>, vector<256x252xbf16>
    %cst_8 = arith.constant dense<0.000000e+00> : vector<256x128xf32>
    %22 = tpu.matmul %21, %20, %cst_8 {dimension_numbers = #tpu.dot_dimension_numbers<[1], [0], [0], [1], [0, 0, 1, 1], [], []>} : vector<256x252xbf16>, vector<252x128xbf16>, vector<256x128xf32> -> vector<256x128xf32>
    %23 = vector.extract_strided_slice %22 {offsets = [0, 0], sizes = [128, 128], strides = [1, 1]} : vector<256x128xf32> to vector<128x128xf32>
    %24 = vector.extract_strided_slice %22 {offsets = [128, 0], sizes = [128, 128], strides = [1, 1]} : vector<256x128xf32> to vector<128x128xf32>
    %25 = arith.maximumf %23, %24 : vector<128x128xf32>
    %26 = arith.truncf %25 : vector<128x128xf32> to vector<128x128xbf16>
    %c0_9 = arith.constant 0 : index
    %c0_10 = arith.constant 0 : index
    %27 = vector.load %arg5[%c0_9, %c0_10] : memref<128x1280xbf16, #tpu.memory_space<vmem>>, vector<128x1280xbf16>
    %cst_11 = arith.constant dense<0.000000e+00> : vector<128x1280xf32>
    %28 = tpu.matmul %26, %27, %cst_11 {dimension_numbers = #tpu.dot_dimension_numbers<[1], [0], [0], [1], [0, 0, 1, 1], [], []>} : vector<128x128xbf16>, vector<128x1280xbf16>, vector<128x1280xf32> -> vector<128x1280xf32>
    %29 = vector.extract_strided_slice %28 {offsets = [0, 0], sizes = [124, 256], strides = [1, 1]} : vector<128x1280xf32> to vector<124x256xf32>
    %30 = vector.extract_strided_slice %28 {offsets = [1, 256], sizes = [124, 256], strides = [1, 1]} : vector<128x1280xf32> to vector<124x256xf32>
    %31 = arith.addf %29, %30 : vector<124x256xf32>
    %32 = vector.extract_strided_slice %28 {offsets = [2, 512], sizes = [124, 256], strides = [1, 1]} : vector<128x1280xf32> to vector<124x256xf32>
    %33 = arith.addf %31, %32 : vector<124x256xf32>
    %34 = vector.extract_strided_slice %28 {offsets = [3, 768], sizes = [124, 256], strides = [1, 1]} : vector<128x1280xf32> to vector<124x256xf32>
    %35 = arith.addf %33, %34 : vector<124x256xf32>
    %36 = vector.extract_strided_slice %28 {offsets = [4, 1024], sizes = [124, 256], strides = [1, 1]} : vector<128x1280xf32> to vector<124x256xf32>
    %37 = arith.addf %35, %36 : vector<124x256xf32>
    %c0_12 = arith.constant 0 : index
    %c0_13 = arith.constant 0 : index
    %38 = vector.load %arg6[%c0_12, %c0_13] : memref<1x256xf32, #tpu.memory_space<vmem>>, vector<1x256xf32>
    %39 = vector.broadcast %38 : vector<1x256xf32> to vector<124x256xf32>
    %40 = arith.addf %37, %39 : vector<124x256xf32>
    %cst_14 = arith.constant 0.000000e+00 : f32
    %41 = vector.broadcast %cst_14 : f32 to vector<124x256xf32>
    %42 = arith.maximumf %40, %41 : vector<124x256xf32>
    %43 = vector.extract_strided_slice %42 {offsets = [0, 0], sizes = [124, 128], strides = [1, 1]} : vector<124x256xf32> to vector<124x128xf32>
    %44 = vector.extract_strided_slice %42 {offsets = [0, 128], sizes = [124, 128], strides = [1, 1]} : vector<124x256xf32> to vector<124x128xf32>
    %45 = arith.maximumf %43, %44 : vector<124x128xf32>
    %46 = arith.truncf %45 : vector<124x128xf32> to vector<124x128xbf16>
    %c0_15 = arith.constant 0 : index
    %c0_16 = arith.constant 0 : index
    %47 = vector.load %arg7[%c0_15, %c0_16] : memref<128x124xbf16, #tpu.memory_space<vmem>>, vector<128x124xbf16>
    %cst_17 = arith.constant dense<0.000000e+00> : vector<128x128xf32>
    %48 = tpu.matmul %47, %46, %cst_17 {dimension_numbers = #tpu.dot_dimension_numbers<[1], [0], [0], [1], [0, 0, 1, 1], [], []>} : vector<128x124xbf16>, vector<124x128xbf16>, vector<128x128xf32> -> vector<128x128xf32>
    %49 = vector.extract_strided_slice %48 {offsets = [0, 0], sizes = [64, 128], strides = [1, 1]} : vector<128x128xf32> to vector<64x128xf32>
    %50 = vector.extract_strided_slice %48 {offsets = [64, 0], sizes = [64, 128], strides = [1, 1]} : vector<128x128xf32> to vector<64x128xf32>
    %51 = arith.maximumf %49, %50 : vector<64x128xf32>
    %52 = arith.truncf %51 : vector<64x128xf32> to vector<64x128xbf16>
    %c0_18 = arith.constant 0 : index
    %c0_19 = arith.constant 0 : index
    %53 = vector.load %arg8[%c0_18, %c0_19] : memref<128x640xbf16, #tpu.memory_space<vmem>>, vector<128x640xbf16>
    %cst_20 = arith.constant dense<0.000000e+00> : vector<64x640xf32>
    %54 = tpu.matmul %52, %53, %cst_20 {dimension_numbers = #tpu.dot_dimension_numbers<[1], [0], [0], [1], [0, 0, 1, 1], [], []>} : vector<64x128xbf16>, vector<128x640xbf16>, vector<64x640xf32> -> vector<64x640xf32>
    %55 = vector.extract_strided_slice %54 {offsets = [0, 0], sizes = [60, 128], strides = [1, 1]} : vector<64x640xf32> to vector<60x128xf32>
    %56 = vector.extract_strided_slice %54 {offsets = [1, 128], sizes = [60, 128], strides = [1, 1]} : vector<64x640xf32> to vector<60x128xf32>
    %57 = arith.addf %55, %56 : vector<60x128xf32>
    %58 = vector.extract_strided_slice %54 {offsets = [2, 256], sizes = [60, 128], strides = [1, 1]} : vector<64x640xf32> to vector<60x128xf32>
    %59 = arith.addf %57, %58 : vector<60x128xf32>
    %60 = vector.extract_strided_slice %54 {offsets = [3, 384], sizes = [60, 128], strides = [1, 1]} : vector<64x640xf32> to vector<60x128xf32>
    %61 = arith.addf %59, %60 : vector<60x128xf32>
    %62 = vector.extract_strided_slice %54 {offsets = [4, 512], sizes = [60, 128], strides = [1, 1]} : vector<64x640xf32> to vector<60x128xf32>
    %63 = arith.addf %61, %62 : vector<60x128xf32>
    %c0_21 = arith.constant 0 : index
    %c0_22 = arith.constant 0 : index
    %64 = vector.load %arg14[%c0_21, %c0_22] : memref<8x60xf32, #tpu.memory_space<vmem>>, vector<8x60xf32>
    %cst_23 = arith.constant dense<0.000000e+00> : vector<8x128xf32>
    %65 = tpu.matmul %64, %63, %cst_23 {dimension_numbers = #tpu.dot_dimension_numbers<[1], [0], [0], [1], [0, 0, 1, 1], [], []>} : vector<8x60xf32>, vector<60x128xf32>, vector<8x128xf32> -> vector<8x128xf32>
    %c0_24 = arith.constant 0 : index
    %c0_25 = arith.constant 0 : index
    %66 = vector.load %arg9[%c0_24, %c0_25] : memref<1x128xf32, #tpu.memory_space<vmem>>, vector<1x128xf32>
    %67 = vector.broadcast %66 : vector<1x128xf32> to vector<8x128xf32>
    %68 = arith.addf %65, %67 : vector<8x128xf32>
    %cst_26 = arith.constant 0.000000e+00 : f32
    %69 = vector.broadcast %cst_26 : f32 to vector<8x128xf32>
    %70 = arith.maximumf %68, %69 : vector<8x128xf32>
    %71 = arith.truncf %70 : vector<8x128xf32> to vector<8x128xbf16>
    %c0_27 = arith.constant 0 : index
    %c0_28 = arith.constant 0 : index
    %72 = vector.load %arg10[%c0_27, %c0_28] : memref<128x128xbf16, #tpu.memory_space<vmem>>, vector<128x128xbf16>
    %cst_29 = arith.constant dense<0.000000e+00> : vector<8x128xf32>
    %73 = tpu.matmul %71, %72, %cst_29 {dimension_numbers = #tpu.dot_dimension_numbers<[1], [0], [0], [1], [0, 0, 1, 1], [], []>} : vector<8x128xbf16>, vector<128x128xbf16>, vector<8x128xf32> -> vector<8x128xf32>
    %c0_30 = arith.constant 0 : index
    %c0_31 = arith.constant 0 : index
    %74 = vector.load %arg11[%c0_30, %c0_31] : memref<1x128xf32, #tpu.memory_space<vmem>>, vector<1x128xf32>
    %75 = vector.broadcast %74 : vector<1x128xf32> to vector<8x128xf32>
    %76 = arith.addf %73, %75 : vector<8x128xf32>
    %cst_32 = arith.constant 0.000000e+00 : f32
    %77 = vector.broadcast %cst_32 : f32 to vector<8x128xf32>
    %78 = arith.maximumf %76, %77 : vector<8x128xf32>
    %79 = arith.truncf %78 : vector<8x128xf32> to vector<8x128xbf16>
    %c0_33 = arith.constant 0 : index
    %c0_34 = arith.constant 0 : index
    %80 = vector.load %arg12[%c0_33, %c0_34] : memref<128x128xbf16, #tpu.memory_space<vmem>>, vector<128x128xbf16>
    %cst_35 = arith.constant dense<0.000000e+00> : vector<8x128xf32>
    %81 = tpu.matmul %79, %80, %cst_35 {dimension_numbers = #tpu.dot_dimension_numbers<[1], [0], [0], [1], [0, 0, 1, 1], [], []>} : vector<8x128xbf16>, vector<128x128xbf16>, vector<8x128xf32> -> vector<8x128xf32>
    %c0_36 = arith.constant 0 : index
    %c0_37 = arith.constant 0 : index
    %82 = vector.load %arg13[%c0_36, %c0_37] : memref<1x128xf32, #tpu.memory_space<vmem>>, vector<1x128xf32>
    %83 = vector.broadcast %82 : vector<1x128xf32> to vector<8x128xf32>
    %84 = arith.addf %81, %83 : vector<8x128xf32>
    %c0_38 = arith.constant 0 : index
    %c0_39 = arith.constant 0 : index
    %85 = vector.load %arg15[%c0_38, %c0_39] : memref<8x128xf32, #tpu.memory_space<vmem>>, vector<8x128xf32>
    tpu.vector_store %arg15[%c0_38, %c0_39], %84 {strides = array<i32>} : memref<8x128xf32, #tpu.memory_space<vmem>>, vector<8x128xf32>,
    return
  }
  func.func @transform_0(%arg0: i32) -> (i32, i32) {
    %c0_i32 = arith.constant 0 : i32
    %c0_i32_0 = arith.constant 0 : i32
    return %arg0, %c0_i32 : i32, i32
  }
  func.func @transform_1(%arg0: i32) -> (i32, i32) {
    %c0_i32 = arith.constant 0 : i32
    %c0_i32_0 = arith.constant 0 : i32
    %c0_i32_1 = arith.constant 0 : i32
    return %c0_i32, %c0_i32_0 : i32, i32
  }
  func.func @transform_2(%arg0: i32) -> (i32, i32) {
    %c0_i32 = arith.constant 0 : i32
    %c0_i32_0 = arith.constant 0 : i32
    %c0_i32_1 = arith.constant 0 : i32
    return %c0_i32, %c0_i32_0 : i32, i32
  }
  func.func @transform_3(%arg0: i32) -> (i32, i32) {
    %c0_i32 = arith.constant 0 : i32
    %c0_i32_0 = arith.constant 0 : i32
    %c0_i32_1 = arith.constant 0 : i32
    return %c0_i32, %c0_i32_0 : i32, i32
  }
  func.func @transform_4(%arg0: i32) -> (i32, i32) {
    %c0_i32 = arith.constant 0 : i32
    %c0_i32_0 = arith.constant 0 : i32
    %c0_i32_1 = arith.constant 0 : i32
    return %c0_i32, %c0_i32_0 : i32, i32
  }
  func.func @transform_5(%arg0: i32) -> (i32, i32) {
    %c0_i32 = arith.constant 0 : i32
    %c0_i32_0 = arith.constant 0 : i32
    %c0_i32_1 = arith.constant 0 : i32
    return %c0_i32, %c0_i32_0 : i32, i32
  }
  func.func @transform_6(%arg0: i32) -> (i32, i32) {
    %c0_i32 = arith.constant 0 : i32
    %c0_i32_0 = arith.constant 0 : i32
    %c0_i32_1 = arith.constant 0 : i32
    return %c0_i32, %c0_i32_0 : i32, i32
  }
  func.func @transform_7(%arg0: i32) -> (i32, i32) {
    %c0_i32 = arith.constant 0 : i32
    %c0_i32_0 = arith.constant 0 : i32
    %c0_i32_1 = arith.constant 0 : i32
    return %c0_i32, %c0_i32_0 : i32, i32
  }
  func.func @transform_8(%arg0: i32) -> (i32, i32) {
    %c0_i32 = arith.constant 0 : i32
    %c0_i32_0 = arith.constant 0 : i32
    %c0_i32_1 = arith.constant 0 : i32
    return %c0_i32, %c0_i32_0 : i32, i32
  }
  func.func @transform_9(%arg0: i32) -> (i32, i32) {
    %c0_i32 = arith.constant 0 : i32
    %c0_i32_0 = arith.constant 0 : i32
    %c0_i32_1 = arith.constant 0 : i32
    return %c0_i32, %c0_i32_0 : i32, i32
  }
  func.func @transform_10(%arg0: i32) -> (i32, i32) {
    %c0_i32 = arith.constant 0 : i32
    %c0_i32_0 = arith.constant 0 : i32
    %c0_i32_1 = arith.constant 0 : i32
    return %c0_i32, %c0_i32_0 : i32, i32
  }
  func.func @transform_11(%arg0: i32) -> (i32, i32) {
    %c0_i32 = arith.constant 0 : i32
    %c0_i32_0 = arith.constant 0 : i32
    %c0_i32_1 = arith.constant 0 : i32
    return %c0_i32, %c0_i32_0 : i32, i32
  }
  func.func @transform_12(%arg0: i32) -> (i32, i32) {
    %c0_i32 = arith.constant 0 : i32
    %c0_i32_0 = arith.constant 0 : i32
    %c0_i32_1 = arith.constant 0 : i32
    return %c0_i32, %c0_i32_0 : i32, i32
  }
  func.func @transform_13(%arg0: i32) -> (i32, i32) {
    %c0_i32 = arith.constant 0 : i32
    %c0_i32_0 = arith.constant 0 : i32
    %c0_i32_1 = arith.constant 0 : i32
    return %c0_i32, %c0_i32_0 : i32, i32
  }
  func.func @transform_14(%arg0: i32) -> (i32, i32) {
    %c0_i32 = arith.constant 0 : i32
    %c0_i32_0 = arith.constant 0 : i32
    return %arg0, %c0_i32 : i32, i32
  }
}

</mosaic_0001>

<llo_original>
// kernel: net_forward.1
$region0: #{net_forward.1}
  #allocation0 [shape = 'u32[]', space=smem, size = 0x4, offset = 0x4, fixed_abs, tag = 'smem constant byte address 0x4 - core index']
  #allocation1 [shape = 'u32[144,128]{1,0:T(1,128)}', space=vmem, size = 0x12000, scoped, tag = 'internal scratch']
  %s0 = inlined_call_operand.vmem [shape: bf16[512,32], index: 0, kind: input, shape index: {}]
  %s1 = inlined_call_operand.vmem [shape: bf16[32,1280], index: 1, kind: input, shape index: {}]
  %s2 = inlined_call_operand.hbm [shape: f32[1,256], index: 2, kind: input, shape index: {}]
  %s3 = inlined_call_operand.hbm [shape: bf16[256,252], index: 3, kind: input, shape index: {}]
  %s4 = inlined_call_operand.vmem [shape: bf16[128,1280], index: 4, kind: input, shape index: {}]
  %s5 = inlined_call_operand.hbm [shape: f32[1,256], index: 5, kind: input, shape index: {}]
  %s6 = inlined_call_operand.hbm [shape: bf16[128,124], index: 6, kind: input, shape index: {}]
  %s7 = inlined_call_operand.hbm [shape: bf16[128,640], index: 7, kind: input, shape index: {}]
  %s8 = inlined_call_operand.vmem [shape: f32[1,128], index: 8, kind: input, shape index: {}]
  %s9 = inlined_call_operand.hbm [shape: bf16[128,128], index: 9, kind: input, shape index: {}]
  %s10 = inlined_call_operand.hbm [shape: f32[1,128], index: 10, kind: input, shape index: {}]
  %s11 = inlined_call_operand.hbm [shape: bf16[128,128], index: 11, kind: input, shape index: {}]
  %s12 = inlined_call_operand.hbm [shape: f32[1,128], index: 12, kind: input, shape index: {}]
  %s13 = inlined_call_operand.vmem [shape: f32[8,60], index: 13, kind: input, shape index: {}]
  %s14 = inlined_call_operand.hbm [shape: f32[16,128], index: 14, kind: output, shape index: {}]
  %s15 = sld [smem:[#allocation0]]
  $region125: #{net_forward.1} parent=0
    _
  %s17 = ssub.s32 1, %s15
  %s18 = scalar_select 0, %s17, %s15
  $region1: #{net_forward.1} parent=0
    #allocation2 [shape = 'u8[1024]{0}', space=vmem, size = 0x400, scoped, tag = 'input window, operand 2, single buffered']
    #allocation3 [shape = 's32[2]{0}', space=sflag, size = 0x8, scoped, tag = 'scoped memory for net_forward.1']
    #allocation4 [shape = 's32[2]{0}', space=sflag, size = 0x8, scoped, tag = 'scoped memory for net_forward.1']
    #allocation5 [shape = 'u8[131072]{0}', space=vmem, size = 0x20000, scoped, tag = 'input window, operand 3, single buffered']
    #allocation6 [shape = 's32[1]{0}', space=sflag, size = 0x4, scoped, tag = 'scoped memory for net_forward.1']
    #allocation7 [shape = 'u8[1024]{0}', space=vmem, size = 0x400, scoped, tag = 'input window, operand 5, single buffered']
    #allocation8 [shape = 'u8[32768]{0}', space=vmem, size = 0x8000, scoped, tag = 'input window, operand 6, single buffered']
    #allocation9 [shape = 's32[1]{0}', space=sflag, size = 0x4, scoped, tag = 'scoped memory for net_forward.1']
    #allocation10 [shape = 'u8[163840]{0}', space=vmem, size = 0x28000, scoped, tag = 'input window, operand 7, single buffered']
    #allocation11 [shape = 'u8[32768]{0}', space=vmem, size = 0x8000, scoped, tag = 'input window, operand 9, single buffered']
    #allocation12 [shape = 's32[1]{0}', space=sflag, size = 0x4, scoped, tag = 'scoped memory for net_forward.1']
    #allocation13 [shape = 'u8[512]{0}', space=vmem, size = 0x400, scoped, tag = 'input window, operand 10, single buffered']
    #allocation14 [shape = 'u8[32768]{0}', space=vmem, size = 0x8000, scoped, tag = 'input window, operand 11, single buffered']
    #allocation15 [shape = 's32[1]{0}', space=sflag, size = 0x4, scoped, tag = 'scoped memory for net_forward.1']
    #allocation16 [shape = 'u8[512]{0}', space=vmem, size = 0x400, scoped, tag = 'input window, operand 12, single buffered']
    #allocation17 [shape = 'u8[8192]{0}', space=vmem, size = 0x2000, scoped, tag = 'output window, operand 0']
    %19 = vsyncpa [#allocation3], 0
    %20 = vsyncpa [#allocation6], 0
    %21 = vsyncpa [#allocation9], 0
    %22 = vsyncpa [#allocation12], 0
    %23 = vsyncpa [#allocation15], 0
    %24 = vsyncpa [#allocation4], 0
    %s25 = scalar_lea.sflag [#allocation4], 1
    %26 = vsyncpa %s25, 0
    loop: start=0, step=1, limit=4
    $region2: #{net_forward.1} parent=1 // loop_pre_header
      _
    $region3: #{net_forward.1} parent=1 // loop_header
      %s28 = sphi 0, %s32
      %p29 = scmp.ge.s32.totalorder %s28, 4
      %s38 = sphi 0, %s40
      %s41 = sphi 0, %s38
      %s42 = sphi 0, %s41
      %s58 = sphi 0, %s42
      %s62 = sphi 0, %s62
      %s64 = sphi 0, %s62
      %s65 = sphi 0, %s64
      %s79 = sphi 0, %s65
      %s83 = sphi 0, %s83
      %s85 = sphi 0, %s83
      %s86 = sphi 0, %s85
      %s100 = sphi 0, %s86
      %s104 = sphi 0, %s104
      %s106 = sphi 0, %s104
      %s107 = sphi 0, %s106
      %s121 = sphi 0, %s107
      %s125 = sphi 0, %s125
      %s127 = sphi 0, %s125
      %s128 = sphi 0, %s127
      %s142 = sphi 0, %s128
      %s146 = sphi 0, %s146
      %s148 = sphi 0, %s146
      %s149 = sphi 0, %s148
      %s163 = sphi 0, %s149
      %s167 = sphi 0, %s167
      %s169 = sphi 0, %s167
      %s170 = sphi 0, %s169
      %s184 = sphi 0, %s170
      %s188 = sphi 0, %s188
      %s190 = sphi 0, %s188
      %s191 = sphi 0, %s190
      %s205 = sphi 0, %s191
      %s209 = sphi 0, %s209
      %s211 = sphi 0, %s209
      %s212 = sphi 0, %s211
      %s226 = sphi 0, %s212
      %s230 = sphi 0, %s230
      %s232 = sphi 0, %s230
      %s233 = sphi 0, %s232
      %s247 = sphi 0, %s233
      %s251 = sphi 0, %s251
      %s253 = sphi 0, %s251
      %s254 = sphi 0, %s253
      %s268 = sphi 0, %s254
      %s272 = sphi 0, %s272
      %s274 = sphi 0, %s272
      %s275 = sphi 0, %s274
      %s289 = sphi 0, %s275
      %s293 = sphi 0, %s293
      %s295 = sphi 0, %s293
      %s296 = sphi 0, %s295
      %s310 = sphi 0, %s296
      %s314 = sphi 0, %s314
      %s316 = sphi 0, %s314
      %s317 = sphi 0, %s316
      %s331 = sphi 0, %s317
      %s337 = sphi 0, %s339
      %s340 = sphi 0, %s337
      %s341 = sphi 0, %s340
      %s357 = sphi 0, %s341
    $region4: #{net_forward.1} parent=1 // loop_header_branch
      %31 = sbr.rel (%p29) target = $region8
    $region5: #{net_forward.1} parent=1 // loop_body
      %s33 = ssub.s32 %s28, 1
      %s34 = ssub.s32 %s28, 2
      %s35 = sadd.s32 %s28, 1
      %s36 = ssub.s32 %s28, %s35
      %p37 = scmp.eq.s32.totalorder %s36, 0
      %s39 = sadd.s32 %s38, 1
      %s40 = scalar_select %p37, %s38, %s39
      %p43 = pneg %p37
      %p44 = scmp.eq.s32.totalorder %s28, 1
      %p45 = por %p43, %p44
      %p46 = scmp.ne.s32.totalorder %s38, %s41
      %p47 = scmp.eq.s32.totalorder %s28, 0
      %p48 = por %p46, %p47
      %p49 = scmp.ne.s32.totalorder %s38, %s41
      %p50 = scmp.eq.s32.totalorder %s33, 1
      %p51 = por %p49, %p50
      %p52 = scmp.ne.s32.totalorder %s41, %s42
      %p53 = scmp.eq.s32.totalorder %s33, 0
      %p54 = por %p52, %p53
      %p55 = scmp.ne.s32.totalorder %s41, %s42
      %p56 = scmp.eq.s32.totalorder %s34, 1
      %p57 = por %p55, %p56
      %p59 = scmp.ne.s32.totalorder %s42, %s58
      %p60 = scmp.eq.s32.totalorder %s34, 0
      %p61 = por %p59, %p60
      %s63 = sadd.s32 %s62, 1
      %p66 = scmp.eq.s32.totalorder %s28, 1
      %p67 = scmp.ne.s32.totalorder %s62, %s64
      %p68 = scmp.eq.s32.totalorder %s28, 0
      %p69 = por %p67, %p68
      %p70 = scmp.ne.s32.totalorder %s62, %s64
      %p71 = scmp.eq.s32.totalorder %s33, 1
      %p72 = por %p70, %p71
      %p73 = scmp.ne.s32.totalorder %s64, %s65
      %p74 = scmp.eq.s32.totalorder %s33, 0
      %p75 = por %p73, %p74
      %p76 = scmp.ne.s32.totalorder %s64, %s65
      %p77 = scmp.eq.s32.totalorder %s34, 1
      %p78 = por %p76, %p77
      %p80 = scmp.ne.s32.totalorder %s65, %s79
      %p81 = scmp.eq.s32.totalorder %s34, 0
      %p82 = por %p80, %p81
      %s84 = sadd.s32 %s83, 1
      %p87 = scmp.eq.s32.totalorder %s28, 1
      %p88 = scmp.ne.s32.totalorder %s83, %s85
      %p89 = scmp.eq.s32.totalorder %s28, 0
      %p90 = por %p88, %p89
      %p91 = scmp.ne.s32.totalorder %s83, %s85
      %p92 = scmp.eq.s32.totalorder %s33, 1
      %p93 = por %p91, %p92
      %p94 = scmp.ne.s32.totalorder %s85, %s86
      %p95 = scmp.eq.s32.totalorder %s33, 0
      %p96 = por %p94, %p95
      %p97 = scmp.ne.s32.totalorder %s85, %s86
      %p98 = scmp.eq.s32.totalorder %s34, 1
      %p99 = por %p97, %p98
      %p101 = scmp.ne.s32.totalorder %s86, %s100
      %p102 = scmp.eq.s32.totalorder %s34, 0
      %p103 = por %p101, %p102
      %s105 = sadd.s32 %s104, 1
      %p108 = scmp.eq.s32.totalorder %s28, 1
      %p109 = scmp.ne.s32.totalorder %s104, %s106
      %p110 = scmp.eq.s32.totalorder %s28, 0
      %p111 = por %p109, %p110
      %p112 = scmp.ne.s32.totalorder %s104, %s106
      %p113 = scmp.eq.s32.totalorder %s33, 1
      %p114 = por %p112, %p113
      %p115 = scmp.ne.s32.totalorder %s106, %s107
      %p116 = scmp.eq.s32.totalorder %s33, 0
      %p117 = por %p115, %p116
      %p118 = scmp.ne.s32.totalorder %s106, %s107
      %p119 = scmp.eq.s32.totalorder %s34, 1
      %p120 = por %p118, %p119
      %p122 = scmp.ne.s32.totalorder %s107, %s121
      %p123 = scmp.eq.s32.totalorder %s34, 0
      %p124 = por %p122, %p123
      %s126 = sadd.s32 %s125, 1
      %p129 = scmp.eq.s32.totalorder %s28, 1
      %p130 = scmp.ne.s32.totalorder %s125, %s127
      %p131 = scmp.eq.s32.totalorder %s28, 0
      %p132 = por %p130, %p131
      %p133 = scmp.ne.s32.totalorder %s125, %s127
      %p134 = scmp.eq.s32.totalorder %s33, 1
      %p135 = por %p133, %p134
      %p136 = scmp.ne.s32.totalorder %s127, %s128
      %p137 = scmp.eq.s32.totalorder %s33, 0
      %p138 = por %p136, %p137
      %p139 = scmp.ne.s32.totalorder %s127, %s128
      %p140 = scmp.eq.s32.totalorder %s34, 1
      %p141 = por %p139, %p140
      %p143 = scmp.ne.s32.totalorder %s128, %s142
      %p144 = scmp.eq.s32.totalorder %s34, 0
      %p145 = por %p143, %p144
      %s147 = sadd.s32 %s146, 1
      %p150 = scmp.eq.s32.totalorder %s28, 1
      %p151 = scmp.ne.s32.totalorder %s146, %s148
      %p152 = scmp.eq.s32.totalorder %s28, 0
      %p153 = por %p151, %p152
      %p154 = scmp.ne.s32.totalorder %s146, %s148
      %p155 = scmp.eq.s32.totalorder %s33, 1
      %p156 = por %p154, %p155
      %p157 = scmp.ne.s32.totalorder %s148, %s149
      %p158 = scmp.eq.s32.totalorder %s33, 0
      %p159 = por %p157, %p158
      %p160 = scmp.ne.s32.totalorder %s148, %s149
      %p161 = scmp.eq.s32.totalorder %s34, 1
      %p162 = por %p160, %p161
      %p164 = scmp.ne.s32.totalorder %s149, %s163
      %p165 = scmp.eq.s32.totalorder %s34, 0
      %p166 = por %p164, %p165
      %s168 = sadd.s32 %s167, 1
      %p171 = scmp.eq.s32.totalorder %s28, 1
      %p172 = scmp.ne.s32.totalorder %s167, %s169
      %p173 = scmp.eq.s32.totalorder %s28, 0
      %p174 = por %p172, %p173
      %p175 = scmp.ne.s32.totalorder %s167, %s169
      %p176 = scmp.eq.s32.totalorder %s33, 1
      %p177 = por %p175, %p176
      %p178 = scmp.ne.s32.totalorder %s169, %s170
      %p179 = scmp.eq.s32.totalorder %s33, 0
      %p180 = por %p178, %p179
      %p181 = scmp.ne.s32.totalorder %s169, %s170
      %p182 = scmp.eq.s32.totalorder %s34, 1
      %p183 = por %p181, %p182
      %p185 = scmp.ne.s32.totalorder %s170, %s184
      %p186 = scmp.eq.s32.totalorder %s34, 0
      %p187 = por %p185, %p186
      %s189 = sadd.s32 %s188, 1
      %p192 = scmp.eq.s32.totalorder %s28, 1
      %p193 = scmp.ne.s32.totalorder %s188, %s190
      %p194 = scmp.eq.s32.totalorder %s28, 0
      %p195 = por %p193, %p194
      %p196 = scmp.ne.s32.totalorder %s188, %s190
      %p197 = scmp.eq.s32.totalorder %s33, 1
      %p198 = por %p196, %p197
      %p199 = scmp.ne.s32.totalorder %s190, %s191
      %p200 = scmp.eq.s32.totalorder %s33, 0
      %p201 = por %p199, %p200
      %p202 = scmp.ne.s32.totalorder %s190, %s191
      %p203 = scmp.eq.s32.totalorder %s34, 1
      %p204 = por %p202, %p203
      %p206 = scmp.ne.s32.totalorder %s191, %s205
      %p207 = scmp.eq.s32.totalorder %s34, 0
      %p208 = por %p206, %p207
      %s210 = sadd.s32 %s209, 1
      %p213 = scmp.eq.s32.totalorder %s28, 1
      %p214 = scmp.ne.s32.totalorder %s209, %s211
      %p215 = scmp.eq.s32.totalorder %s28, 0
      %p216 = por %p214, %p215
      %p217 = scmp.ne.s32.totalorder %s209, %s211
      %p218 = scmp.eq.s32.totalorder %s33, 1
      %p219 = por %p217, %p218
      %p220 = scmp.ne.s32.totalorder %s211, %s212
      %p221 = scmp.eq.s32.totalorder %s33, 0
      %p222 = por %p220, %p221
      %p223 = scmp.ne.s32.totalorder %s211, %s212
      %p224 = scmp.eq.s32.totalorder %s34, 1
      %p225 = por %p223, %p224
      %p227 = scmp.ne.s32.totalorder %s212, %s226
      %p228 = scmp.eq.s32.totalorder %s34, 0
      %p229 = por %p227, %p228
      %s231 = sadd.s32 %s230, 1
      %p234 = scmp.eq.s32.totalorder %s28, 1
      %p235 = scmp.ne.s32.totalorder %s230, %s232
      %p236 = scmp.eq.s32.totalorder %s28, 0
      %p237 = por %p235, %p236
      %p238 = scmp.ne.s32.totalorder %s230, %s232
      %p239 = scmp.eq.s32.totalorder %s33, 1
      %p240 = por %p238, %p239
      %p241 = scmp.ne.s32.totalorder %s232, %s233
      %p242 = scmp.eq.s32.totalorder %s33, 0
      %p243 = por %p241, %p242
      %p244 = scmp.ne.s32.totalorder %s232, %s233
      %p245 = scmp.eq.s32.totalorder %s34, 1
      %p246 = por %p244, %p245
      %p248 = scmp.ne.s32.totalorder %s233, %s247
      %p249 = scmp.eq.s32.totalorder %s34, 0
      %p250 = por %p248, %p249
      %s252 = sadd.s32 %s251, 1
      %p255 = scmp.eq.s32.totalorder %s28, 1
      %p256 = scmp.ne.s32.totalorder %s251, %s253
      %p257 = scmp.eq.s32.totalorder %s28, 0
      %p258 = por %p256, %p257
      %p259 = scmp.ne.s32.totalorder %s251, %s253
      %p260 = scmp.eq.s32.totalorder %s33, 1
      %p261 = por %p259, %p260
      %p262 = scmp.ne.s32.totalorder %s253, %s254
      %p263 = scmp.eq.s32.totalorder %s33, 0
      %p264 = por %p262, %p263
      %p265 = scmp.ne.s32.totalorder %s253, %s254
      %p266 = scmp.eq.s32.totalorder %s34, 1
      %p267 = por %p265, %p266
      %p269 = scmp.ne.s32.totalorder %s254, %s268
      %p270 = scmp.eq.s32.totalorder %s34, 0
      %p271 = por %p269, %p270
      %s273 = sadd.s32 %s272, 1
      %p276 = scmp.eq.s32.totalorder %s28, 1
      %p277 = scmp.ne.s32.totalorder %s272, %s274
      %p278 = scmp.eq.s32.totalorder %s28, 0
      %p279 = por %p277, %p278
      %p280 = scmp.ne.s32.totalorder %s272, %s274
      %p281 = scmp.eq.s32.totalorder %s33, 1
      %p282 = por %p280, %p281
      %p283 = scmp.ne.s32.totalorder %s274, %s275
      %p284 = scmp.eq.s32.totalorder %s33, 0
      %p285 = por %p283, %p284
      %p286 = scmp.ne.s32.totalorder %s274, %s275
      %p287 = scmp.eq.s32.totalorder %s34, 1
      %p288 = por %p286, %p287
      %p290 = scmp.ne.s32.totalorder %s275, %s289
      %p291 = scmp.eq.s32.totalorder %s34, 0
      %p292 = por %p290, %p291
      %s294 = sadd.s32 %s293, 1
      %p297 = scmp.eq.s32.totalorder %s28, 1
      %p298 = scmp.ne.s32.totalorder %s293, %s295
      %p299 = scmp.eq.s32.totalorder %s28, 0
      %p300 = por %p298, %p299
      %p301 = scmp.ne.s32.totalorder %s293, %s295
      %p302 = scmp.eq.s32.totalorder %s33, 1
      %p303 = por %p301, %p302
      %p304 = scmp.ne.s32.totalorder %s295, %s296
      %p305 = scmp.eq.s32.totalorder %s33, 0
      %p306 = por %p304, %p305
      %p307 = scmp.ne.s32.totalorder %s295, %s296
      %p308 = scmp.eq.s32.totalorder %s34, 1
      %p309 = por %p307, %p308
      %p311 = scmp.ne.s32.totalorder %s296, %s310
      %p312 = scmp.eq.s32.totalorder %s34, 0
      %p313 = por %p311, %p312
      %s315 = sadd.s32 %s314, 1
      %p318 = scmp.eq.s32.totalorder %s28, 1
      %p319 = scmp.ne.s32.totalorder %s314, %s316
      %p320 = scmp.eq.s32.totalorder %s28, 0
      %p321 = por %p319, %p320
      %p322 = scmp.ne.s32.totalorder %s314, %s316
      %p323 = scmp.eq.s32.totalorder %s33, 1
      %p324 = por %p322, %p323
      %p325 = scmp.ne.s32.totalorder %s316, %s317
      %p326 = scmp.eq.s32.totalorder %s33, 0
      %p327 = por %p325, %p326
      %p328 = scmp.ne.s32.totalorder %s316, %s317
      %p329 = scmp.eq.s32.totalorder %s34, 1
      %p330 = por %p328, %p329
      %p332 = scmp.ne.s32.totalorder %s317, %s331
      %p333 = scmp.eq.s32.totalorder %s34, 0
      %p334 = por %p332, %p333
      %s335 = ssub.s32 %s28, %s35
      %p336 = scmp.eq.s32.totalorder %s335, 0
      %s338 = sadd.s32 %s337, 1
      %s339 = scalar_select %p336, %s337, %s338
      %p342 = pneg %p336
      %p343 = scmp.eq.s32.totalorder %s28, 1
      %p344 = por %p342, %p343
      %p345 = scmp.ne.s32.totalorder %s337, %s340
      %p346 = scmp.eq.s32.totalorder %s28, 0
      %p347 = por %p345, %p346
      %p348 = scmp.ne.s32.totalorder %s337, %s340
      %p349 = scmp.eq.s32.totalorder %s33, 1
      %p350 = por %p348, %p349
      %p351 = scmp.ne.s32.totalorder %s340, %s341
      %p352 = scmp.eq.s32.totalorder %s33, 0
      %p353 = por %p351, %p352
      %p354 = scmp.ne.s32.totalorder %s340, %s341
      %p355 = scmp.eq.s32.totalorder %s34, 1
      %p356 = por %p354, %p355
      %p358 = scmp.ne.s32.totalorder %s341, %s357
      %p359 = scmp.eq.s32.totalorder %s34, 0
      %p360 = por %p358, %p359
      %p361 = scmp.le.s32.totalorder 1, %s28
      %p362 = scmp.lt.s32.totalorder %s28, 3
      %p363 = pnand %p361, %p362
      %p364 = pneg %p363
      // Predicated region
      $region9: #{net_forward.1} parent=5 // pred_check
        _
      $region10: #{net_forward.1} parent=5 // pred_check_branch
        %366 = sbr.rel (%p363) target = $region12
      $region11: #{net_forward.1} parent=5 // pred_region
        %s367 = ssub.s32 %s28, 1
        // Predicated region
        $region13: #{net_forward.1} parent=11 // pred_check
          %p368 = pneg %p75
        $region14: #{net_forward.1} parent=11 // pred_check_branch
          %370 = sbr.rel (%p368) target = $region16
        $region15: #{net_forward.1} parent=11 // pred_region
          _
        $region16: #{net_forward.1} parent=11 // pred_fallthru
          _
        // Predicated region
        $region17: #{net_forward.1} parent=11 // pred_check
          %p371 = pneg %p96
        $region18: #{net_forward.1} parent=11 // pred_check_branch
          %373 = sbr.rel (%p371) target = $region20
        $region19: #{net_forward.1} parent=11 // pred_region
          %s375 = ssub.s32 32, 32
          %376 = vsyncadd [#allocation3], %s375
          %s378 = sshll.u32 [#allocation2], 4
          %s379 = int_to_ptr.vmem [resolvable:$true] %s378
          %381 = dma.hbm_to_vmem [thread:$0]  %s2, 32, %s379, [#allocation3]
        $region20: #{net_forward.1} parent=11 // pred_fallthru
          _
        // Predicated region
        $region21: #{net_forward.1} parent=11 // pred_check
          %p382 = pneg %p117
        $region22: #{net_forward.1} parent=11 // pred_check_branch
          %384 = sbr.rel (%p382) target = $region24
        $region23: #{net_forward.1} parent=11 // pred_region
          %s386 = ssub.s32 4096, 4096
          %387 = vsyncadd [#allocation6], %s386
          %s388 = sshll.u32 [#allocation5], 4
          %s389 = int_to_ptr.vmem [resolvable:$true] %s388
          %394 = dma.hbm_to_vmem [thread:$0]  %s3, 4096, %s389, [#allocation6], 128, 128, 8
        $region24: #{net_forward.1} parent=11 // pred_fallthru
          _
        // Predicated region
        $region25: #{net_forward.1} parent=11 // pred_check
          %p395 = pneg %p138
        $region26: #{net_forward.1} parent=11 // pred_check_branch
          %397 = sbr.rel (%p395) target = $region28
        $region27: #{net_forward.1} parent=11 // pred_region
          _
        $region28: #{net_forward.1} parent=11 // pred_fallthru
          _
        // Predicated region
        $region29: #{net_forward.1} parent=11 // pred_check
          %p398 = pneg %p159
        $region30: #{net_forward.1} parent=11 // pred_check_branch
          %400 = sbr.rel (%p398) target = $region32
        $region31: #{net_forward.1} parent=11 // pred_region
          %s402 = ssub.s32 32, 32
          %403 = vsyncadd [#allocation6], %s402
          %s405 = sshll.u32 [#allocation7], 4
          %s406 = int_to_ptr.vmem [resolvable:$true] %s405
          %408 = dma.hbm_to_vmem [thread:$0]  %s5, 32, %s406, [#allocation6]
        $region32: #{net_forward.1} parent=11 // pred_fallthru
          _
        // Predicated region
        $region33: #{net_forward.1} parent=11 // pred_check
          %p409 = pneg %p180
        $region34: #{net_forward.1} parent=11 // pred_check_branch
          %411 = sbr.rel (%p409) target = $region36
        $region35: #{net_forward.1} parent=11 // pred_region
          %s413 = ssub.s32 1024, 1024
          %414 = vsyncadd [#allocation9], %s413
          %s415 = sshll.u32 [#allocation8], 4
          %s416 = int_to_ptr.vmem [resolvable:$true] %s415
          %421 = dma.hbm_to_vmem [thread:$0]  %s6, 1024, %s416, [#allocation9], 64, 64, 4
        $region36: #{net_forward.1} parent=11 // pred_fallthru
          _
        // Predicated region
        $region37: #{net_forward.1} parent=11 // pred_check
          %p422 = pneg %p201
        $region38: #{net_forward.1} parent=11 // pred_check_branch
          %424 = sbr.rel (%p422) target = $region40
        $region39: #{net_forward.1} parent=11 // pred_region
          %s426 = ssub.s32 5120, 5120
          %427 = vsyncadd [#allocation9], %s426
          %s428 = sshll.u32 [#allocation10], 4
          %s429 = int_to_ptr.vmem [resolvable:$true] %s428
          %434 = dma.hbm_to_vmem [thread:$0]  %s7, 5120, %s429, [#allocation9], 320, 320, 20
        $region40: #{net_forward.1} parent=11 // pred_fallthru
          _
        // Predicated region
        $region41: #{net_forward.1} parent=11 // pred_check
          %p435 = pneg %p222
        $region42: #{net_forward.1} parent=11 // pred_check_branch
          %437 = sbr.rel (%p435) target = $region44
        $region43: #{net_forward.1} parent=11 // pred_region
          _
        $region44: #{net_forward.1} parent=11 // pred_fallthru
          _
        // Predicated region
        $region45: #{net_forward.1} parent=11 // pred_check
          %p438 = pneg %p243
        $region46: #{net_forward.1} parent=11 // pred_check_branch
          %440 = sbr.rel (%p438) target = $region48
        $region47: #{net_forward.1} parent=11 // pred_region
          %s442 = ssub.s32 1024, 1024
          %443 = vsyncadd [#allocation12], %s442
          %s444 = sshll.u32 [#allocation11], 4
          %s445 = int_to_ptr.vmem [resolvable:$true] %s444
          %450 = dma.hbm_to_vmem [thread:$0]  %s9, 1024, %s445, [#allocation12], 64, 64, 4
        $region48: #{net_forward.1} parent=11 // pred_fallthru
          _
        // Predicated region
        $region49: #{net_forward.1} parent=11 // pred_check
          %p451 = pneg %p264
        $region50: #{net_forward.1} parent=11 // pred_check_branch
          %453 = sbr.rel (%p451) target = $region52
        $region51: #{net_forward.1} parent=11 // pred_region
          %s455 = ssub.s32 16, 16
          %456 = vsyncadd [#allocation12], %s455
          %s458 = sshll.u32 [#allocation13], 4
          %s459 = int_to_ptr.vmem [resolvable:$true] %s458
          %461 = dma.hbm_to_vmem [thread:$0]  %s10, 16, %s459, [#allocation12]
        $region52: #{net_forward.1} parent=11 // pred_fallthru
          _
        // Predicated region
        $region53: #{net_forward.1} parent=11 // pred_check
          %p462 = pneg %p285
        $region54: #{net_forward.1} parent=11 // pred_check_branch
          %464 = sbr.rel (%p462) target = $region56
        $region55: #{net_forward.1} parent=11 // pred_region
          %s466 = ssub.s32 1024, 1024
          %467 = vsyncadd [#allocation15], %s466
          %s468 = sshll.u32 [#allocation14], 4
          %s469 = int_to_ptr.vmem [resolvable:$true] %s468
          %474 = dma.hbm_to_vmem [thread:$0]  %s11, 1024, %s469, [#allocation15], 64, 64, 4
        $region56: #{net_forward.1} parent=11 // pred_fallthru
          _
        // Predicated region
        $region57: #{net_forward.1} parent=11 // pred_check
          %p475 = pneg %p306
        $region58: #{net_forward.1} parent=11 // pred_check_branch
          %477 = sbr.rel (%p475) target = $region60
        $region59: #{net_forward.1} parent=11 // pred_region
          %s479 = ssub.s32 16, 16
          %480 = vsyncadd [#allocation15], %s479
          %s482 = sshll.u32 [#allocation16], 4
          %s483 = int_to_ptr.vmem [resolvable:$true] %s482
          %485 = dma.hbm_to_vmem [thread:$0]  %s12, 16, %s483, [#allocation15]
        $region60: #{net_forward.1} parent=11 // pred_fallthru
          _
        // Predicated region
        $region61: #{net_forward.1} parent=11 // pred_check
          %p486 = pneg %p327
        $region62: #{net_forward.1} parent=11 // pred_check_branch
          %488 = sbr.rel (%p486) target = $region64
        $region63: #{net_forward.1} parent=11 // pred_region
          _
        $region64: #{net_forward.1} parent=11 // pred_fallthru
          _
      $region12: #{net_forward.1} parent=5 // pred_fallthru
        _
      %p489 = scmp.lt.s32.totalorder %s28, 2
      // Predicated region
      $region65: #{net_forward.1} parent=5 // pred_check
        %p490 = pneg %p489
      $region66: #{net_forward.1} parent=5 // pred_check_branch
        %492 = sbr.rel (%p490) target = $region68
      $region67: #{net_forward.1} parent=5 // pred_region
        // Predicated region
        $region69: #{net_forward.1} parent=67 // pred_check
          %p493 = pneg %p48
        $region70: #{net_forward.1} parent=67 // pred_check_branch
          %495 = sbr.rel (%p493) target = $region72
        $region71: #{net_forward.1} parent=67 // pred_region
          %s496 = smul.u32 32, %s28
          %p497 = scmp.lt.s32.totalorder %s496, 63
          %s498 = scalar_select %p497, %s496, 63
          %s499 = smul.addr %s498, 4
          %s500 = scalar_lea.vmem %s0, %s499
          %s501 = smul.u32 32, %s28
        $region72: #{net_forward.1} parent=67 // pred_fallthru
          _
      $region68: #{net_forward.1} parent=5 // pred_fallthru
        _
      %p502 = scmp.le.s32.totalorder 1, %s28
      %p503 = scmp.lt.s32.totalorder %s28, 3
      %p504 = pnand %p502, %p503
      %p505 = pneg %p504
      // Predicated region
      $region73: #{net_forward.1} parent=5 // pred_check
        _
      $region74: #{net_forward.1} parent=5 // pred_check_branch
        %507 = sbr.rel (%p504) target = $region76
      $region75: #{net_forward.1} parent=5 // pred_region
        %s508 = ssub.s32 %s28, 1
        // Predicated region
        $region77: #{net_forward.1} parent=75 // pred_check
          %p509 = pneg %p96
        $region78: #{net_forward.1} parent=75 // pred_check_branch
          %511 = sbr.rel (%p509) target = $region80
        $region79: #{net_forward.1} parent=75 // pred_region
          %512 = dma.done [#allocation3], 32
        $region80: #{net_forward.1} parent=75 // pred_fallthru
          _
        // Predicated region
        $region81: #{net_forward.1} parent=75 // pred_check
          %p513 = pneg %p117
        $region82: #{net_forward.1} parent=75 // pred_check_branch
          %515 = sbr.rel (%p513) target = $region84
        $region83: #{net_forward.1} parent=75 // pred_region
          %516 = dma.done [#allocation6], 4096
        $region84: #{net_forward.1} parent=75 // pred_fallthru
          _
        // Predicated region
        $region85: #{net_forward.1} parent=75 // pred_check
          %p517 = pneg %p159
        $region86: #{net_forward.1} parent=75 // pred_check_branch
          %519 = sbr.rel (%p517) target = $region88
        $region87: #{net_forward.1} parent=75 // pred_region
          %520 = dma.done [#allocation6], 32
        $region88: #{net_forward.1} parent=75 // pred_fallthru
          _
        // Predicated region
        $region89: #{net_forward.1} parent=75 // pred_check
          %p521 = pneg %p180
        $region90: #{net_forward.1} parent=75 // pred_check_branch
          %523 = sbr.rel (%p521) target = $region92
        $region91: #{net_forward.1} parent=75 // pred_region
          %524 = dma.done [#allocation9], 1024
        $region92: #{net_forward.1} parent=75 // pred_fallthru
          _
        // Predicated region
        $region93: #{net_forward.1} parent=75 // pred_check
          %p525 = pneg %p201
        $region94: #{net_forward.1} parent=75 // pred_check_branch
          %527 = sbr.rel (%p525) target = $region96
        $region95: #{net_forward.1} parent=75 // pred_region
          %528 = dma.done [#allocation9], 5120
        $region96: #{net_forward.1} parent=75 // pred_fallthru
          _
        // Predicated region
        $region97: #{net_forward.1} parent=75 // pred_check
          %p529 = pneg %p243
        $region98: #{net_forward.1} parent=75 // pred_check_branch
          %531 = sbr.rel (%p529) target = $region100
        $region99: #{net_forward.1} parent=75 // pred_region
          %532 = dma.done [#allocation12], 1024
        $region100: #{net_forward.1} parent=75 // pred_fallthru
          _
        // Predicated region
        $region101: #{net_forward.1} parent=75 // pred_check
          %p533 = pneg %p264
        $region102: #{net_forward.1} parent=75 // pred_check_branch
          %535 = sbr.rel (%p533) target = $region104
        $region103: #{net_forward.1} parent=75 // pred_region
          %536 = dma.done [#allocation12], 16
        $region104: #{net_forward.1} parent=75 // pred_fallthru
          _
        // Predicated region
        $region105: #{net_forward.1} parent=75 // pred_check
          %p537 = pneg %p285
        $region106: #{net_forward.1} parent=75 // pred_check_branch
          %539 = sbr.rel (%p537) target = $region108
        $region107: #{net_forward.1} parent=75 // pred_region
          %540 = dma.done [#allocation15], 1024
        $region108: #{net_forward.1} parent=75 // pred_fallthru
          _
        // Predicated region
        $region109: #{net_forward.1} parent=75 // pred_check
          %p541 = pneg %p306
        $region110: #{net_forward.1} parent=75 // pred_check_branch
          %543 = sbr.rel (%p541) target = $region112
        $region111: #{net_forward.1} parent=75 // pred_region
          %544 = dma.done [#allocation15], 16
        $region112: #{net_forward.1} parent=75 // pred_fallthru
          _
        %s545 = smul.u32 32, %s33
        %p546 = scmp.lt.s32.totalorder %s545, 63
        %s547 = scalar_select %p546, %s545, 63
        %s548 = smul.addr %s547, 4
        %s549 = scalar_lea.vmem %s0, %s548
        %p550 = pneg %p54
        %p551 = pneg %p51
        %p552 = pneg %p75
        %p553 = pneg %p72
        %p554 = pneg %p96
        %p555 = pneg %p93
        %p556 = pneg %p117
        %p557 = pneg %p114
        %p558 = pneg %p138
        %p559 = pneg %p135
        %p560 = pneg %p159
        %p561 = pneg %p156
        %p562 = pneg %p180
        %p563 = pneg %p177
        %p564 = pneg %p201
        %p565 = pneg %p198
        %p566 = pneg %p222
        %p567 = pneg %p219
        %p568 = pneg %p243
        %p569 = pneg %p240
        %p570 = pneg %p264
        %p571 = pneg %p261
        %p572 = pneg %p285
        %p573 = pneg %p282
        %p574 = pneg %p306
        %p575 = pneg %p303
        %p576 = pneg %p327
        %p577 = pneg %p324
        %p578 = pneg %p353
        %p579 = pneg %p350
        %s580 = sand.u32 %s340, 1
        %s581 = scalar_lea.sflag [#allocation4], %s580
        %s582 = sand.u32 %s340, 1
        %s583 = smul.addr %s582, 8
        %s584 = scalar_lea.vmem [#allocation17], %s583
        %s585 = smul.u32 32, %s33
        %p586 = scmp.lt.s32.totalorder %s585, 63
        %s587 = scalar_select %p586, %s585, 63
        %s588 = smul.addr %s587, 4
        %s589 = scalar_lea.vmem %s0, %s588
        %s590 = smul.u32 32, %s33
        %v592 = vld [vmem:[%s589] sm:$0xf]
        %v593 = vld [vmem:[%s589 + $0x4] sm:$0xf]
        %v594 = vld [vmem:[%s589 + $0x8] sm:$0xf]
        %v595 = vld [vmem:[%s589 + $0xc] sm:$0xf]
        %v596 = vld [vmem:[%s589 + $0x10] sm:$0xf]
        %v597 = vld [vmem:[%s589 + $0x14] sm:$0xf]
        %v598 = vld [vmem:[%s589 + $0x18] sm:$0xf]
        %v599 = vld [vmem:[%s589 + $0x1c] sm:$0xf]
        %v600 = vld [vmem:[%s589 + $0x20] sm:$0xf]
        %v601 = vld [vmem:[%s589 + $0x24] sm:$0xf]
        %v602 = vld [vmem:[%s589 + $0x28] sm:$0xf]
        %v603 = vld [vmem:[%s589 + $0x2c] sm:$0xf]
        %v604 = vld [vmem:[%s589 + $0x30] sm:$0xf]
        %v605 = vld [vmem:[%s589 + $0x34] sm:$0xf]
        %v606 = vld [vmem:[%s589 + $0x38] sm:$0xf]
        %v607 = vld [vmem:[%s589 + $0x3c] sm:$0xf]
        %v608 = vld [vmem:[%s589 + $0x40] sm:$0xf]
        %v609 = vld [vmem:[%s589 + $0x44] sm:$0xf]
        %v610 = vld [vmem:[%s589 + $0x48] sm:$0xf]
        %v611 = vld [vmem:[%s589 + $0x4c] sm:$0xf]
        %v612 = vld [vmem:[%s589 + $0x50] sm:$0xf]
        %v613 = vld [vmem:[%s589 + $0x54] sm:$0xf]
        %v614 = vld [vmem:[%s589 + $0x58] sm:$0xf]
        %v615 = vld [vmem:[%s589 + $0x5c] sm:$0xf]
        %v616 = vld [vmem:[%s589 + $0x60] sm:$0xf]
        %v617 = vld [vmem:[%s589 + $0x64] sm:$0xf]
        %v618 = vld [vmem:[%s589 + $0x68] sm:$0xf]
        %v619 = vld [vmem:[%s589 + $0x6c] sm:$0xf]
        %v620 = vld [vmem:[%s589 + $0x70] sm:$0xf]
        %v621 = vld [vmem:[%s589 + $0x74] sm:$0xf]
        %v622 = vld [vmem:[%s589 + $0x78] sm:$0xf]
        %v623 = vld [vmem:[%s589 + $0x7c] sm:$0xf]
        %v624 = vld [vmem:[%s1] sm:$0xff]
        %v625 = vld [vmem:[%s1 + $0x8] sm:$0xff]
        %v626 = vld [vmem:[%s1 + $0x10] sm:$0xff]
        %v627 = vld [vmem:[%s1 + $0x18] sm:$0xff]
        %v628 = vld [vmem:[%s1 + $0x20] sm:$0xff]
        %v629 = vld [vmem:[%s1 + $0x28] sm:$0xff]
        %v630 = vld [vmem:[%s1 + $0x30] sm:$0xff]
        %v631 = vld [vmem:[%s1 + $0x38] sm:$0xff]
        %v632 = vld [vmem:[%s1 + $0x40] sm:$0xff]
        %v633 = vld [vmem:[%s1 + $0x48] sm:$0xff]
        %v634 = vld [vmem:[%s1 + $0x50] sm:$0xff]
        %v635 = vld [vmem:[%s1 + $0x58] sm:$0xff]
        %v636 = vld [vmem:[%s1 + $0x60] sm:$0xff]
        %v637 = vld [vmem:[%s1 + $0x68] sm:$0xff]
        %v638 = vld [vmem:[%s1 + $0x70] sm:$0xff]
        %v639 = vld [vmem:[%s1 + $0x78] sm:$0xff]
        %v640 = vld [vmem:[%s1 + $0x80] sm:$0xff]
        %v641 = vld [vmem:[%s1 + $0x88] sm:$0xff]
        %v642 = vld [vmem:[%s1 + $0x90] sm:$0xff]
        %v643 = vld [vmem:[%s1 + $0x98] sm:$0xff]
        %v676 = vunpack.c.l.b16 %v592
        %v677 = vunpack.c.l.b16 %v593
        %v678 = vunpack.c.l.b16 %v594
        %v679 = vunpack.c.l.b16 %v595
        %v680 = vunpack.c.l.b16 %v596
        %v681 = vunpack.c.l.b16 %v597
        %v682 = vunpack.c.l.b16 %v598
        %v683 = vunpack.c.l.b16 %v599
        %v684 = vunpack.c.l.b16 %v600
        %v685 = vunpack.c.l.b16 %v601
        %v686 = vunpack.c.l.b16 %v602
        %v687 = vunpack.c.l.b16 %v603
        %v688 = vunpack.c.l.b16 %v604
        %v689 = vunpack.c.l.b16 %v605
        %v690 = vunpack.c.l.b16 %v606
        %v691 = vunpack.c.l.b16 %v607
        %v692 = vunpack.c.l.b16 %v608
        %v693 = vunpack.c.l.b16 %v609
        %v694 = vunpack.c.l.b16 %v610
        %v695 = vunpack.c.l.b16 %v611
        %v696 = vunpack.c.l.b16 %v612
        %v697 = vunpack.c.l.b16 %v613
        %v698 = vunpack.c.l.b16 %v614
        %v699 = vunpack.c.l.b16 %v615
        %v700 = vunpack.c.l.b16 %v616
        %v701 = vunpack.c.l.b16 %v617
        %v702 = vunpack.c.l.b16 %v618
        %v703 = vunpack.c.l.b16 %v619
        %v704 = vunpack.c.l.b16 %v620
        %v705 = vunpack.c.l.b16 %v621
        %v706 = vunpack.c.l.b16 %v622
        %v707 = vunpack.c.l.b16 %v623
        %v708 = vpack.c.b16 %v677, %v676
        %v709 = vpack.c.b16 %v679, %v678
        %v710 = vpack.c.b16 %v681, %v680
        %v711 = vpack.c.b16 %v683, %v682
        %v712 = vpack.c.b16 %v685, %v684
        %v713 = vpack.c.b16 %v687, %v686
        %v714 = vpack.c.b16 %v689, %v688
        %v715 = vpack.c.b16 %v691, %v690
        %v716 = vpack.c.b16 %v693, %v692
        %v717 = vpack.c.b16 %v695, %v694
        %v718 = vpack.c.b16 %v697, %v696
        %v719 = vpack.c.b16 %v699, %v698
        %v720 = vpack.c.b16 %v701, %v700
        %v721 = vpack.c.b16 %v703, %v702
        %v722 = vpack.c.b16 %v705, %v704
        %v723 = vpack.c.b16 %v707, %v706
        %v744 = vunpack.c.l.b16 %v624
        %v745 = vunpack.c.h.b16 %v624
        %v746 = vunpack.c.l.b16 %v625
        %v747 = vunpack.c.h.b16 %v625
        %v748 = vunpack.c.l.b16 %v626
        %v749 = vunpack.c.h.b16 %v626
        %v750 = vunpack.c.l.b16 %v627
        %v751 = vunpack.c.h.b16 %v627
        %v752 = vunpack.c.l.b16 %v628
        %v753 = vunpack.c.h.b16 %v628
        %v754 = vunpack.c.l.b16 %v629
        %v755 = vunpack.c.h.b16 %v629
        %v756 = vunpack.c.l.b16 %v630
        %v757 = vunpack.c.h.b16 %v630
        %v758 = vunpack.c.l.b16 %v631
        %v759 = vunpack.c.h.b16 %v631
        %v760 = vunpack.c.l.b16 %v632
        %v761 = vunpack.c.h.b16 %v632
        %v762 = vunpack.c.l.b16 %v633
        %v763 = vunpack.c.h.b16 %v633
        %v764 = vunpack.c.l.b16 %v634
        %v765 = vunpack.c.h.b16 %v634
        %v766 = vunpack.c.l.b16 %v635
        %v767 = vunpack.c.h.b16 %v635
        %v768 = vunpack.c.l.b16 %v636
        %v769 = vunpack.c.h.b16 %v636
        %v770 = vunpack.c.l.b16 %v637
        %v771 = vunpack.c.h.b16 %v637
        %v772 = vunpack.c.l.b16 %v638
        %v773 = vunpack.c.h.b16 %v638
        %v774 = vunpack.c.l.b16 %v639
        %v775 = vunpack.c.h.b16 %v639
        %v776 = vunpack.c.l.b16 %v640
        %v777 = vunpack.c.h.b16 %v640
        %v778 = vunpack.c.l.b16 %v641
        %v779 = vunpack.c.h.b16 %v641
        %v780 = vunpack.c.l.b16 %v642
        %v781 = vunpack.c.h.b16 %v642
        %v782 = vunpack.c.l.b16 %v643
        %v783 = vunpack.c.h.b16 %v643
        %v784 = vpack.c.b16 %v754, %v744
        %v785 = vpack.c.b16 %v755, %v745
        %v786 = vpack.c.b16 %v756, %v746
        %v787 = vpack.c.b16 %v757, %v747
        %v788 = vpack.c.b16 %v758, %v748
        %v789 = vpack.c.b16 %v759, %v749
        %v790 = vpack.c.b16 %v760, %v750
        %v791 = vpack.c.b16 %v761, %v751
        %v792 = vpack.c.b16 %v762, %v752
        %v793 = vpack.c.b16 %v763, %v753
        %v794 = vpack.c.b16 %v774, %v764
        %v795 = vpack.c.b16 %v775, %v765
        %v796 = vpack.c.b16 %v776, %v766
        %v797 = vpack.c.b16 %v777, %v767
        %v798 = vpack.c.b16 %v778, %v768
        %v799 = vpack.c.b16 %v779, %v769
        %v800 = vpack.c.b16 %v780, %v770
        %v801 = vpack.c.b16 %v781, %v771
        %v802 = vpack.c.b16 %v782, %v772
        %v803 = vpack.c.b16 %v783, %v773
        %vm824 = vcmask 261120
        %v826 = vsel %vm824, %v708, 0
        %v829 = vsel %vm824, %v709, 0
        %v832 = vsel %vm824, %v710, 0
        %v835 = vsel %vm824, %v711, 0
        %v838 = vsel %vm824, %v712, 0
        %v841 = vsel %vm824, %v713, 0
        %v844 = vsel %vm824, %v714, 0
        %v847 = vsel %vm824, %v715, 0
        %v850 = vsel %vm824, %v716, 0
        %v853 = vsel %vm824, %v717, 0
        %v856 = vsel %vm824, %v718, 0
        %v859 = vsel %vm824, %v719, 0
        %v862 = vsel %vm824, %v720, 0
        %v865 = vsel %vm824, %v721, 0
        %v868 = vsel %vm824, %v722, 0
        %v871 = vsel %vm824, %v723, 0
        %873 = vmatprep.subr.bf16.mxu0 %v785
        %874 = vmatpush1.bf16.msra.mxu0 %v784
        %875 = vmatprep.subr.bf16.mxu0 %v795
        %876 = vmatpush1.bf16.msra.mxu0 %v794
        %877 = vmatprep.subr.bf16.mxu0 0
        %878 = vmatpush1.bf16.msra.mxu0 0
        %879 = vmatprep.subr.bf16.mxu0 0
        %880 = vmatpush1.bf16.msra.mxu0 0
        %881 = vmatprep.subr.bf16.mxu0 0
        %882 = vmatpush1.bf16.msra.mxu0 0
        %883 = vmatprep.subr.bf16.mxu0 0
        %884 = vmatpush1.bf16.msra.mxu0 0
        %885 = vmatprep.subr.bf16.mxu0 0
        %886 = vmatpush1.bf16.msra.mxu0 0
        %887 = vmatprep.subr.bf16.mxu0 0
        %888 = vmatpush1.bf16.msra.mxu0 0
        %889 = vmatprep.subr.bf16.mxu0 0
        %890 = vmatpush1.bf16.msra.mxu0 0
        %891 = vmatprep.subr.bf16.mxu0 0
        %892 = vmatpush1.bf16.msra.mxu0 0
        %893 = vmatprep.subr.bf16.mxu0 0
        %894 = vmatpush1.bf16.msra.mxu0 0
        %895 = vmatprep.subr.bf16.mxu0 0
        %896 = vmatpush1.bf16.msra.mxu0 0
        %897 = vmatprep.subr.bf16.mxu0 0
        %898 = vmatpush1.bf16.msra.mxu0 0
        %899 = vmatprep.subr.bf16.mxu0 0
        %900 = vmatpush1.bf16.msra.mxu0 0
        %901 = vmatprep.subr.bf16.mxu0 0
        %902 = vmatpush1.bf16.msra.mxu0 0
        %903 = vmatprep.subr.bf16.mxu0 0
        %904 = vmatpush1.bf16.msra.mxu0 0
        %905 = vmatprep.mubr.bf16.mxu0 0
        %906 = vmatmul.mubr.bf16.gmra.mrb[0].mxu0 %v826
        %v907 = vpop.f32.mrb[0].mxu0
        %v908 = vadd.f32 0.0, %v907
        %v909 = vpop.f32.mrb[0].mxu0
        %v910 = vadd.f32 0.0, %v909
        %v911 = vpop.f32.mrb[0].mxu0
        %v912 = vadd.f32 0.0, %v911
        %v913 = vpop.f32.mrb[0].mxu0
        %v914 = vadd.f32 0.0, %v913
        %915 = vmatprep.mubr.bf16.mxu0 0
        %916 = vmatmul.mubr.bf16.gmra.mrb[0].mxu0 %v829
        %v917 = vpop.f32.mrb[0].mxu0
        %v918 = vadd.f32 0.0, %v917
        %v919 = vpop.f32.mrb[0].mxu0
        %v920 = vadd.f32 0.0, %v919
        %v921 = vpop.f32.mrb[0].mxu0
        %v922 = vadd.f32 0.0, %v921
        %v923 = vpop.f32.mrb[0].mxu0
        %v924 = vadd.f32 0.0, %v923
        %925 = vmatprep.mubr.bf16.mxu0 0
        %926 = vmatmul.mubr.bf16.gmra.mrb[0].mxu0 %v832
        %v927 = vpop.f32.mrb[0].mxu0
        %v928 = vadd.f32 0.0, %v927
        %v929 = vpop.f32.mrb[0].mxu0
        %v930 = vadd.f32 0.0, %v929
        %v931 = vpop.f32.mrb[0].mxu0
        %v932 = vadd.f32 0.0, %v931
        %v933 = vpop.f32.mrb[0].mxu0
        %v934 = vadd.f32 0.0, %v933
        %935 = vmatprep.mubr.bf16.mxu0 0
        %936 = vmatmul.mubr.bf16.gmra.mrb[0].mxu0 %v835
        %v937 = vpop.f32.mrb[0].mxu0
        %v938 = vadd.f32 0.0, %v937
        %v939 = vpop.f32.mrb[0].mxu0
        %v940 = vadd.f32 0.0, %v939
        %v941 = vpop.f32.mrb[0].mxu0
        %v942 = vadd.f32 0.0, %v941
        %v943 = vpop.f32.mrb[0].mxu0
        %v944 = vadd.f32 0.0, %v943
        %945 = vmatprep.mubr.bf16.mxu0 0
        %946 = vmatmul.mubr.bf16.gmra.mrb[0].mxu0 %v838
        %v947 = vpop.f32.mrb[0].mxu0
        %v948 = vadd.f32 0.0, %v947
        %v949 = vpop.f32.mrb[0].mxu0
        %v950 = vadd.f32 0.0, %v949
        %v951 = vpop.f32.mrb[0].mxu0
        %v952 = vadd.f32 0.0, %v951
        %v953 = vpop.f32.mrb[0].mxu0
        %v954 = vadd.f32 0.0, %v953
        %955 = vmatprep.mubr.bf16.mxu0 0
        %956 = vmatmul.mubr.bf16.gmra.mrb[0].mxu0 %v841
        %v957 = vpop.f32.mrb[0].mxu0
        %v958 = vadd.f32 0.0, %v957
        %v959 = vpop.f32.mrb[0].mxu0
        %v960 = vadd.f32 0.0, %v959
        %v961 = vpop.f32.mrb[0].mxu0
        %v962 = vadd.f32 0.0, %v961
        %v963 = vpop.f32.mrb[0].mxu0
        %v964 = vadd.f32 0.0, %v963
        %965 = vmatprep.mubr.bf16.mxu0 0
        %966 = vmatmul.mubr.bf16.gmra.mrb[0].mxu0 %v844
        %v967 = vpop.f32.mrb[0].mxu0
        %v968 = vadd.f32 0.0, %v967
        %v969 = vpop.f32.mrb[0].mxu0
        %v970 = vadd.f32 0.0, %v969
        %v971 = vpop.f32.mrb[0].mxu0
        %v972 = vadd.f32 0.0, %v971
        %v973 = vpop.f32.mrb[0].mxu0
        %v974 = vadd.f32 0.0, %v973
        %975 = vmatprep.mubr.bf16.mxu0 0
        %976 = vmatmul.mubr.bf16.gmra.mrb[0].mxu0 %v847
        %v977 = vpop.f32.mrb[0].mxu0
        %v978 = vadd.f32 0.0, %v977
        %v979 = vpop.f32.mrb[0].mxu0
        %v980 = vadd.f32 0.0, %v979
        %v981 = vpop.f32.mrb[0].mxu0
        %v982 = vadd.f32 0.0, %v981
        %v983 = vpop.f32.mrb[0].mxu0
        %v984 = vadd.f32 0.0, %v983
        %985 = vmatprep.mubr.bf16.mxu0 0
        %986 = vmatmul.mubr.bf16.gmra.mrb[0].mxu0 %v850
        %v987 = vpop.f32.mrb[0].mxu0
        %v988 = vadd.f32 0.0, %v987
        %v989 = vpop.f32.mrb[0].mxu0
        %v990 = vadd.f32 0.0, %v989
        %v991 = vpop.f32.mrb[0].mxu0
        %v992 = vadd.f32 0.0, %v991
        %v993 = vpop.f32.mrb[0].mxu0
        %v994 = vadd.f32 0.0, %v993
        %995 = vmatprep.mubr.bf16.mxu0 0
        %996 = vmatmul.mubr.bf16.gmra.mrb[0].mxu0 %v853
        %v997 = vpop.f32.mrb[0].mxu0
        %v998 = vadd.f32 0.0, %v997
        %v999 = vpop.f32.mrb[0].mxu0
        %v1000 = vadd.f32 0.0, %v999
        %v1001 = vpop.f32.mrb[0].mxu0
        %v1002 = vadd.f32 0.0, %v1001
        %v1003 = vpop.f32.mrb[0].mxu0
        %v1004 = vadd.f32 0.0, %v1003
        %1005 = vmatprep.mubr.bf16.mxu0 0
        %1006 = vmatmul.mubr.bf16.gmra.mrb[0].mxu0 %v856
        %v1007 = vpop.f32.mrb[0].mxu0
        %v1008 = vadd.f32 0.0, %v1007
        %v1009 = vpop.f32.mrb[0].mxu0
        %v1010 = vadd.f32 0.0, %v1009
        %v1011 = vpop.f32.mrb[0].mxu0
        %v1012 = vadd.f32 0.0, %v1011
        %v1013 = vpop.f32.mrb[0].mxu0
        %v1014 = vadd.f32 0.0, %v1013
        %1015 = vmatprep.mubr.bf16.mxu0 0
        %1016 = vmatmul.mubr.bf16.gmra.mrb[0].mxu0 %v859
        %v1017 = vpop.f32.mrb[0].mxu0
        %v1018 = vadd.f32 0.0, %v1017
        %v1019 = vpop.f32.mrb[0].mxu0
        %v1020 = vadd.f32 0.0, %v1019
        %v1021 = vpop.f32.mrb[0].mxu0
        %v1022 = vadd.f32 0.0, %v1021
        %v1023 = vpop.f32.mrb[0].mxu0
        %v1024 = vadd.f32 0.0, %v1023
        %1025 = vmatprep.mubr.bf16.mxu0 0
        %1026 = vmatmul.mubr.bf16.gmra.mrb[0].mxu0 %v862
        %v1027 = vpop.f32.mrb[0].mxu0
        %v1028 = vadd.f32 0.0, %v1027
        %v1029 = vpop.f32.mrb[0].mxu0
        %v1030 = vadd.f32 0.0, %v1029
        %v1031 = vpop.f32.mrb[0].mxu0
        %v1032 = vadd.f32 0.0, %v1031
        %v1033 = vpop.f32.mrb[0].mxu0
        %v1034 = vadd.f32 0.0, %v1033
        %1035 = vmatprep.mubr.bf16.mxu0 0
        %1036 = vmatmul.mubr.bf16.gmra.mrb[0].mxu0 %v865
        %v1037 = vpop.f32.mrb[0].mxu0
        %v1038 = vadd.f32 0.0, %v1037
        %v1039 = vpop.f32.mrb[0].mxu0
        %v1040 = vadd.f32 0.0, %v1039
        %v1041 = vpop.f32.mrb[0].mxu0
        %v1042 = vadd.f32 0.0, %v1041
        %v1043 = vpop.f32.mrb[0].mxu0
        %v1044 = vadd.f32 0.0, %v1043
        %1045 = vmatprep.mubr.bf16.mxu0 0
        %1046 = vmatmul.mubr.bf16.gmra.mrb[0].mxu0 %v868
        %v1047 = vpop.f32.mrb[0].mxu0
        %v1048 = vadd.f32 0.0, %v1047
        %v1049 = vpop.f32.mrb[0].mxu0
        %v1050 = vadd.f32 0.0, %v1049
        %v1051 = vpop.f32.mrb[0].mxu0
        %v1052 = vadd.f32 0.0, %v1051
        %v1053 = vpop.f32.mrb[0].mxu0
        %v1054 = vadd.f32 0.0, %v1053
        %1055 = vmatprep.mubr.bf16.mxu0 0
        %1056 = vmatmul.mubr.bf16.gmra.mrb[0].mxu0 %v871
        %v1057 = vpop.f32.mrb[0].mxu0
        %v1058 = vadd.f32 0.0, %v1057
        %v1059 = vpop.f32.mrb[0].mxu0
        %v1060 = vadd.f32 0.0, %v1059
        %v1061 = vpop.f32.mrb[0].mxu0
        %v1062 = vadd.f32 0.0, %v1061
        %v1063 = vpop.f32.mrb[0].mxu0
        %v1064 = vadd.f32 0.0, %v1063
        %1065 = vdwg.mxu0
        %1066 = vmatprep.subr.bf16.mxu0 %v787
        %1067 = vmatpush1.bf16.msra.mxu0 %v786
        %1068 = vmatprep.subr.bf16.mxu0 %v797
        %1069 = vmatpush1.bf16.msra.mxu0 %v796
        %1070 = vmatprep.subr.bf16.mxu0 0
        %1071 = vmatpush1.bf16.msra.mxu0 0
        %1072 = vmatprep.subr.bf16.mxu0 0
        %1073 = vmatpush1.bf16.msra.mxu0 0
        %1074 = vmatprep.subr.bf16.mxu0 0
        %1075 = vmatpush1.bf16.msra.mxu0 0
        %1076 = vmatprep.subr.bf16.mxu0 0
        %1077 = vmatpush1.bf16.msra.mxu0 0
        %1078 = vmatprep.subr.bf16.mxu0 0
        %1079 = vmatpush1.bf16.msra.mxu0 0
        %1080 = vmatprep.subr.bf16.mxu0 0
        %1081 = vmatpush1.bf16.msra.mxu0 0
        %1082 = vmatprep.subr.bf16.mxu0 0
        %1083 = vmatpush1.bf16.msra.mxu0 0
        %1084 = vmatprep.subr.bf16.mxu0 0
        %1085 = vmatpush1.bf16.msra.mxu0 0
        %1086 = vmatprep.subr.bf16.mxu0 0
        %1087 = vmatpush1.bf16.msra.mxu0 0
        %1088 = vmatprep.subr.bf16.mxu0 0
        %1089 = vmatpush1.bf16.msra.mxu0 0
        %1090 = vmatprep.subr.bf16.mxu0 0
        %1091 = vmatpush1.bf16.msra.mxu0 0
        %1092 = vmatprep.subr.bf16.mxu0 0
        %1093 = vmatpush1.bf16.msra.mxu0 0
        %1094 = vmatprep.subr.bf16.mxu0 0
        %1095 = vmatpush1.bf16.msra.mxu0 0
        %1096 = vmatprep.subr.bf16.mxu0 0
        %1097 = vmatpush1.bf16.msra.mxu0 0
        %1098 = vmatprep.mubr.bf16.mxu0 0
        %1099 = vmatmul.mubr.bf16.gmra.mrb[0].mxu0 %v826
        %v1100 = vpop.f32.mrb[0].mxu0
        %v1101 = vadd.f32 0.0, %v1100
        %v1102 = vpop.f32.mrb[0].mxu0
        %v1103 = vadd.f32 0.0, %v1102
        %v1104 = vpop.f32.mrb[0].mxu0
        %v1105 = vadd.f32 0.0, %v1104
        %v1106 = vpop.f32.mrb[0].mxu0
        %v1107 = vadd.f32 0.0, %v1106
        %1108 = vmatprep.mubr.bf16.mxu0 0
        %1109 = vmatmul.mubr.bf16.gmra.mrb[0].mxu0 %v829
        %v1110 = vpop.f32.mrb[0].mxu0
        %v1111 = vadd.f32 0.0, %v1110
        %v1112 = vpop.f32.mrb[0].mxu0
        %v1113 = vadd.f32 0.0, %v1112
        %v1114 = vpop.f32.mrb[0].mxu0
        %v1115 = vadd.f32 0.0, %v1114
        %v1116 = vpop.f32.mrb[0].mxu0
        %v1117 = vadd.f32 0.0, %v1116
        %1118 = vmatprep.mubr.bf16.mxu0 0
        %1119 = vmatmul.mubr.bf16.gmra.mrb[0].mxu0 %v832
        %v1120 = vpop.f32.mrb[0].mxu0
        %v1121 = vadd.f32 0.0, %v1120
        %v1122 = vpop.f32.mrb[0].mxu0
        %v1123 = vadd.f32 0.0, %v1122
        %v1124 = vpop.f32.mrb[0].mxu0
        %v1125 = vadd.f32 0.0, %v1124
        %v1126 = vpop.f32.mrb[0].mxu0
        %v1127 = vadd.f32 0.0, %v1126
        %1128 = vmatprep.mubr.bf16.mxu0 0
        %1129 = vmatmul.mubr.bf16.gmra.mrb[0].mxu0 %v835
        %v1130 = vpop.f32.mrb[0].mxu0
        %v1131 = vadd.f32 0.0, %v1130
        %v1132 = vpop.f32.mrb[0].mxu0
        %v1133 = vadd.f32 0.0, %v1132
        %v1134 = vpop.f32.mrb[0].mxu0
        %v1135 = vadd.f32 0.0, %v1134
        %v1136 = vpop.f32.mrb[0].mxu0
        %v1137 = vadd.f32 0.0, %v1136
        %1138 = vmatprep.mubr.bf16.mxu0 0
        %1139 = vmatmul.mubr.bf16.gmra.mrb[0].mxu0 %v838
        %v1140 = vpop.f32.mrb[0].mxu0
        %v1141 = vadd.f32 0.0, %v1140
        %v1142 = vpop.f32.mrb[0].mxu0
        %v1143 = vadd.f32 0.0, %v1142
        %v1144 = vpop.f32.mrb[0].mxu0
        %v1145 = vadd.f32 0.0, %v1144
        %v1146 = vpop.f32.mrb[0].mxu0
        %v1147 = vadd.f32 0.0, %v1146
        %1148 = vmatprep.mubr.bf16.mxu0 0
        %1149 = vmatmul.mubr.bf16.gmra.mrb[0].mxu0 %v841
        %v1150 = vpop.f32.mrb[0].mxu0
        %v1151 = vadd.f32 0.0, %v1150
        %v1152 = vpop.f32.mrb[0].mxu0
        %v1153 = vadd.f32 0.0, %v1152
        %v1154 = vpop.f32.mrb[0].mxu0
        %v1155 = vadd.f32 0.0, %v1154
        %v1156 = vpop.f32.mrb[0].mxu0
        %v1157 = vadd.f32 0.0, %v1156
        %1158 = vmatprep.mubr.bf16.mxu0 0
        %1159 = vmatmul.mubr.bf16.gmra.mrb[0].mxu0 %v844
        %v1160 = vpop.f32.mrb[0].mxu0
        %v1161 = vadd.f32 0.0, %v1160
        %v1162 = vpop.f32.mrb[0].mxu0
        %v1163 = vadd.f32 0.0, %v1162
        %v1164 = vpop.f32.mrb[0].mxu0
        %v1165 = vadd.f32 0.0, %v1164
        %v1166 = vpop.f32.mrb[0].mxu0
        %v1167 = vadd.f32 0.0, %v1166
        %1168 = vmatprep.mubr.bf16.mxu0 0
        %1169 = vmatmul.mubr.bf16.gmra.mrb[0].mxu0 %v847
        %v1170 = vpop.f32.mrb[0].mxu0
        %v1171 = vadd.f32 0.0, %v1170
        %v1172 = vpop.f32.mrb[0].mxu0
        %v1173 = vadd.f32 0.0, %v1172
        %v1174 = vpop.f32.mrb[0].mxu0
        %v1175 = vadd.f32 0.0, %v1174
        %v1176 = vpop.f32.mrb[0].mxu0
        %v1177 = vadd.f32 0.0, %v1176
        %1178 = vmatprep.mubr.bf16.mxu0 0
        %1179 = vmatmul.mubr.bf16.gmra.mrb[0].mxu0 %v850
        %v1180 = vpop.f32.mrb[0].mxu0
        %v1181 = vadd.f32 0.0, %v1180
        %v1182 = vpop.f32.mrb[0].mxu0
        %v1183 = vadd.f32 0.0, %v1182
        %v1184 = vpop.f32.mrb[0].mxu0
        %v1185 = vadd.f32 0.0, %v1184
        %v1186 = vpop.f32.mrb[0].mxu0
        %v1187 = vadd.f32 0.0, %v1186
        %1188 = vmatprep.mubr.bf16.mxu0 0
        %1189 = vmatmul.mubr.bf16.gmra.mrb[0].mxu0 %v853
        %v1190 = vpop.f32.mrb[0].mxu0
        %v1191 = vadd.f32 0.0, %v1190
        %v1192 = vpop.f32.mrb[0].mxu0
        %v1193 = vadd.f32 0.0, %v1192
        %v1194 = vpop.f32.mrb[0].mxu0
        %v1195 = vadd.f32 0.0, %v1194
        %v1196 = vpop.f32.mrb[0].mxu0
        %v1197 = vadd.f32 0.0, %v1196
        %1198 = vmatprep.mubr.bf16.mxu0 0
        %1199 = vmatmul.mubr.bf16.gmra.mrb[0].mxu0 %v856
        %v1200 = vpop.f32.mrb[0].mxu0
        %v1201 = vadd.f32 0.0, %v1200
        %v1202 = vpop.f32.mrb[0].mxu0
        %v1203 = vadd.f32 0.0, %v1202
        %v1204 = vpop.f32.mrb[0].mxu0
        %v1205 = vadd.f32 0.0, %v1204
        %v1206 = vpop.f32.mrb[0].mxu0
        %v1207 = vadd.f32 0.0, %v1206
        %1208 = vmatprep.mubr.bf16.mxu0 0
        %1209 = vmatmul.mubr.bf16.gmra.mrb[0].mxu0 %v859
        %v1210 = vpop.f32.mrb[0].mxu0
        %v1211 = vadd.f32 0.0, %v1210
        %v1212 = vpop.f32.mrb[0].mxu0
        %v1213 = vadd.f32 0.0, %v1212
        %v1214 = vpop.f32.mrb[0].mxu0
        %v1215 = vadd.f32 0.0, %v1214
        %v1216 = vpop.f32.mrb[0].mxu0
        %v1217 = vadd.f32 0.0, %v1216
        %1218 = vmatprep.mubr.bf16.mxu0 0
        %1219 = vmatmul.mubr.bf16.gmra.mrb[0].mxu0 %v862
        %v1220 = vpop.f32.mrb[0].mxu0
        %v1221 = vadd.f32 0.0, %v1220
        %v1222 = vpop.f32.mrb[0].mxu0
        %v1223 = vadd.f32 0.0, %v1222
        %v1224 = vpop.f32.mrb[0].mxu0
        %v1225 = vadd.f32 0.0, %v1224
        %v1226 = vpop.f32.mrb[0].mxu0
        %v1227 = vadd.f32 0.0, %v1226
        %1228 = vmatprep.mubr.bf16.mxu0 0
        %1229 = vmatmul.mubr.bf16.gmra.mrb[0].mxu0 %v865
        %v1230 = vpop.f32.mrb[0].mxu0
        %v1231 = vadd.f32 0.0, %v1230
        %v1232 = vpop.f32.mrb[0].mxu0
        %v1233 = vadd.f32 0.0, %v1232
        %v1234 = vpop.f32.mrb[0].mxu0
        %v1235 = vadd.f32 0.0, %v1234
        %v1236 = vpop.f32.mrb[0].mxu0
        %v1237 = vadd.f32 0.0, %v1236
        %1238 = vmatprep.mubr.bf16.mxu0 0
        %1239 = vmatmul.mubr.bf16.gmra.mrb[0].mxu0 %v868
        %v1240 = vpop.f32.mrb[0].mxu0
        %v1241 = vadd.f32 0.0, %v1240
        %v1242 = vpop.f32.mrb[0].mxu0
        %v1243 = vadd.f32 0.0, %v1242
        %v1244 = vpop.f32.mrb[0].mxu0
        %v1245 = vadd.f32 0.0, %v1244
        %v1246 = vpop.f32.mrb[0].mxu0
        %v1247 = vadd.f32 0.0, %v1246
        %1248 = vmatprep.mubr.bf16.mxu0 0
        %1249 = vmatmul.mubr.bf16.gmra.mrb[0].mxu0 %v871
        %v1250 = vpop.f32.mrb[0].mxu0
        %v1251 = vadd.f32 0.0, %v1250
        %v1252 = vpop.f32.mrb[0].mxu0
        %v1253 = vadd.f32 0.0, %v1252
        %v1254 = vpop.f32.mrb[0].mxu0
        %v1255 = vadd.f32 0.0, %v1254
        %v1256 = vpop.f32.mrb[0].mxu0
        %v1257 = vadd.f32 0.0, %v1256
        %1258 = vdwg.mxu0
        %1259 = vmatprep.subr.bf16.mxu0 %v789
        %1260 = vmatpush1.bf16.msra.mxu0 %v788
        %1261 = vmatprep.subr.bf16.mxu0 %v799
        %1262 = vmatpush1.bf16.msra.mxu0 %v798
        %1263 = vmatprep.subr.bf16.mxu0 0
        %1264 = vmatpush1.bf16.msra.mxu0 0
        %1265 = vmatprep.subr.bf16.mxu0 0
        %1266 = vmatpush1.bf16.msra.mxu0 0
        %1267 = vmatprep.subr.bf16.mxu0 0
        %1268 = vmatpush1.bf16.msra.mxu0 0
        %1269 = vmatprep.subr.bf16.mxu0 0
        %1270 = vmatpush1.bf16.msra.mxu0 0
        %1271 = vmatprep.subr.bf16.mxu0 0
        %1272 = vmatpush1.bf16.msra.mxu0 0
        %1273 = vmatprep.subr.bf16.mxu0 0
        %1274 = vmatpush1.bf16.msra.mxu0 0
        %1275 = vmatprep.subr.bf16.mxu0 0
        %1276 = vmatpush1.bf16.msra.mxu0 0
        %1277 = vmatprep.subr.bf16.mxu0 0
        %1278 = vmatpush1.bf16.msra.mxu0 0
        %1279 = vmatprep.subr.bf16.mxu0 0
        %1280 = vmatpush1.bf16.msra.mxu0 0
        %1281 = vmatprep.subr.bf16.mxu0 0
        %1282 = vmatpush1.bf16.msra.mxu0 0
        %1283 = vmatprep.subr.bf16.mxu0 0
        %1284 = vmatpush1.bf16.msra.mxu0 0
        %1285 = vmatprep.subr.bf16.mxu0 0
        %1286 = vmatpush1.bf16.msra.mxu0 0
        %1287 = vmatprep.subr.bf16.mxu0 0
        %1288 = vmatpush1.bf16.msra.mxu0 0
        %1289 = vmatprep.subr.bf16.mxu0 0
        %1290 = vmatpush1.bf16.msra.mxu0 0
        %1291 = vmatprep.mubr.bf16.mxu0 0
        %1292 = vmatmul.mubr.bf16.gmra.mrb[0].mxu0 %v826
        %v1293 = vpop.f32.mrb[0].mxu0
        %v1294 = vadd.f32 0.0, %v1293
        %v1295 = vpop.f32.mrb[0].mxu0
        %v1296 = vadd.f32 0.0, %v1295
        %v1297 = vpop.f32.mrb[0].mxu0
        %v1298 = vadd.f32 0.0, %v1297
        %v1299 = vpop.f32.mrb[0].mxu0
        %v1300 = vadd.f32 0.0, %v1299
        %1301 = vmatprep.mubr.bf16.mxu0 0
        %1302 = vmatmul.mubr.bf16.gmra.mrb[0].mxu0 %v829
        %v1303 = vpop.f32.mrb[0].mxu0
        %v1304 = vadd.f32 0.0, %v1303
        %v1305 = vpop.f32.mrb[0].mxu0
        %v1306 = vadd.f32 0.0, %v1305
        %v1307 = vpop.f32.mrb[0].mxu0
        %v1308 = vadd.f32 0.0, %v1307
        %v1309 = vpop.f32.mrb[0].mxu0
        %v1310 = vadd.f32 0.0, %v1309
        %1311 = vmatprep.mubr.bf16.mxu0 0
        %1312 = vmatmul.mubr.bf16.gmra.mrb[0].mxu0 %v832
        %v1313 = vpop.f32.mrb[0].mxu0
        %v1314 = vadd.f32 0.0, %v1313
        %v1315 = vpop.f32.mrb[0].mxu0
        %v1316 = vadd.f32 0.0, %v1315
        %v1317 = vpop.f32.mrb[0].mxu0
        %v1318 = vadd.f32 0.0, %v1317
        %v1319 = vpop.f32.mrb[0].mxu0
        %v1320 = vadd.f32 0.0, %v1319
        %1321 = vmatprep.mubr.bf16.mxu0 0
        %1322 = vmatmul.mubr.bf16.gmra.mrb[0].mxu0 %v835
        %v1323 = vpop.f32.mrb[0].mxu0
        %v1324 = vadd.f32 0.0, %v1323
        %v1325 = vpop.f32.mrb[0].mxu0
        %v1326 = vadd.f32 0.0, %v1325
        %v1327 = vpop.f32.mrb[0].mxu0
        %v1328 = vadd.f32 0.0, %v1327
        %v1329 = vpop.f32.mrb[0].mxu0
        %v1330 = vadd.f32 0.0, %v1329
        %1331 = vmatprep.mubr.bf16.mxu0 0
        %1332 = vmatmul.mubr.bf16.gmra.mrb[0].mxu0 %v838
        %v1333 = vpop.f32.mrb[0].mxu0
        %v1334 = vadd.f32 0.0, %v1333
        %v1335 = vpop.f32.mrb[0].mxu0
        %v1336 = vadd.f32 0.0, %v1335
        %v1337 = vpop.f32.mrb[0].mxu0
        %v1338 = vadd.f32 0.0, %v1337
        %v1339 = vpop.f32.mrb[0].mxu0
        %v1340 = vadd.f32 0.0, %v1339
        %1341 = vmatprep.mubr.bf16.mxu0 0
        %1342 = vmatmul.mubr.bf16.gmra.mrb[0].mxu0 %v841
        %v1343 = vpop.f32.mrb[0].mxu0
        %v1344 = vadd.f32 0.0, %v1343
        %v1345 = vpop.f32.mrb[0].mxu0
        %v1346 = vadd.f32 0.0, %v1345
        %v1347 = vpop.f32.mrb[0].mxu0
        %v1348 = vadd.f32 0.0, %v1347
        %v1349 = vpop.f32.mrb[0].mxu0
        %v1350 = vadd.f32 0.0, %v1349
        %1351 = vmatprep.mubr.bf16.mxu0 0
        %1352 = vmatmul.mubr.bf16.gmra.mrb[0].mxu0 %v844
        %v1353 = vpop.f32.mrb[0].mxu0
        %v1354 = vadd.f32 0.0, %v1353
        %v1355 = vpop.f32.mrb[0].mxu0
        %v1356 = vadd.f32 0.0, %v1355
        %v1357 = vpop.f32.mrb[0].mxu0
        %v1358 = vadd.f32 0.0, %v1357
        %v1359 = vpop.f32.mrb[0].mxu0
        %v1360 = vadd.f32 0.0, %v1359
        %1361 = vmatprep.mubr.bf16.mxu0 0
        %1362 = vmatmul.mubr.bf16.gmra.mrb[0].mxu0 %v847
        %v1363 = vpop.f32.mrb[0].mxu0
        %v1364 = vadd.f32 0.0, %v1363
        %v1365 = vpop.f32.mrb[0].mxu0
        %v1366 = vadd.f32 0.0, %v1365
        %v1367 = vpop.f32.mrb[0].mxu0
        %v1368 = vadd.f32 0.0, %v1367
        %v1369 = vpop.f32.mrb[0].mxu0
        %v1370 = vadd.f32 0.0, %v1369
        %1371 = vmatprep.mubr.bf16.mxu0 0
        %1372 = vmatmul.mubr.bf16.gmra.mrb[0].mxu0 %v850
        %v1373 = vpop.f32.mrb[0].mxu0
        %v1374 = vadd.f32 0.0, %v1373
        %v1375 = vpop.f32.mrb[0].mxu0
        %v1376 = vadd.f32 0.0, %v1375
        %v1377 = vpop.f32.mrb[0].mxu0
        %v1378 = vadd.f32 0.0, %v1377
        %v1379 = vpop.f32.mrb[0].mxu0
        %v1380 = vadd.f32 0.0, %v1379
        %1381 = vmatprep.mubr.bf16.mxu0 0
        %1382 = vmatmul.mubr.bf16.gmra.mrb[0].mxu0 %v853
        %v1383 = vpop.f32.mrb[0].mxu0
        %v1384 = vadd.f32 0.0, %v1383
        %v1385 = vpop.f32.mrb[0].mxu0
        %v1386 = vadd.f32 0.0, %v1385
        %v1387 = vpop.f32.mrb[0].mxu0
        %v1388 = vadd.f32 0.0, %v1387
        %v1389 = vpop.f32.mrb[0].mxu0
        %v1390 = vadd.f32 0.0, %v1389
        %1391 = vmatprep.mubr.bf16.mxu0 0
        %1392 = vmatmul.mubr.bf16.gmra.mrb[0].mxu0 %v856
        %v1393 = vpop.f32.mrb[0].mxu0
        %v1394 = vadd.f32 0.0, %v1393
        %v1395 = vpop.f32.mrb[0].mxu0
        %v1396 = vadd.f32 0.0, %v1395
        %v1397 = vpop.f32.mrb[0].mxu0
        %v1398 = vadd.f32 0.0, %v1397
        %v1399 = vpop.f32.mrb[0].mxu0
        %v1400 = vadd.f32 0.0, %v1399
        %1401 = vmatprep.mubr.bf16.mxu0 0
        %1402 = vmatmul.mubr.bf16.gmra.mrb[0].mxu0 %v859
        %v1403 = vpop.f32.mrb[0].mxu0
        %v1404 = vadd.f32 0.0, %v1403
        %v1405 = vpop.f32.mrb[0].mxu0
        %v1406 = vadd.f32 0.0, %v1405
        %v1407 = vpop.f32.mrb[0].mxu0
        %v1408 = vadd.f32 0.0, %v1407
        %v1409 = vpop.f32.mrb[0].mxu0
        %v1410 = vadd.f32 0.0, %v1409
        %1411 = vmatprep.mubr.bf16.mxu0 0
        %1412 = vmatmul.mubr.bf16.gmra.mrb[0].mxu0 %v862
        %v1413 = vpop.f32.mrb[0].mxu0
        %v1414 = vadd.f32 0.0, %v1413
        %v1415 = vpop.f32.mrb[0].mxu0
        %v1416 = vadd.f32 0.0, %v1415
        %v1417 = vpop.f32.mrb[0].mxu0
        %v1418 = vadd.f32 0.0, %v1417
        %v1419 = vpop.f32.mrb[0].mxu0
        %v1420 = vadd.f32 0.0, %v1419
        %1421 = vmatprep.mubr.bf16.mxu0 0
        %1422 = vmatmul.mubr.bf16.gmra.mrb[0].mxu0 %v865
        %v1423 = vpop.f32.mrb[0].mxu0
        %v1424 = vadd.f32 0.0, %v1423
        %v1425 = vpop.f32.mrb[0].mxu0
        %v1426 = vadd.f32 0.0, %v1425
        %v1427 = vpop.f32.mrb[0].mxu0
        %v1428 = vadd.f32 0.0, %v1427
        %v1429 = vpop.f32.mrb[0].mxu0
        %v1430 = vadd.f32 0.0, %v1429
        %1431 = vmatprep.mubr.bf16.mxu0 0
        %1432 = vmatmul.mubr.bf16.gmra.mrb[0].mxu0 %v868
        %v1433 = vpop.f32.mrb[0].mxu0
        %v1434 = vadd.f32 0.0, %v1433
        %v1435 = vpop.f32.mrb[0].mxu0
        %v1436 = vadd.f32 0.0, %v1435
        %v1437 = vpop.f32.mrb[0].mxu0
        %v1438 = vadd.f32 0.0, %v1437
        %v1439 = vpop.f32.mrb[0].mxu0
        %v1440 = vadd.f32 0.0, %v1439
        %1441 = vmatprep.mubr.bf16.mxu0 0
        %1442 = vmatmul.mubr.bf16.gmra.mrb[0].mxu0 %v871
        %v1443 = vpop.f32.mrb[0].mxu0
        %v1444 = vadd.f32 0.0, %v1443
        %v1445 = vpop.f32.mrb[0].mxu0
        %v1446 = vadd.f32 0.0, %v1445
        %v1447 = vpop.f32.mrb[0].mxu0
        %v1448 = vadd.f32 0.0, %v1447
        %v1449 = vpop.f32.mrb[0].mxu0
        %v1450 = vadd.f32 0.0, %v1449
        %1451 = vdwg.mxu0
        %1452 = vmatprep.subr.bf16.mxu0 %v791
        %1453 = vmatpush1.bf16.msra.mxu0 %v790
        %1454 = vmatprep.subr.bf16.mxu0 %v801
        %1455 = vmatpush1.bf16.msra.mxu0 %v800
        %1456 = vmatprep.subr.bf16.mxu0 0
        %1457 = vmatpush1.bf16.msra.mxu0 0
        %1458 = vmatprep.subr.bf16.mxu0 0
        %1459 = vmatpush1.bf16.msra.mxu0 0
        %1460 = vmatprep.subr.bf16.mxu0 0
        %1461 = vmatpush1.bf16.msra.mxu0 0
        %1462 = vmatprep.subr.bf16.mxu0 0
        %1463 = vmatpush1.bf16.msra.mxu0 0
        %1464 = vmatprep.subr.bf16.mxu0 0
        %1465 = vmatpush1.bf16.msra.mxu0 0
        %1466 = vmatprep.subr.bf16.mxu0 0
        %1467 = vmatpush1.bf16.msra.mxu0 0
        %1468 = vmatprep.subr.bf16.mxu0 0
        %1469 = vmatpush1.bf16.msra.mxu0 0
        %1470 = vmatprep.subr.bf16.mxu0 0
        %1471 = vmatpush1.bf16.msra.mxu0 0
        %1472 = vmatprep.subr.bf16.mxu0 0
        %1473 = vmatpush1.bf16.msra.mxu0 0
        %1474 = vmatprep.subr.bf16.mxu0 0
        %1475 = vmatpush1.bf16.msra.mxu0 0
        %1476 = vmatprep.subr.bf16.mxu0 0
        %1477 = vmatpush1.bf16.msra.mxu0 0
        %1478 = vmatprep.subr.bf16.mxu0 0
        %1479 = vmatpush1.bf16.msra.mxu0 0
        %1480 = vmatprep.subr.bf16.mxu0 0
        %1481 = vmatpush1.bf16.msra.mxu0 0
        %1482 = vmatprep.subr.bf16.mxu0 0
        %1483 = vmatpush1.bf16.msra.mxu0 0
        %1484 = vmatprep.mubr.bf16.mxu0 0
        %1485 = vmatmul.mubr.bf16.gmra.mrb[0].mxu0 %v826
        %v1486 = vpop.f32.mrb[0].mxu0
        %v1487 = vadd.f32 0.0, %v1486
        %v1488 = vpop.f32.mrb[0].mxu0
        %v1489 = vadd.f32 0.0, %v1488
        %v1490 = vpop.f32.mrb[0].mxu0
        %v1491 = vadd.f32 0.0, %v1490
        %v1492 = vpop.f32.mrb[0].mxu0
        %v1493 = vadd.f32 0.0, %v1492
        %1494 = vmatprep.mubr.bf16.mxu0 0
        %1495 = vmatmul.mubr.bf16.gmra.mrb[0].mxu0 %v829
        %v1496 = vpop.f32.mrb[0].mxu0
        %v1497 = vadd.f32 0.0, %v1496
        %v1498 = vpop.f32.mrb[0].mxu0
        %v1499 = vadd.f32 0.0, %v1498
        %v1500 = vpop.f32.mrb[0].mxu0
        %v1501 = vadd.f32 0.0, %v1500
        %v1502 = vpop.f32.mrb[0].mxu0
        %v1503 = vadd.f32 0.0, %v1502
        %1504 = vmatprep.mubr.bf16.mxu0 0
        %1505 = vmatmul.mubr.bf16.gmra.mrb[0].mxu0 %v832
        %v1506 = vpop.f32.mrb[0].mxu0
        %v1507 = vadd.f32 0.0, %v1506
        %v1508 = vpop.f32.mrb[0].mxu0
        %v1509 = vadd.f32 0.0, %v1508
        %v1510 = vpop.f32.mrb[0].mxu0
        %v1511 = vadd.f32 0.0, %v1510
        %v1512 = vpop.f32.mrb[0].mxu0
        %v1513 = vadd.f32 0.0, %v1512
        %1514 = vmatprep.mubr.bf16.mxu0 0
        %1515 = vmatmul.mubr.bf16.gmra.mrb[0].mxu0 %v835
        %v1516 = vpop.f32.mrb[0].mxu0
        %v1517 = vadd.f32 0.0, %v1516
        %v1518 = vpop.f32.mrb[0].mxu0
        %v1519 = vadd.f32 0.0, %v1518
        %v1520 = vpop.f32.mrb[0].mxu0
        %v1521 = vadd.f32 0.0, %v1520
        %v1522 = vpop.f32.mrb[0].mxu0
        %v1523 = vadd.f32 0.0, %v1522
        %1524 = vmatprep.mubr.bf16.mxu0 0
        %1525 = vmatmul.mubr.bf16.gmra.mrb[0].mxu0 %v838
        %v1526 = vpop.f32.mrb[0].mxu0
        %v1527 = vadd.f32 0.0, %v1526
        %v1528 = vpop.f32.mrb[0].mxu0
        %v1529 = vadd.f32 0.0, %v1528
        %v1530 = vpop.f32.mrb[0].mxu0
        %v1531 = vadd.f32 0.0, %v1530
        %v1532 = vpop.f32.mrb[0].mxu0
        %v1533 = vadd.f32 0.0, %v1532
        %1534 = vmatprep.mubr.bf16.mxu0 0
        %1535 = vmatmul.mubr.bf16.gmra.mrb[0].mxu0 %v841
        %v1536 = vpop.f32.mrb[0].mxu0
        %v1537 = vadd.f32 0.0, %v1536
        %v1538 = vpop.f32.mrb[0].mxu0
        %v1539 = vadd.f32 0.0, %v1538
        %v1540 = vpop.f32.mrb[0].mxu0
        %v1541 = vadd.f32 0.0, %v1540
        %v1542 = vpop.f32.mrb[0].mxu0
        %v1543 = vadd.f32 0.0, %v1542
        %1544 = vmatprep.mubr.bf16.mxu0 0
        %1545 = vmatmul.mubr.bf16.gmra.mrb[0].mxu0 %v844
        %v1546 = vpop.f32.mrb[0].mxu0
        %v1547 = vadd.f32 0.0, %v1546
        %v1548 = vpop.f32.mrb[0].mxu0
        %v1549 = vadd.f32 0.0, %v1548
        %v1550 = vpop.f32.mrb[0].mxu0
        %v1551 = vadd.f32 0.0, %v1550
        %v1552 = vpop.f32.mrb[0].mxu0
        %v1553 = vadd.f32 0.0, %v1552
        %1554 = vmatprep.mubr.bf16.mxu0 0
        %1555 = vmatmul.mubr.bf16.gmra.mrb[0].mxu0 %v847
        %v1556 = vpop.f32.mrb[0].mxu0
        %v1557 = vadd.f32 0.0, %v1556
        %v1558 = vpop.f32.mrb[0].mxu0
        %v1559 = vadd.f32 0.0, %v1558
        %v1560 = vpop.f32.mrb[0].mxu0
        %v1561 = vadd.f32 0.0, %v1560
        %v1562 = vpop.f32.mrb[0].mxu0
        %v1563 = vadd.f32 0.0, %v1562
        %1564 = vmatprep.mubr.bf16.mxu0 0
        %1565 = vmatmul.mubr.bf16.gmra.mrb[0].mxu0 %v850
        %v1566 = vpop.f32.mrb[0].mxu0
        %v1567 = vadd.f32 0.0, %v1566
        %v1568 = vpop.f32.mrb[0].mxu0
        %v1569 = vadd.f32 0.0, %v1568
        %v1570 = vpop.f32.mrb[0].mxu0
        %v1571 = vadd.f32 0.0, %v1570
        %v1572 = vpop.f32.mrb[0].mxu0
        %v1573 = vadd.f32 0.0, %v1572
        %1574 = vmatprep.mubr.bf16.mxu0 0
        %1575 = vmatmul.mubr.bf16.gmra.mrb[0].mxu0 %v853
        %v1576 = vpop.f32.mrb[0].mxu0
        %v1577 = vadd.f32 0.0, %v1576
        %v1578 = vpop.f32.mrb[0].mxu0
        %v1579 = vadd.f32 0.0, %v1578
        %v1580 = vpop.f32.mrb[0].mxu0
        %v1581 = vadd.f32 0.0, %v1580
        %v1582 = vpop.f32.mrb[0].mxu0
        %v1583 = vadd.f32 0.0, %v1582
        %1584 = vmatprep.mubr.bf16.mxu0 0
        %1585 = vmatmul.mubr.bf16.gmra.mrb[0].mxu0 %v856
        %v1586 = vpop.f32.mrb[0].mxu0
        %v1587 = vadd.f32 0.0, %v1586
        %v1588 = vpop.f32.mrb[0].mxu0
        %v1589 = vadd.f32 0.0, %v1588
        %v1590 = vpop.f32.mrb[0].mxu0
        %v1591 = vadd.f32 0.0, %v1590
        %v1592 = vpop.f32.mrb[0].mxu0
        %v1593 = vadd.f32 0.0, %v1592
        %1594 = vmatprep.mubr.bf16.mxu0 0
        %1595 = vmatmul.mubr.bf16.gmra.mrb[0].mxu0 %v859
        %v1596 = vpop.f32.mrb[0].mxu0
        %v1597 = vadd.f32 0.0, %v1596
        %v1598 = vpop.f32.mrb[0].mxu0
        %v1599 = vadd.f32 0.0, %v1598
        %v1600 = vpop.f32.mrb[0].mxu0
        %v1601 = vadd.f32 0.0, %v1600
        %v1602 = vpop.f32.mrb[0].mxu0
        %v1603 = vadd.f32 0.0, %v1602
        %1604 = vmatprep.mubr.bf16.mxu0 0
        %1605 = vmatmul.mubr.bf16.gmra.mrb[0].mxu0 %v862
        %v1606 = vpop.f32.mrb[0].mxu0
        %v1607 = vadd.f32 0.0, %v1606
        %v1608 = vpop.f32.mrb[0].mxu0
        %v1609 = vadd.f32 0.0, %v1608
        %v1610 = vpop.f32.mrb[0].mxu0
        %v1611 = vadd.f32 0.0, %v1610
        %v1612 = vpop.f32.mrb[0].mxu0
        %v1613 = vadd.f32 0.0, %v1612
        %1614 = vmatprep.mubr.bf16.mxu0 0
        %1615 = vmatmul.mubr.bf16.gmra.mrb[0].mxu0 %v865
        %v1616 = vpop.f32.mrb[0].mxu0
        %v1617 = vadd.f32 0.0, %v1616
        %v1618 = vpop.f32.mrb[0].mxu0
        %v1619 = vadd.f32 0.0, %v1618
        %v1620 = vpop.f32.mrb[0].mxu0
        %v1621 = vadd.f32 0.0, %v1620
        %v1622 = vpop.f32.mrb[0].mxu0
        %v1623 = vadd.f32 0.0, %v1622
        %1624 = vmatprep.mubr.bf16.mxu0 0
        %1625 = vmatmul.mubr.bf16.gmra.mrb[0].mxu0 %v868
        %v1626 = vpop.f32.mrb[0].mxu0
        %v1627 = vadd.f32 0.0, %v1626
        %v1628 = vpop.f32.mrb[0].mxu0
        %v1629 = vadd.f32 0.0, %v1628
        %v1630 = vpop.f32.mrb[0].mxu0
        %v1631 = vadd.f32 0.0, %v1630
        %v1632 = vpop.f32.mrb[0].mxu0
        %v1633 = vadd.f32 0.0, %v1632
        %1634 = vmatprep.mubr.bf16.mxu0 0
        %1635 = vmatmul.mubr.bf16.gmra.mrb[0].mxu0 %v871
        %v1636 = vpop.f32.mrb[0].mxu0
        %v1637 = vadd.f32 0.0, %v1636
        %v1638 = vpop.f32.mrb[0].mxu0
        %v1639 = vadd.f32 0.0, %v1638
        %v1640 = vpop.f32.mrb[0].mxu0
        %v1641 = vadd.f32 0.0, %v1640
        %v1642 = vpop.f32.mrb[0].mxu0
        %v1643 = vadd.f32 0.0, %v1642
        %1644 = vdwg.mxu0
        %1645 = vmatprep.subr.bf16.mxu0 %v793
        %1646 = vmatpush1.bf16.msra.mxu0 %v792
        %1647 = vmatprep.subr.bf16.mxu0 %v803
        %1648 = vmatpush1.bf16.msra.mxu0 %v802
        %1649 = vmatprep.subr.bf16.mxu0 0
        %1650 = vmatpush1.bf16.msra.mxu0 0
        %1651 = vmatprep.subr.bf16.mxu0 0
        %1652 = vmatpush1.bf16.msra.mxu0 0
        %1653 = vmatprep.subr.bf16.mxu0 0
        %1654 = vmatpush1.bf16.msra.mxu0 0
        %1655 = vmatprep.subr.bf16.mxu0 0
        %1656 = vmatpush1.bf16.msra.mxu0 0
        %1657 = vmatprep.subr.bf16.mxu0 0
        %1658 = vmatpush1.bf16.msra.mxu0 0
        %1659 = vmatprep.subr.bf16.mxu0 0
        %1660 = vmatpush1.bf16.msra.mxu0 0
        %1661 = vmatprep.subr.bf16.mxu0 0
        %1662 = vmatpush1.bf16.msra.mxu0 0
        %1663 = vmatprep.subr.bf16.mxu0 0
        %1664 = vmatpush1.bf16.msra.mxu0 0
        %1665 = vmatprep.subr.bf16.mxu0 0
        %1666 = vmatpush1.bf16.msra.mxu0 0
        %1667 = vmatprep.subr.bf16.mxu0 0
        %1668 = vmatpush1.bf16.msra.mxu0 0
        %1669 = vmatprep.subr.bf16.mxu0 0
        %1670 = vmatpush1.bf16.msra.mxu0 0
        %1671 = vmatprep.subr.bf16.mxu0 0
        %1672 = vmatpush1.bf16.msra.mxu0 0
        %1673 = vmatprep.subr.bf16.mxu0 0
        %1674 = vmatpush1.bf16.msra.mxu0 0
        %1675 = vmatprep.subr.bf16.mxu0 0
        %1676 = vmatpush1.bf16.msra.mxu0 0
        %1677 = vmatprep.mubr.bf16.mxu0 0
        %1678 = vmatmul.mubr.bf16.gmra.mrb[0].mxu0 %v826
        %v1679 = vpop.f32.mrb[0].mxu0
        %v1680 = vadd.f32 0.0, %v1679
        %v1681 = vpop.f32.mrb[0].mxu0
        %v1682 = vadd.f32 0.0, %v1681
        %v1683 = vpop.f32.mrb[0].mxu0
        %v1684 = vadd.f32 0.0, %v1683
        %v1685 = vpop.f32.mrb[0].mxu0
        %v1686 = vadd.f32 0.0, %v1685
        %1687 = vmatprep.mubr.bf16.mxu0 0
        %1688 = vmatmul.mubr.bf16.gmra.mrb[0].mxu0 %v829
        %v1689 = vpop.f32.mrb[0].mxu0
        %v1690 = vadd.f32 0.0, %v1689
        %v1691 = vpop.f32.mrb[0].mxu0
        %v1692 = vadd.f32 0.0, %v1691
        %v1693 = vpop.f32.mrb[0].mxu0
        %v1694 = vadd.f32 0.0, %v1693
        %v1695 = vpop.f32.mrb[0].mxu0
        %v1696 = vadd.f32 0.0, %v1695
        %1697 = vmatprep.mubr.bf16.mxu0 0
        %1698 = vmatmul.mubr.bf16.gmra.mrb[0].mxu0 %v832
        %v1699 = vpop.f32.mrb[0].mxu0
        %v1700 = vadd.f32 0.0, %v1699
        %v1701 = vpop.f32.mrb[0].mxu0
        %v1702 = vadd.f32 0.0, %v1701
        %v1703 = vpop.f32.mrb[0].mxu0
        %v1704 = vadd.f32 0.0, %v1703
        %v1705 = vpop.f32.mrb[0].mxu0
        %v1706 = vadd.f32 0.0, %v1705
        %1707 = vmatprep.mubr.bf16.mxu0 0
        %1708 = vmatmul.mubr.bf16.gmra.mrb[0].mxu0 %v835
        %v1709 = vpop.f32.mrb[0].mxu0
        %v1710 = vadd.f32 0.0, %v1709
        %v1711 = vpop.f32.mrb[0].mxu0
        %v1712 = vadd.f32 0.0, %v1711
        %v1713 = vpop.f32.mrb[0].mxu0
        %v1714 = vadd.f32 0.0, %v1713
        %v1715 = vpop.f32.mrb[0].mxu0
        %v1716 = vadd.f32 0.0, %v1715
        %1717 = vmatprep.mubr.bf16.mxu0 0
        %1718 = vmatmul.mubr.bf16.gmra.mrb[0].mxu0 %v838
        %v1719 = vpop.f32.mrb[0].mxu0
        %v1720 = vadd.f32 0.0, %v1719
        %v1721 = vpop.f32.mrb[0].mxu0
        %v1722 = vadd.f32 0.0, %v1721
        %v1723 = vpop.f32.mrb[0].mxu0
        %v1724 = vadd.f32 0.0, %v1723
        %v1725 = vpop.f32.mrb[0].mxu0
        %v1726 = vadd.f32 0.0, %v1725
        %1727 = vmatprep.mubr.bf16.mxu0 0
        %1728 = vmatmul.mubr.bf16.gmra.mrb[0].mxu0 %v841
        %v1729 = vpop.f32.mrb[0].mxu0
        %v1730 = vadd.f32 0.0, %v1729
        %v1731 = vpop.f32.mrb[0].mxu0
        %v1732 = vadd.f32 0.0, %v1731
        %v1733 = vpop.f32.mrb[0].mxu0
        %v1734 = vadd.f32 0.0, %v1733
        %v1735 = vpop.f32.mrb[0].mxu0
        %v1736 = vadd.f32 0.0, %v1735
        %1737 = vmatprep.mubr.bf16.mxu0 0
        %1738 = vmatmul.mubr.bf16.gmra.mrb[0].mxu0 %v844
        %v1739 = vpop.f32.mrb[0].mxu0
        %v1740 = vadd.f32 0.0, %v1739
        %v1741 = vpop.f32.mrb[0].mxu0
        %v1742 = vadd.f32 0.0, %v1741
        %v1743 = vpop.f32.mrb[0].mxu0
        %v1744 = vadd.f32 0.0, %v1743
        %v1745 = vpop.f32.mrb[0].mxu0
        %v1746 = vadd.f32 0.0, %v1745
        %1747 = vmatprep.mubr.bf16.mxu0 0
        %1748 = vmatmul.mubr.bf16.gmra.mrb[0].mxu0 %v847
        %v1749 = vpop.f32.mrb[0].mxu0
        %v1750 = vadd.f32 0.0, %v1749
        %v1751 = vpop.f32.mrb[0].mxu0
        %v1752 = vadd.f32 0.0, %v1751
        %v1753 = vpop.f32.mrb[0].mxu0
        %v1754 = vadd.f32 0.0, %v1753
        %v1755 = vpop.f32.mrb[0].mxu0
        %v1756 = vadd.f32 0.0, %v1755
        %1757 = vmatprep.mubr.bf16.mxu0 0
        %1758 = vmatmul.mubr.bf16.gmra.mrb[0].mxu0 %v850
        %v1759 = vpop.f32.mrb[0].mxu0
        %v1760 = vadd.f32 0.0, %v1759
        %v1761 = vpop.f32.mrb[0].mxu0
        %v1762 = vadd.f32 0.0, %v1761
        %v1763 = vpop.f32.mrb[0].mxu0
        %v1764 = vadd.f32 0.0, %v1763
        %v1765 = vpop.f32.mrb[0].mxu0
        %v1766 = vadd.f32 0.0, %v1765
        %1767 = vmatprep.mubr.bf16.mxu0 0
        %1768 = vmatmul.mubr.bf16.gmra.mrb[0].mxu0 %v853
        %v1769 = vpop.f32.mrb[0].mxu0
        %v1770 = vadd.f32 0.0, %v1769
        %v1771 = vpop.f32.mrb[0].mxu0
        %v1772 = vadd.f32 0.0, %v1771
        %v1773 = vpop.f32.mrb[0].mxu0
        %v1774 = vadd.f32 0.0, %v1773
        %v1775 = vpop.f32.mrb[0].mxu0
        %v1776 = vadd.f32 0.0, %v1775
        %1777 = vmatprep.mubr.bf16.mxu0 0
        %1778 = vmatmul.mubr.bf16.gmra.mrb[0].mxu0 %v856
        %v1779 = vpop.f32.mrb[0].mxu0
        %v1780 = vadd.f32 0.0, %v1779
        %v1781 = vpop.f32.mrb[0].mxu0
        %v1782 = vadd.f32 0.0, %v1781
        %v1783 = vpop.f32.mrb[0].mxu0
        %v1784 = vadd.f32 0.0, %v1783
        %v1785 = vpop.f32.mrb[0].mxu0
        %v1786 = vadd.f32 0.0, %v1785
        %1787 = vmatprep.mubr.bf16.mxu0 0
        %1788 = vmatmul.mubr.bf16.gmra.mrb[0].mxu0 %v859
        %v1789 = vpop.f32.mrb[0].mxu0
        %v1790 = vadd.f32 0.0, %v1789
        %v1791 = vpop.f32.mrb[0].mxu0
        %v1792 = vadd.f32 0.0, %v1791
        %v1793 = vpop.f32.mrb[0].mxu0
        %v1794 = vadd.f32 0.0, %v1793
        %v1795 = vpop.f32.mrb[0].mxu0
        %v1796 = vadd.f32 0.0, %v1795
        %1797 = vmatprep.mubr.bf16.mxu0 0
        %1798 = vmatmul.mubr.bf16.gmra.mrb[0].mxu0 %v862
        %v1799 = vpop.f32.mrb[0].mxu0
        %v1800 = vadd.f32 0.0, %v1799
        %v1801 = vpop.f32.mrb[0].mxu0
        %v1802 = vadd.f32 0.0, %v1801
        %v1803 = vpop.f32.mrb[0].mxu0
        %v1804 = vadd.f32 0.0, %v1803
        %v1805 = vpop.f32.mrb[0].mxu0
        %v1806 = vadd.f32 0.0, %v1805
        %1807 = vmatprep.mubr.bf16.mxu0 0
        %1808 = vmatmul.mubr.bf16.gmra.mrb[0].mxu0 %v865
        %v1809 = vpop.f32.mrb[0].mxu0
        %v1810 = vadd.f32 0.0, %v1809
        %v1811 = vpop.f32.mrb[0].mxu0
        %v1812 = vadd.f32 0.0, %v1811
        %v1813 = vpop.f32.mrb[0].mxu0
        %v1814 = vadd.f32 0.0, %v1813
        %v1815 = vpop.f32.mrb[0].mxu0
        %v1816 = vadd.f32 0.0, %v1815
        %1817 = vmatprep.mubr.bf16.mxu0 0
        %1818 = vmatmul.mubr.bf16.gmra.mrb[0].mxu0 %v868
        %v1819 = vpop.f32.mrb[0].mxu0
        %v1820 = vadd.f32 0.0, %v1819
        %v1821 = vpop.f32.mrb[0].mxu0
        %v1822 = vadd.f32 0.0, %v1821
        %v1823 = vpop.f32.mrb[0].mxu0
        %v1824 = vadd.f32 0.0, %v1823
        %v1825 = vpop.f32.mrb[0].mxu0
        %v1826 = vadd.f32 0.0, %v1825
        %1827 = vmatprep.mubr.bf16.mxu0 0
        %1828 = vmatmul.mubr.bf16.gmra.mrb[0].mxu0 %v871
        %v1829 = vpop.f32.mrb[0].mxu0
        %v1830 = vadd.f32 0.0, %v1829
        %v1831 = vpop.f32.mrb[0].mxu0
        %v1832 = vadd.f32 0.0, %v1831
        %v1833 = vpop.f32.mrb[0].mxu0
        %v1834 = vadd.f32 0.0, %v1833
        %v1835 = vpop.f32.mrb[0].mxu0
        %v1836 = vadd.f32 0.0, %v1835
        %1837 = vdwg.mxu0
        %vm1902 = vcmask 1046528
        %v1903 = vrot.slane %v1101, 1
        %v1904 = vrot.slane %v1105, 1
        %v1905 = vsel %vm1902, %v1903, %v1904
        %v1906 = vrot.slane %v1103, 1
        %v1907 = vrot.slane %v1107, 1
        %v1908 = vsel %vm1902, %v1906, %v1907
        %v1909 = vrot.slane %v1111, 1
        %v1910 = vsel %vm1902, %v1904, %v1909
        %v1911 = vrot.slane %v1113, 1
        %v1912 = vsel %vm1902, %v1907, %v1911
        %v1913 = vrot.slane %v1115, 1
        %v1914 = vsel %vm1902, %v1909, %v1913
        %v1915 = vrot.slane %v1117, 1
        %v1916 = vsel %vm1902, %v1911, %v1915
        %v1917 = vrot.slane %v1121, 1
        %v1918 = vsel %vm1902, %v1913, %v1917
        %v1919 = vrot.slane %v1123, 1
        %v1920 = vsel %vm1902, %v1915, %v1919
        %v1921 = vrot.slane %v1125, 1
        %v1922 = vsel %vm1902, %v1917, %v1921
        %v1923 = vrot.slane %v1127, 1
        %v1924 = vsel %vm1902, %v1919, %v1923
        %v1925 = vrot.slane %v1131, 1
        %v1926 = vsel %vm1902, %v1921, %v1925
        %v1927 = vrot.slane %v1133, 1
        %v1928 = vsel %vm1902, %v1923, %v1927
        %v1929 = vrot.slane %v1135, 1
        %v1930 = vsel %vm1902, %v1925, %v1929
        %v1931 = vrot.slane %v1137, 1
        %v1932 = vsel %vm1902, %v1927, %v1931
        %v1933 = vrot.slane %v1141, 1
        %v1934 = vsel %vm1902, %v1929, %v1933
        %v1935 = vrot.slane %v1143, 1
        %v1936 = vsel %vm1902, %v1931, %v1935
        %v1937 = vrot.slane %v1145, 1
        %v1938 = vsel %vm1902, %v1933, %v1937
        %v1939 = vrot.slane %v1147, 1
        %v1940 = vsel %vm1902, %v1935, %v1939
        %v1941 = vrot.slane %v1151, 1
        %v1942 = vsel %vm1902, %v1937, %v1941
        %v1943 = vrot.slane %v1153, 1
        %v1944 = vsel %vm1902, %v1939, %v1943
        %v1945 = vrot.slane %v1155, 1
        %v1946 = vsel %vm1902, %v1941, %v1945
        %v1947 = vrot.slane %v1157, 1
        %v1948 = vsel %vm1902, %v1943, %v1947
        %v1949 = vrot.slane %v1161, 1
        %v1950 = vsel %vm1902, %v1945, %v1949
        %v1951 = vrot.slane %v1163, 1
        %v1952 = vsel %vm1902, %v1947, %v1951
        %v1953 = vrot.slane %v1165, 1
        %v1954 = vsel %vm1902, %v1949, %v1953
        %v1955 = vrot.slane %v1167, 1
        %v1956 = vsel %vm1902, %v1951, %v1955
        %v1957 = vrot.slane %v1171, 1
        %v1958 = vsel %vm1902, %v1953, %v1957
        %v1959 = vrot.slane %v1173, 1
        %v1960 = vsel %vm1902, %v1955, %v1959
        %v1961 = vrot.slane %v1175, 1
        %v1962 = vsel %vm1902, %v1957, %v1961
        %v1963 = vrot.slane %v1177, 1
        %v1964 = vsel %vm1902, %v1959, %v1963
        %v1965 = vrot.slane %v1181, 1
        %v1966 = vsel %vm1902, %v1961, %v1965
        %v1967 = vrot.slane %v1183, 1
        %v1968 = vsel %vm1902, %v1963, %v1967
        %v1969 = vrot.slane %v1185, 1
        %v1970 = vsel %vm1902, %v1965, %v1969
        %v1971 = vrot.slane %v1187, 1
        %v1972 = vsel %vm1902, %v1967, %v1971
        %v1973 = vrot.slane %v1191, 1
        %v1974 = vsel %vm1902, %v1969, %v1973
        %v1975 = vrot.slane %v1193, 1
        %v1976 = vsel %vm1902, %v1971, %v1975
        %v1977 = vrot.slane %v1195, 1
        %v1978 = vsel %vm1902, %v1973, %v1977
        %v1979 = vrot.slane %v1197, 1
        %v1980 = vsel %vm1902, %v1975, %v1979
        %v1981 = vrot.slane %v1201, 1
        %v1982 = vsel %vm1902, %v1977, %v1981
        %v1983 = vrot.slane %v1203, 1
        %v1984 = vsel %vm1902, %v1979, %v1983
        %v1985 = vrot.slane %v1205, 1
        %v1986 = vsel %vm1902, %v1981, %v1985
        %v1987 = vrot.slane %v1207, 1
        %v1988 = vsel %vm1902, %v1983, %v1987
        %v1989 = vrot.slane %v1211, 1
        %v1990 = vsel %vm1902, %v1985, %v1989
        %v1991 = vrot.slane %v1213, 1
        %v1992 = vsel %vm1902, %v1987, %v1991
        %v1993 = vrot.slane %v1215, 1
        %v1994 = vsel %vm1902, %v1989, %v1993
        %v1995 = vrot.slane %v1217, 1
        %v1996 = vsel %vm1902, %v1991, %v1995
        %v1997 = vrot.slane %v1221, 1
        %v1998 = vsel %vm1902, %v1993, %v1997
        %v1999 = vrot.slane %v1223, 1
        %v2000 = vsel %vm1902, %v1995, %v1999
        %v2001 = vrot.slane %v1225, 1
        %v2002 = vsel %vm1902, %v1997, %v2001
        %v2003 = vrot.slane %v1227, 1
        %v2004 = vsel %vm1902, %v1999, %v2003
        %v2005 = vrot.slane %v1231, 1
        %v2006 = vsel %vm1902, %v2001, %v2005
        %v2007 = vrot.slane %v1233, 1
        %v2008 = vsel %vm1902, %v2003, %v2007
        %v2009 = vrot.slane %v1235, 1
        %v2010 = vsel %vm1902, %v2005, %v2009
        %v2011 = vrot.slane %v1237, 1
        %v2012 = vsel %vm1902, %v2007, %v2011
        %v2013 = vrot.slane %v1241, 1
        %v2014 = vsel %vm1902, %v2009, %v2013
        %v2015 = vrot.slane %v1243, 1
        %v2016 = vsel %vm1902, %v2011, %v2015
        %v2017 = vrot.slane %v1245, 1
        %v2018 = vsel %vm1902, %v2013, %v2017
        %v2019 = vrot.slane %v1247, 1
        %v2020 = vsel %vm1902, %v2015, %v2019
        %v2021 = vrot.slane %v1251, 1
        %v2022 = vsel %vm1902, %v2017, %v2021
        %v2023 = vrot.slane %v1253, 1
        %v2024 = vsel %vm1902, %v2019, %v2023
        %v2025 = vrot.slane %v1255, 1
        %v2026 = vsel %vm1902, %v2021, %v2025
        %v2027 = vrot.slane %v1257, 1
        %v2028 = vsel %vm1902, %v2023, %v2027
        %v2093 = vadd.f32 %v908, %v1905
        %v2094 = vadd.f32 %v910, %v1908
        %v2095 = vadd.f32 %v912, %v1910
        %v2096 = vadd.f32 %v914, %v1912
        %v2097 = vadd.f32 %v918, %v1914
        %v2098 = vadd.f32 %v920, %v1916
        %v2099 = vadd.f32 %v922, %v1918
        %v2100 = vadd.f32 %v924, %v1920
        %v2101 = vadd.f32 %v928, %v1922
        %v2102 = vadd.f32 %v930, %v1924
        %v2103 = vadd.f32 %v932, %v1926
        %v2104 = vadd.f32 %v934, %v1928
        %v2105 = vadd.f32 %v938, %v1930
        %v2106 = vadd.f32 %v940, %v1932
        %v2107 = vadd.f32 %v942, %v1934
        %v2108 = vadd.f32 %v944, %v1936
        %v2109 = vadd.f32 %v948, %v1938
        %v2110 = vadd.f32 %v950, %v1940
        %v2111 = vadd.f32 %v952, %v1942
        %v2112 = vadd.f32 %v954, %v1944
        %v2113 = vadd.f32 %v958, %v1946
        %v2114 = vadd.f32 %v960, %v1948
        %v2115 = vadd.f32 %v962, %v1950
        %v2116 = vadd.f32 %v964, %v1952
        %v2117 = vadd.f32 %v968, %v1954
        %v2118 = vadd.f32 %v970, %v1956
        %v2119 = vadd.f32 %v972, %v1958
        %v2120 = vadd.f32 %v974, %v1960
        %v2121 = vadd.f32 %v978, %v1962
        %v2122 = vadd.f32 %v980, %v1964
        %v2123 = vadd.f32 %v982, %v1966
        %v2124 = vadd.f32 %v984, %v1968
        %v2125 = vadd.f32 %v988, %v1970
        %v2126 = vadd.f32 %v990, %v1972
        %v2127 = vadd.f32 %v992, %v1974
        %v2128 = vadd.f32 %v994, %v1976
        %v2129 = vadd.f32 %v998, %v1978
        %v2130 = vadd.f32 %v1000, %v1980
        %v2131 = vadd.f32 %v1002, %v1982
        %v2132 = vadd.f32 %v1004, %v1984
        %v2133 = vadd.f32 %v1008, %v1986
        %v2134 = vadd.f32 %v1010, %v1988
        %v2135 = vadd.f32 %v1012, %v1990
        %v2136 = vadd.f32 %v1014, %v1992
        %v2137 = vadd.f32 %v1018, %v1994
        %v2138 = vadd.f32 %v1020, %v1996
        %v2139 = vadd.f32 %v1022, %v1998
        %v2140 = vadd.f32 %v1024, %v2000
        %v2141 = vadd.f32 %v1028, %v2002
        %v2142 = vadd.f32 %v1030, %v2004
        %v2143 = vadd.f32 %v1032, %v2006
        %v2144 = vadd.f32 %v1034, %v2008
        %v2145 = vadd.f32 %v1038, %v2010
        %v2146 = vadd.f32 %v1040, %v2012
        %v2147 = vadd.f32 %v1042, %v2014
        %v2148 = vadd.f32 %v1044, %v2016
        %v2149 = vadd.f32 %v1048, %v2018
        %v2150 = vadd.f32 %v1050, %v2020
        %v2151 = vadd.f32 %v1052, %v2022
        %v2152 = vadd.f32 %v1054, %v2024
        %v2153 = vadd.f32 %v1058, %v2026
        %v2154 = vadd.f32 %v1060, %v2028
        %v2155 = vadd.f32 %v1062, %v2025
        %v2156 = vadd.f32 %v1064, %v2027
        %vm2221 = vcmask 1045504
        %v2222 = vrot.slane %v1294, 2
        %v2223 = vrot.slane %v1298, 2
        %v2224 = vsel %vm2221, %v2222, %v2223
        %v2225 = vrot.slane %v1296, 2
        %v2226 = vrot.slane %v1300, 2
        %v2227 = vsel %vm2221, %v2225, %v2226
        %v2228 = vrot.slane %v1304, 2
        %v2229 = vsel %vm2221, %v2223, %v2228
        %v2230 = vrot.slane %v1306, 2
        %v2231 = vsel %vm2221, %v2226, %v2230
        %v2232 = vrot.slane %v1308, 2
        %v2233 = vsel %vm2221, %v2228, %v2232
        %v2234 = vrot.slane %v1310, 2
        %v2235 = vsel %vm2221, %v2230, %v2234
        %v2236 = vrot.slane %v1314, 2
        %v2237 = vsel %vm2221, %v2232, %v2236
        %v2238 = vrot.slane %v1316, 2
        %v2239 = vsel %vm2221, %v2234, %v2238
        %v2240 = vrot.slane %v1318, 2
        %v2241 = vsel %vm2221, %v2236, %v2240
        %v2242 = vrot.slane %v1320, 2
        %v2243 = vsel %vm2221, %v2238, %v2242
        %v2244 = vrot.slane %v1324, 2
        %v2245 = vsel %vm2221, %v2240, %v2244
        %v2246 = vrot.slane %v1326, 2
        %v2247 = vsel %vm2221, %v2242, %v2246
        %v2248 = vrot.slane %v1328, 2
        %v2249 = vsel %vm2221, %v2244, %v2248
        %v2250 = vrot.slane %v1330, 2
        %v2251 = vsel %vm2221, %v2246, %v2250
        %v2252 = vrot.slane %v1334, 2
        %v2253 = vsel %vm2221, %v2248, %v2252
        %v2254 = vrot.slane %v1336, 2
        %v2255 = vsel %vm2221, %v2250, %v2254
        %v2256 = vrot.slane %v1338, 2
        %v2257 = vsel %vm2221, %v2252, %v2256
        %v2258 = vrot.slane %v1340, 2
        %v2259 = vsel %vm2221, %v2254, %v2258
        %v2260 = vrot.slane %v1344, 2
        %v2261 = vsel %vm2221, %v2256, %v2260
        %v2262 = vrot.slane %v1346, 2
        %v2263 = vsel %vm2221, %v2258, %v2262
        %v2264 = vrot.slane %v1348, 2
        %v2265 = vsel %vm2221, %v2260, %v2264
        %v2266 = vrot.slane %v1350, 2
        %v2267 = vsel %vm2221, %v2262, %v2266
        %v2268 = vrot.slane %v1354, 2
        %v2269 = vsel %vm2221, %v2264, %v2268
        %v2270 = vrot.slane %v1356, 2
        %v2271 = vsel %vm2221, %v2266, %v2270
        %v2272 = vrot.slane %v1358, 2
        %v2273 = vsel %vm2221, %v2268, %v2272
        %v2274 = vrot.slane %v1360, 2
        %v2275 = vsel %vm2221, %v2270, %v2274
        %v2276 = vrot.slane %v1364, 2
        %v2277 = vsel %vm2221, %v2272, %v2276
        %v2278 = vrot.slane %v1366, 2
        %v2279 = vsel %vm2221, %v2274, %v2278
        %v2280 = vrot.slane %v1368, 2
        %v2281 = vsel %vm2221, %v2276, %v2280
        %v2282 = vrot.slane %v1370, 2
        %v2283 = vsel %vm2221, %v2278, %v2282
        %v2284 = vrot.slane %v1374, 2
        %v2285 = vsel %vm2221, %v2280, %v2284
        %v2286 = vrot.slane %v1376, 2
        %v2287 = vsel %vm2221, %v2282, %v2286
        %v2288 = vrot.slane %v1378, 2
        %v2289 = vsel %vm2221, %v2284, %v2288
        %v2290 = vrot.slane %v1380, 2
        %v2291 = vsel %vm2221, %v2286, %v2290
        %v2292 = vrot.slane %v1384, 2
        %v2293 = vsel %vm2221, %v2288, %v2292
        %v2294 = vrot.slane %v1386, 2
        %v2295 = vsel %vm2221, %v2290, %v2294
        %v2296 = vrot.slane %v1388, 2
        %v2297 = vsel %vm2221, %v2292, %v2296
        %v2298 = vrot.slane %v1390, 2
        %v2299 = vsel %vm2221, %v2294, %v2298
        %v2300 = vrot.slane %v1394, 2
        %v2301 = vsel %vm2221, %v2296, %v2300
        %v2302 = vrot.slane %v1396, 2
        %v2303 = vsel %vm2221, %v2298, %v2302
        %v2304 = vrot.slane %v1398, 2
        %v2305 = vsel %vm2221, %v2300, %v2304
        %v2306 = vrot.slane %v1400, 2
        %v2307 = vsel %vm2221, %v2302, %v2306
        %v2308 = vrot.slane %v1404, 2
        %v2309 = vsel %vm2221, %v2304, %v2308
        %v2310 = vrot.slane %v1406, 2
        %v2311 = vsel %vm2221, %v2306, %v2310
        %v2312 = vrot.slane %v1408, 2
        %v2313 = vsel %vm2221, %v2308, %v2312
        %v2314 = vrot.slane %v1410, 2
        %v2315 = vsel %vm2221, %v2310, %v2314
        %v2316 = vrot.slane %v1414, 2
        %v2317 = vsel %vm2221, %v2312, %v2316
        %v2318 = vrot.slane %v1416, 2
        %v2319 = vsel %vm2221, %v2314, %v2318
        %v2320 = vrot.slane %v1418, 2
        %v2321 = vsel %vm2221, %v2316, %v2320
        %v2322 = vrot.slane %v1420, 2
        %v2323 = vsel %vm2221, %v2318, %v2322
        %v2324 = vrot.slane %v1424, 2
        %v2325 = vsel %vm2221, %v2320, %v2324
        %v2326 = vrot.slane %v1426, 2
        %v2327 = vsel %vm2221, %v2322, %v2326
        %v2328 = vrot.slane %v1428, 2
        %v2329 = vsel %vm2221, %v2324, %v2328
        %v2330 = vrot.slane %v1430, 2
        %v2331 = vsel %vm2221, %v2326, %v2330
        %v2332 = vrot.slane %v1434, 2
        %v2333 = vsel %vm2221, %v2328, %v2332
        %v2334 = vrot.slane %v1436, 2
        %v2335 = vsel %vm2221, %v2330, %v2334
        %v2336 = vrot.slane %v1438, 2
        %v2337 = vsel %vm2221, %v2332, %v2336
        %v2338 = vrot.slane %v1440, 2
        %v2339 = vsel %vm2221, %v2334, %v2338
        %v2340 = vrot.slane %v1444, 2
        %v2341 = vsel %vm2221, %v2336, %v2340
        %v2342 = vrot.slane %v1446, 2
        %v2343 = vsel %vm2221, %v2338, %v2342
        %v2344 = vrot.slane %v1448, 2
        %v2345 = vsel %vm2221, %v2340, %v2344
        %v2346 = vrot.slane %v1450, 2
        %v2347 = vsel %vm2221, %v2342, %v2346
        %v2412 = vadd.f32 %v2093, %v2224
        %v2413 = vadd.f32 %v2094, %v2227
        %v2414 = vadd.f32 %v2095, %v2229
        %v2415 = vadd.f32 %v2096, %v2231
        %v2416 = vadd.f32 %v2097, %v2233
        %v2417 = vadd.f32 %v2098, %v2235
        %v2418 = vadd.f32 %v2099, %v2237
        %v2419 = vadd.f32 %v2100, %v2239
        %v2420 = vadd.f32 %v2101, %v2241
        %v2421 = vadd.f32 %v2102, %v2243
        %v2422 = vadd.f32 %v2103, %v2245
        %v2423 = vadd.f32 %v2104, %v2247
        %v2424 = vadd.f32 %v2105, %v2249
        %v2425 = vadd.f32 %v2106, %v2251
        %v2426 = vadd.f32 %v2107, %v2253
        %v2427 = vadd.f32 %v2108, %v2255
        %v2428 = vadd.f32 %v2109, %v2257
        %v2429 = vadd.f32 %v2110, %v2259
        %v2430 = vadd.f32 %v2111, %v2261
        %v2431 = vadd.f32 %v2112, %v2263
        %v2432 = vadd.f32 %v2113, %v2265
        %v2433 = vadd.f32 %v2114, %v2267
        %v2434 = vadd.f32 %v2115, %v2269
        %v2435 = vadd.f32 %v2116, %v2271
        %v2436 = vadd.f32 %v2117, %v2273
        %v2437 = vadd.f32 %v2118, %v2275
        %v2438 = vadd.f32 %v2119, %v2277
        %v2439 = vadd.f32 %v2120, %v2279
        %v2440 = vadd.f32 %v2121, %v2281
        %v2441 = vadd.f32 %v2122, %v2283
        %v2442 = vadd.f32 %v2123, %v2285
        %v2443 = vadd.f32 %v2124, %v2287
        %v2444 = vadd.f32 %v2125, %v2289
        %v2445 = vadd.f32 %v2126, %v2291
        %v2446 = vadd.f32 %v2127, %v2293
        %v2447 = vadd.f32 %v2128, %v2295
        %v2448 = vadd.f32 %v2129, %v2297
        %v2449 = vadd.f32 %v2130, %v2299
        %v2450 = vadd.f32 %v2131, %v2301
        %v2451 = vadd.f32 %v2132, %v2303
        %v2452 = vadd.f32 %v2133, %v2305
        %v2453 = vadd.f32 %v2134, %v2307
        %v2454 = vadd.f32 %v2135, %v2309
        %v2455 = vadd.f32 %v2136, %v2311
        %v2456 = vadd.f32 %v2137, %v2313
        %v2457 = vadd.f32 %v2138, %v2315
        %v2458 = vadd.f32 %v2139, %v2317
        %v2459 = vadd.f32 %v2140, %v2319
        %v2460 = vadd.f32 %v2141, %v2321
        %v2461 = vadd.f32 %v2142, %v2323
        %v2462 = vadd.f32 %v2143, %v2325
        %v2463 = vadd.f32 %v2144, %v2327
        %v2464 = vadd.f32 %v2145, %v2329
        %v2465 = vadd.f32 %v2146, %v2331
        %v2466 = vadd.f32 %v2147, %v2333
        %v2467 = vadd.f32 %v2148, %v2335
        %v2468 = vadd.f32 %v2149, %v2337
        %v2469 = vadd.f32 %v2150, %v2339
        %v2470 = vadd.f32 %v2151, %v2341
        %v2471 = vadd.f32 %v2152, %v2343
        %v2472 = vadd.f32 %v2153, %v2345
        %v2473 = vadd.f32 %v2154, %v2347
        %v2474 = vadd.f32 %v2155, %v2344
        %v2475 = vadd.f32 %v2156, %v2346
        %vm2540 = vcmask 1044480
        %v2541 = vrot.slane %v1487, 3
        %v2542 = vrot.slane %v1491, 3
        %v2543 = vsel %vm2540, %v2541, %v2542
        %v2544 = vrot.slane %v1489, 3
        %v2545 = vrot.slane %v1493, 3
        %v2546 = vsel %vm2540, %v2544, %v2545
        %v2547 = vrot.slane %v1497, 3
        %v2548 = vsel %vm2540, %v2542, %v2547
        %v2549 = vrot.slane %v1499, 3
        %v2550 = vsel %vm2540, %v2545, %v2549
        %v2551 = vrot.slane %v1501, 3
        %v2552 = vsel %vm2540, %v2547, %v2551
        %v2553 = vrot.slane %v1503, 3
        %v2554 = vsel %vm2540, %v2549, %v2553
        %v2555 = vrot.slane %v1507, 3
        %v2556 = vsel %vm2540, %v2551, %v2555
        %v2557 = vrot.slane %v1509, 3
        %v2558 = vsel %vm2540, %v2553, %v2557
        %v2559 = vrot.slane %v1511, 3
        %v2560 = vsel %vm2540, %v2555, %v2559
        %v2561 = vrot.slane %v1513, 3
        %v2562 = vsel %vm2540, %v2557, %v2561
        %v2563 = vrot.slane %v1517, 3
        %v2564 = vsel %vm2540, %v2559, %v2563
        %v2565 = vrot.slane %v1519, 3
        %v2566 = vsel %vm2540, %v2561, %v2565
        %v2567 = vrot.slane %v1521, 3
        %v2568 = vsel %vm2540, %v2563, %v2567
        %v2569 = vrot.slane %v1523, 3
        %v2570 = vsel %vm2540, %v2565, %v2569
        %v2571 = vrot.slane %v1527, 3
        %v2572 = vsel %vm2540, %v2567, %v2571
        %v2573 = vrot.slane %v1529, 3
        %v2574 = vsel %vm2540, %v2569, %v2573
        %v2575 = vrot.slane %v1531, 3
        %v2576 = vsel %vm2540, %v2571, %v2575
        %v2577 = vrot.slane %v1533, 3
        %v2578 = vsel %vm2540, %v2573, %v2577
        %v2579 = vrot.slane %v1537, 3
        %v2580 = vsel %vm2540, %v2575, %v2579
        %v2581 = vrot.slane %v1539, 3
        %v2582 = vsel %vm2540, %v2577, %v2581
        %v2583 = vrot.slane %v1541, 3
        %v2584 = vsel %vm2540, %v2579, %v2583
        %v2585 = vrot.slane %v1543, 3
        %v2586 = vsel %vm2540, %v2581, %v2585
        %v2587 = vrot.slane %v1547, 3
        %v2588 = vsel %vm2540, %v2583, %v2587
        %v2589 = vrot.slane %v1549, 3
        %v2590 = vsel %vm2540, %v2585, %v2589
        %v2591 = vrot.slane %v1551, 3
        %v2592 = vsel %vm2540, %v2587, %v2591
        %v2593 = vrot.slane %v1553, 3
        %v2594 = vsel %vm2540, %v2589, %v2593
        %v2595 = vrot.slane %v1557, 3
        %v2596 = vsel %vm2540, %v2591, %v2595
        %v2597 = vrot.slane %v1559, 3
        %v2598 = vsel %vm2540, %v2593, %v2597
        %v2599 = vrot.slane %v1561, 3
        %v2600 = vsel %vm2540, %v2595, %v2599
        %v2601 = vrot.slane %v1563, 3
        %v2602 = vsel %vm2540, %v2597, %v2601
        %v2603 = vrot.slane %v1567, 3
        %v2604 = vsel %vm2540, %v2599, %v2603
        %v2605 = vrot.slane %v1569, 3
        %v2606 = vsel %vm2540, %v2601, %v2605
        %v2607 = vrot.slane %v1571, 3
        %v2608 = vsel %vm2540, %v2603, %v2607
        %v2609 = vrot.slane %v1573, 3
        %v2610 = vsel %vm2540, %v2605, %v2609
        %v2611 = vrot.slane %v1577, 3
        %v2612 = vsel %vm2540, %v2607, %v2611
        %v2613 = vrot.slane %v1579, 3
        %v2614 = vsel %vm2540, %v2609, %v2613
        %v2615 = vrot.slane %v1581, 3
        %v2616 = vsel %vm2540, %v2611, %v2615
        %v2617 = vrot.slane %v1583, 3
        %v2618 = vsel %vm2540, %v2613, %v2617
        %v2619 = vrot.slane %v1587, 3
        %v2620 = vsel %vm2540, %v2615, %v2619
        %v2621 = vrot.slane %v1589, 3
        %v2622 = vsel %vm2540, %v2617, %v2621
        %v2623 = vrot.slane %v1591, 3
        %v2624 = vsel %vm2540, %v2619, %v2623
        %v2625 = vrot.slane %v1593, 3
        %v2626 = vsel %vm2540, %v2621, %v2625
        %v2627 = vrot.slane %v1597, 3
        %v2628 = vsel %vm2540, %v2623, %v2627
        %v2629 = vrot.slane %v1599, 3
        %v2630 = vsel %vm2540, %v2625, %v2629
        %v2631 = vrot.slane %v1601, 3
        %v2632 = vsel %vm2540, %v2627, %v2631
        %v2633 = vrot.slane %v1603, 3
        %v2634 = vsel %vm2540, %v2629, %v2633
        %v2635 = vrot.slane %v1607, 3
        %v2636 = vsel %vm2540, %v2631, %v2635
        %v2637 = vrot.slane %v1609, 3
        %v2638 = vsel %vm2540, %v2633, %v2637
        %v2639 = vrot.slane %v1611, 3
        %v2640 = vsel %vm2540, %v2635, %v2639
        %v2641 = vrot.slane %v1613, 3
        %v2642 = vsel %vm2540, %v2637, %v2641
        %v2643 = vrot.slane %v1617, 3
        %v2644 = vsel %vm2540, %v2639, %v2643
        %v2645 = vrot.slane %v1619, 3
        %v2646 = vsel %vm2540, %v2641, %v2645
        %v2647 = vrot.slane %v1621, 3
        %v2648 = vsel %vm2540, %v2643, %v2647
        %v2649 = vrot.slane %v1623, 3
        %v2650 = vsel %vm2540, %v2645, %v2649
        %v2651 = vrot.slane %v1627, 3
        %v2652 = vsel %vm2540, %v2647, %v2651
        %v2653 = vrot.slane %v1629, 3
        %v2654 = vsel %vm2540, %v2649, %v2653
        %v2655 = vrot.slane %v1631, 3
        %v2656 = vsel %vm2540, %v2651, %v2655
        %v2657 = vrot.slane %v1633, 3
        %v2658 = vsel %vm2540, %v2653, %v2657
        %v2659 = vrot.slane %v1637, 3
        %v2660 = vsel %vm2540, %v2655, %v2659
        %v2661 = vrot.slane %v1639, 3
        %v2662 = vsel %vm2540, %v2657, %v2661
        %v2663 = vrot.slane %v1641, 3
        %v2664 = vsel %vm2540, %v2659, %v2663
        %v2665 = vrot.slane %v1643, 3
        %v2666 = vsel %vm2540, %v2661, %v2665
        %v2731 = vadd.f32 %v2412, %v2543
        %v2732 = vadd.f32 %v2413, %v2546
        %v2733 = vadd.f32 %v2414, %v2548
        %v2734 = vadd.f32 %v2415, %v2550
        %v2735 = vadd.f32 %v2416, %v2552
        %v2736 = vadd.f32 %v2417, %v2554
        %v2737 = vadd.f32 %v2418, %v2556
        %v2738 = vadd.f32 %v2419, %v2558
        %v2739 = vadd.f32 %v2420, %v2560
        %v2740 = vadd.f32 %v2421, %v2562
        %v2741 = vadd.f32 %v2422, %v2564
        %v2742 = vadd.f32 %v2423, %v2566
        %v2743 = vadd.f32 %v2424, %v2568
        %v2744 = vadd.f32 %v2425, %v2570
        %v2745 = vadd.f32 %v2426, %v2572
        %v2746 = vadd.f32 %v2427, %v2574
        %v2747 = vadd.f32 %v2428, %v2576
        %v2748 = vadd.f32 %v2429, %v2578
        %v2749 = vadd.f32 %v2430, %v2580
        %v2750 = vadd.f32 %v2431, %v2582
        %v2751 = vadd.f32 %v2432, %v2584
        %v2752 = vadd.f32 %v2433, %v2586
        %v2753 = vadd.f32 %v2434, %v2588
        %v2754 = vadd.f32 %v2435, %v2590
        %v2755 = vadd.f32 %v2436, %v2592
        %v2756 = vadd.f32 %v2437, %v2594
        %v2757 = vadd.f32 %v2438, %v2596
        %v2758 = vadd.f32 %v2439, %v2598
        %v2759 = vadd.f32 %v2440, %v2600
        %v2760 = vadd.f32 %v2441, %v2602
        %v2761 = vadd.f32 %v2442, %v2604
        %v2762 = vadd.f32 %v2443, %v2606
        %v2763 = vadd.f32 %v2444, %v2608
        %v2764 = vadd.f32 %v2445, %v2610
        %v2765 = vadd.f32 %v2446, %v2612
        %v2766 = vadd.f32 %v2447, %v2614
        %v2767 = vadd.f32 %v2448, %v2616
        %v2768 = vadd.f32 %v2449, %v2618
        %v2769 = vadd.f32 %v2450, %v2620
        %v2770 = vadd.f32 %v2451, %v2622
        %v2771 = vadd.f32 %v2452, %v2624
        %v2772 = vadd.f32 %v2453, %v2626
        %v2773 = vadd.f32 %v2454, %v2628
        %v2774 = vadd.f32 %v2455, %v2630
        %v2775 = vadd.f32 %v2456, %v2632
        %v2776 = vadd.f32 %v2457, %v2634
        %v2777 = vadd.f32 %v2458, %v2636
        %v2778 = vadd.f32 %v2459, %v2638
        %v2779 = vadd.f32 %v2460, %v2640
        %v2780 = vadd.f32 %v2461, %v2642
        %v2781 = vadd.f32 %v2462, %v2644
        %v2782 = vadd.f32 %v2463, %v2646
        %v2783 = vadd.f32 %v2464, %v2648
        %v2784 = vadd.f32 %v2465, %v2650
        %v2785 = vadd.f32 %v2466, %v2652
        %v2786 = vadd.f32 %v2467, %v2654
        %v2787 = vadd.f32 %v2468, %v2656
        %v2788 = vadd.f32 %v2469, %v2658
        %v2789 = vadd.f32 %v2470, %v2660
        %v2790 = vadd.f32 %v2471, %v2662
        %v2791 = vadd.f32 %v2472, %v2664
        %v2792 = vadd.f32 %v2473, %v2666
        %v2793 = vadd.f32 %v2474, %v2663
        %v2794 = vadd.f32 %v2475, %v2665
        %vm2859 = vcmask 1043456
        %v2860 = vrot.slane %v1680, 4
        %v2861 = vrot.slane %v1684, 4
        %v2862 = vsel %vm2859, %v2860, %v2861
        %v2863 = vrot.slane %v1682, 4
        %v2864 = vrot.slane %v1686, 4
        %v2865 = vsel %vm2859, %v2863, %v2864
        %v2866 = vrot.slane %v1690, 4
        %v2867 = vsel %vm2859, %v2861, %v2866
        %v2868 = vrot.slane %v1692, 4
        %v2869 = vsel %vm2859, %v2864, %v2868
        %v2870 = vrot.slane %v1694, 4
        %v2871 = vsel %vm2859, %v2866, %v2870
        %v2872 = vrot.slane %v1696, 4
        %v2873 = vsel %vm2859, %v2868, %v2872
        %v2874 = vrot.slane %v1700, 4
        %v2875 = vsel %vm2859, %v2870, %v2874
        %v2876 = vrot.slane %v1702, 4
        %v2877 = vsel %vm2859, %v2872, %v2876
        %v2878 = vrot.slane %v1704, 4
        %v2879 = vsel %vm2859, %v2874, %v2878
        %v2880 = vrot.slane %v1706, 4
        %v2881 = vsel %vm2859, %v2876, %v2880
        %v2882 = vrot.slane %v1710, 4
        %v2883 = vsel %vm2859, %v2878, %v2882
        %v2884 = vrot.slane %v1712, 4
        %v2885 = vsel %vm2859, %v2880, %v2884
        %v2886 = vrot.slane %v1714, 4
        %v2887 = vsel %vm2859, %v2882, %v2886
        %v2888 = vrot.slane %v1716, 4
        %v2889 = vsel %vm2859, %v2884, %v2888
        %v2890 = vrot.slane %v1720, 4
        %v2891 = vsel %vm2859, %v2886, %v2890
        %v2892 = vrot.slane %v1722, 4
        %v2893 = vsel %vm2859, %v2888, %v2892
        %v2894 = vrot.slane %v1724, 4
        %v2895 = vsel %vm2859, %v2890, %v2894
        %v2896 = vrot.slane %v1726, 4
        %v2897 = vsel %vm2859, %v2892, %v2896
        %v2898 = vrot.slane %v1730, 4
        %v2899 = vsel %vm2859, %v2894, %v2898
        %v2900 = vrot.slane %v1732, 4
        %v2901 = vsel %vm2859, %v2896, %v2900
        %v2902 = vrot.slane %v1734, 4
        %v2903 = vsel %vm2859, %v2898, %v2902
        %v2904 = vrot.slane %v1736, 4
        %v2905 = vsel %vm2859, %v2900, %v2904
        %v2906 = vrot.slane %v1740, 4
        %v2907 = vsel %vm2859, %v2902, %v2906
        %v2908 = vrot.slane %v1742, 4
        %v2909 = vsel %vm2859, %v2904, %v2908
        %v2910 = vrot.slane %v1744, 4
        %v2911 = vsel %vm2859, %v2906, %v2910
        %v2912 = vrot.slane %v1746, 4
        %v2913 = vsel %vm2859, %v2908, %v2912
        %v2914 = vrot.slane %v1750, 4
        %v2915 = vsel %vm2859, %v2910, %v2914
        %v2916 = vrot.slane %v1752, 4
        %v2917 = vsel %vm2859, %v2912, %v2916
        %v2918 = vrot.slane %v1754, 4
        %v2919 = vsel %vm2859, %v2914, %v2918
        %v2920 = vrot.slane %v1756, 4
        %v2921 = vsel %vm2859, %v2916, %v2920
        %v2922 = vrot.slane %v1760, 4
        %v2923 = vsel %vm2859, %v2918, %v2922
        %v2924 = vrot.slane %v1762, 4
        %v2925 = vsel %vm2859, %v2920, %v2924
        %v2926 = vrot.slane %v1764, 4
        %v2927 = vsel %vm2859, %v2922, %v2926
        %v2928 = vrot.slane %v1766, 4
        %v2929 = vsel %vm2859, %v2924, %v2928
        %v2930 = vrot.slane %v1770, 4
        %v2931 = vsel %vm2859, %v2926, %v2930
        %v2932 = vrot.slane %v1772, 4
        %v2933 = vsel %vm2859, %v2928, %v2932
        %v2934 = vrot.slane %v1774, 4
        %v2935 = vsel %vm2859, %v2930, %v2934
        %v2936 = vrot.slane %v1776, 4
        %v2937 = vsel %vm2859, %v2932, %v2936
        %v2938 = vrot.slane %v1780, 4
        %v2939 = vsel %vm2859, %v2934, %v2938
        %v2940 = vrot.slane %v1782, 4
        %v2941 = vsel %vm2859, %v2936, %v2940
        %v2942 = vrot.slane %v1784, 4
        %v2943 = vsel %vm2859, %v2938, %v2942
        %v2944 = vrot.slane %v1786, 4
        %v2945 = vsel %vm2859, %v2940, %v2944
        %v2946 = vrot.slane %v1790, 4
        %v2947 = vsel %vm2859, %v2942, %v2946
        %v2948 = vrot.slane %v1792, 4
        %v2949 = vsel %vm2859, %v2944, %v2948
        %v2950 = vrot.slane %v1794, 4
        %v2951 = vsel %vm2859, %v2946, %v2950
        %v2952 = vrot.slane %v1796, 4
        %v2953 = vsel %vm2859, %v2948, %v2952
        %v2954 = vrot.slane %v1800, 4
        %v2955 = vsel %vm2859, %v2950, %v2954
        %v2956 = vrot.slane %v1802, 4
        %v2957 = vsel %vm2859, %v2952, %v2956
        %v2958 = vrot.slane %v1804, 4
        %v2959 = vsel %vm2859, %v2954, %v2958
        %v2960 = vrot.slane %v1806, 4
        %v2961 = vsel %vm2859, %v2956, %v2960
        %v2962 = vrot.slane %v1810, 4
        %v2963 = vsel %vm2859, %v2958, %v2962
        %v2964 = vrot.slane %v1812, 4
        %v2965 = vsel %vm2859, %v2960, %v2964
        %v2966 = vrot.slane %v1814, 4
        %v2967 = vsel %vm2859, %v2962, %v2966
        %v2968 = vrot.slane %v1816, 4
        %v2969 = vsel %vm2859, %v2964, %v2968
        %v2970 = vrot.slane %v1820, 4
        %v2971 = vsel %vm2859, %v2966, %v2970
        %v2972 = vrot.slane %v1822, 4
        %v2973 = vsel %vm2859, %v2968, %v2972
        %v2974 = vrot.slane %v1824, 4
        %v2975 = vsel %vm2859, %v2970, %v2974
        %v2976 = vrot.slane %v1826, 4
        %v2977 = vsel %vm2859, %v2972, %v2976
        %v2978 = vrot.slane %v1830, 4
        %v2979 = vsel %vm2859, %v2974, %v2978
        %v2980 = vrot.slane %v1832, 4
        %v2981 = vsel %vm2859, %v2976, %v2980
        %v2982 = vrot.slane %v1834, 4
        %v2983 = vsel %vm2859, %v2978, %v2982
        %v2984 = vrot.slane %v1836, 4
        %v2985 = vsel %vm2859, %v2980, %v2984
        %v3050 = vadd.f32 %v2731, %v2862
        %v3051 = vadd.f32 %v2732, %v2865
        %v3052 = vadd.f32 %v2733, %v2867
        %v3053 = vadd.f32 %v2734, %v2869
        %v3054 = vadd.f32 %v2735, %v2871
        %v3055 = vadd.f32 %v2736, %v2873
        %v3056 = vadd.f32 %v2737, %v2875
        %v3057 = vadd.f32 %v2738, %v2877
        %v3058 = vadd.f32 %v2739, %v2879
        %v3059 = vadd.f32 %v2740, %v2881
        %v3060 = vadd.f32 %v2741, %v2883
        %v3061 = vadd.f32 %v2742, %v2885
        %v3062 = vadd.f32 %v2743, %v2887
        %v3063 = vadd.f32 %v2744, %v2889
        %v3064 = vadd.f32 %v2745, %v2891
        %v3065 = vadd.f32 %v2746, %v2893
        %v3066 = vadd.f32 %v2747, %v2895
        %v3067 = vadd.f32 %v2748, %v2897
        %v3068 = vadd.f32 %v2749, %v2899
        %v3069 = vadd.f32 %v2750, %v2901
        %v3070 = vadd.f32 %v2751, %v2903
        %v3071 = vadd.f32 %v2752, %v2905
        %v3072 = vadd.f32 %v2753, %v2907
        %v3073 = vadd.f32 %v2754, %v2909
        %v3074 = vadd.f32 %v2755, %v2911
        %v3075 = vadd.f32 %v2756, %v2913
        %v3076 = vadd.f32 %v2757, %v2915
        %v3077 = vadd.f32 %v2758, %v2917
        %v3078 = vadd.f32 %v2759, %v2919
        %v3079 = vadd.f32 %v2760, %v2921
        %v3080 = vadd.f32 %v2761, %v2923
        %v3081 = vadd.f32 %v2762, %v2925
        %v3082 = vadd.f32 %v2763, %v2927
        %v3083 = vadd.f32 %v2764, %v2929
        %v3084 = vadd.f32 %v2765, %v2931
        %v3085 = vadd.f32 %v2766, %v2933
        %v3086 = vadd.f32 %v2767, %v2935
        %v3087 = vadd.f32 %v2768, %v2937
        %v3088 = vadd.f32 %v2769, %v2939
        %v3089 = vadd.f32 %v2770, %v2941
        %v3090 = vadd.f32 %v2771, %v2943
        %v3091 = vadd.f32 %v2772, %v2945
        %v3092 = vadd.f32 %v2773, %v2947
        %v3093 = vadd.f32 %v2774, %v2949
        %v3094 = vadd.f32 %v2775, %v2951
        %v3095 = vadd.f32 %v2776, %v2953
        %v3096 = vadd.f32 %v2777, %v2955
        %v3097 = vadd.f32 %v2778, %v2957
        %v3098 = vadd.f32 %v2779, %v2959
        %v3099 = vadd.f32 %v2780, %v2961
        %v3100 = vadd.f32 %v2781, %v2963
        %v3101 = vadd.f32 %v2782, %v2965
        %v3102 = vadd.f32 %v2783, %v2967
        %v3103 = vadd.f32 %v2784, %v2969
        %v3104 = vadd.f32 %v2785, %v2971
        %v3105 = vadd.f32 %v2786, %v2973
        %v3106 = vadd.f32 %v2787, %v2975
        %v3107 = vadd.f32 %v2788, %v2977
        %v3108 = vadd.f32 %v2789, %v2979
        %v3109 = vadd.f32 %v2790, %v2981
        %v3110 = vadd.f32 %v2791, %v2983
        %v3111 = vadd.f32 %v2792, %v2985
        %v3112 = vadd.f32 %v2793, %v2982
        %v3113 = vadd.f32 %v2794, %v2984
        %v3114 = vld [vmem:[#allocation2] sm:$0x3]
        %v3116 = vlaneseq
        %v3117 = vshrl.u32 %v3116, 7
        %v3118 = vsub.s32 0, %v3117
        %v3119 = vrot.slane %v3114, %v3118
        %v3120 = vlaneseq
        %v3121 = vshrl.u32 %v3120, 7
        %v3122 = vsub.s32 1, %v3121
        %v3123 = vrot.slane %v3114, %v3122
        %v3126 = vadd.f32 %v3050, %v3119
        %v3127 = vadd.f32 %v3051, %v3123
        %v3128 = vadd.f32 %v3052, %v3119
        %v3129 = vadd.f32 %v3053, %v3123
        %v3130 = vadd.f32 %v3054, %v3119
        %v3131 = vadd.f32 %v3055, %v3123
        %v3132 = vadd.f32 %v3056, %v3119
        %v3133 = vadd.f32 %v3057, %v3123
        %v3134 = vadd.f32 %v3058, %v3119
        %v3135 = vadd.f32 %v3059, %v3123
        %v3136 = vadd.f32 %v3060, %v3119
        %v3137 = vadd.f32 %v3061, %v3123
        %v3138 = vadd.f32 %v3062, %v3119
        %v3139 = vadd.f32 %v3063, %v3123
        %v3140 = vadd.f32 %v3064, %v3119
        %v3141 = vadd.f32 %v3065, %v3123
        %v3142 = vadd.f32 %v3066, %v3119
        %v3143 = vadd.f32 %v3067, %v3123
        %v3144 = vadd.f32 %v3068, %v3119
        %v3145 = vadd.f32 %v3069, %v3123
        %v3146 = vadd.f32 %v3070, %v3119
        %v3147 = vadd.f32 %v3071, %v3123
        %v3148 = vadd.f32 %v3072, %v3119
        %v3149 = vadd.f32 %v3073, %v3123
        %v3150 = vadd.f32 %v3074, %v3119
        %v3151 = vadd.f32 %v3075, %v3123
        %v3152 = vadd.f32 %v3076, %v3119
        %v3153 = vadd.f32 %v3077, %v3123
        %v3154 = vadd.f32 %v3078, %v3119
        %v3155 = vadd.f32 %v3079, %v3123
        %v3156 = vadd.f32 %v3080, %v3119
        %v3157 = vadd.f32 %v3081, %v3123
        %v3158 = vadd.f32 %v3082, %v3119
        %v3159 = vadd.f32 %v3083, %v3123
        %v3160 = vadd.f32 %v3084, %v3119
        %v3161 = vadd.f32 %v3085, %v3123
        %v3162 = vadd.f32 %v3086, %v3119
        %v3163 = vadd.f32 %v3087, %v3123
        %v3164 = vadd.f32 %v3088, %v3119
        %v3165 = vadd.f32 %v3089, %v3123
        %v3166 = vadd.f32 %v3090, %v3119
        %v3167 = vadd.f32 %v3091, %v3123
        %v3168 = vadd.f32 %v3092, %v3119
        %v3169 = vadd.f32 %v3093, %v3123
        %v3170 = vadd.f32 %v3094, %v3119
        %v3171 = vadd.f32 %v3095, %v3123
        %v3172 = vadd.f32 %v3096, %v3119
        %v3173 = vadd.f32 %v3097, %v3123
        %v3174 = vadd.f32 %v3098, %v3119
        %v3175 = vadd.f32 %v3099, %v3123
        %v3176 = vadd.f32 %v3100, %v3119
        %v3177 = vadd.f32 %v3101, %v3123
        %v3178 = vadd.f32 %v3102, %v3119
        %v3179 = vadd.f32 %v3103, %v3123
        %v3180 = vadd.f32 %v3104, %v3119
        %v3181 = vadd.f32 %v3105, %v3123
        %v3182 = vadd.f32 %v3106, %v3119
        %v3183 = vadd.f32 %v3107, %v3123
        %v3184 = vadd.f32 %v3108, %v3119
        %v3185 = vadd.f32 %v3109, %v3123
        %v3186 = vadd.f32 %v3110, %v3119
        %v3187 = vadd.f32 %v3111, %v3123
        %v3188 = vadd.f32 %v3112, %v3119
        %v3189 = vadd.f32 %v3113, %v3123
        %v3190 = vmax.f32 %v3126, 0.0
        %v3191 = vmax.f32 %v3127, 0.0
        %v3192 = vmax.f32 %v3128, 0.0
        %v3193 = vmax.f32 %v3129, 0.0
        %v3194 = vmax.f32 %v3130, 0.0
        %v3195 = vmax.f32 %v3131, 0.0
        %v3196 = vmax.f32 %v3132, 0.0
        %v3197 = vmax.f32 %v3133, 0.0
        %v3198 = vmax.f32 %v3134, 0.0
        %v3199 = vmax.f32 %v3135, 0.0
        %v3200 = vmax.f32 %v3136, 0.0
        %v3201 = vmax.f32 %v3137, 0.0
        %v3202 = vmax.f32 %v3138, 0.0
        %v3203 = vmax.f32 %v3139, 0.0
        %v3204 = vmax.f32 %v3140, 0.0
        %v3205 = vmax.f32 %v3141, 0.0
        %v3206 = vmax.f32 %v3142, 0.0
        %v3207 = vmax.f32 %v3143, 0.0
        %v3208 = vmax.f32 %v3144, 0.0
        %v3209 = vmax.f32 %v3145, 0.0
        %v3210 = vmax.f32 %v3146, 0.0
        %v3211 = vmax.f32 %v3147, 0.0
        %v3212 = vmax.f32 %v3148, 0.0
        %v3213 = vmax.f32 %v3149, 0.0
        %v3214 = vmax.f32 %v3150, 0.0
        %v3215 = vmax.f32 %v3151, 0.0
        %v3216 = vmax.f32 %v3152, 0.0
        %v3217 = vmax.f32 %v3153, 0.0
        %v3218 = vmax.f32 %v3154, 0.0
        %v3219 = vmax.f32 %v3155, 0.0
        %v3220 = vmax.f32 %v3156, 0.0
        %v3221 = vmax.f32 %v3157, 0.0
        %v3222 = vmax.f32 %v3158, 0.0
        %v3223 = vmax.f32 %v3159, 0.0
        %v3224 = vmax.f32 %v3160, 0.0
        %v3225 = vmax.f32 %v3161, 0.0
        %v3226 = vmax.f32 %v3162, 0.0
        %v3227 = vmax.f32 %v3163, 0.0
        %v3228 = vmax.f32 %v3164, 0.0
        %v3229 = vmax.f32 %v3165, 0.0
        %v3230 = vmax.f32 %v3166, 0.0
        %v3231 = vmax.f32 %v3167, 0.0
        %v3232 = vmax.f32 %v3168, 0.0
        %v3233 = vmax.f32 %v3169, 0.0
        %v3234 = vmax.f32 %v3170, 0.0
        %v3235 = vmax.f32 %v3171, 0.0
        %v3236 = vmax.f32 %v3172, 0.0
        %v3237 = vmax.f32 %v3173, 0.0
        %v3238 = vmax.f32 %v3174, 0.0
        %v3239 = vmax.f32 %v3175, 0.0
        %v3240 = vmax.f32 %v3176, 0.0
        %v3241 = vmax.f32 %v3177, 0.0
        %v3242 = vmax.f32 %v3178, 0.0
        %v3243 = vmax.f32 %v3179, 0.0
        %v3244 = vmax.f32 %v3180, 0.0
        %v3245 = vmax.f32 %v3181, 0.0
        %v3246 = vmax.f32 %v3182, 0.0
        %v3247 = vmax.f32 %v3183, 0.0
        %v3248 = vmax.f32 %v3184, 0.0
        %v3249 = vmax.f32 %v3185, 0.0
        %v3250 = vmax.f32 %v3186, 0.0
        %v3251 = vmax.f32 %v3187, 0.0
        %v3252 = vmax.f32 %v3188, 0.0
        %v3253 = vmax.f32 %v3189, 0.0
        %v3254 = vmax.f32 %v3190, %v3191
        %v3255 = vmax.f32 %v3192, %v3193
        %v3256 = vmax.f32 %v3194, %v3195
        %v3257 = vmax.f32 %v3196, %v3197
        %v3258 = vmax.f32 %v3198, %v3199
        %v3259 = vmax.f32 %v3200, %v3201
        %v3260 = vmax.f32 %v3202, %v3203
        %v3261 = vmax.f32 %v3204, %v3205
        %v3262 = vmax.f32 %v3206, %v3207
        %v3263 = vmax.f32 %v3208, %v3209
        %v3264 = vmax.f32 %v3210, %v3211
        %v3265 = vmax.f32 %v3212, %v3213
        %v3266 = vmax.f32 %v3214, %v3215
        %v3267 = vmax.f32 %v3216, %v3217
        %v3268 = vmax.f32 %v3218, %v3219
        %v3269 = vmax.f32 %v3220, %v3221
        %v3270 = vmax.f32 %v3222, %v3223
        %v3271 = vmax.f32 %v3224, %v3225
        %v3272 = vmax.f32 %v3226, %v3227
        %v3273 = vmax.f32 %v3228, %v3229
        %v3274 = vmax.f32 %v3230, %v3231
        %v3275 = vmax.f32 %v3232, %v3233
        %v3276 = vmax.f32 %v3234, %v3235
        %v3277 = vmax.f32 %v3236, %v3237
        %v3278 = vmax.f32 %v3238, %v3239
        %v3279 = vmax.f32 %v3240, %v3241
        %v3280 = vmax.f32 %v3242, %v3243
        %v3281 = vmax.f32 %v3244, %v3245
        %v3282 = vmax.f32 %v3246, %v3247
        %v3283 = vmax.f32 %v3248, %v3249
        %v3284 = vmax.f32 %v3250, %v3251
        %v3285 = vmax.f32 %v3252, %v3253
        %v3286 = vpack.c.bf16 %v3255, %v3254
        %v3287 = vpack.c.bf16 %v3257, %v3256
        %v3288 = vpack.c.bf16 %v3259, %v3258
        %v3289 = vpack.c.bf16 %v3261, %v3260
        %v3290 = vpack.c.bf16 %v3263, %v3262
        %v3291 = vpack.c.bf16 %v3265, %v3264
        %v3292 = vpack.c.bf16 %v3267, %v3266
        %v3293 = vpack.c.bf16 %v3269, %v3268
        %v3294 = vpack.c.bf16 %v3271, %v3270
        %v3295 = vpack.c.bf16 %v3273, %v3272
        %v3296 = vpack.c.bf16 %v3275, %v3274
        %v3297 = vpack.c.bf16 %v3277, %v3276
        %v3298 = vpack.c.bf16 %v3279, %v3278
        %v3299 = vpack.c.bf16 %v3281, %v3280
        %v3300 = vpack.c.bf16 %v3283, %v3282
        %v3301 = vpack.c.bf16 %v3285, %v3284
        %v3302 = vld [vmem:[#allocation5] sm:$0xff]
        %v3303 = vld [vmem:[#allocation5 + $0x8] sm:$0xff]
        %v3304 = vld [vmem:[#allocation5 + $0x10] sm:$0xff]
        %v3305 = vld [vmem:[#allocation5 + $0x18] sm:$0xff]
        %v3306 = vld [vmem:[#allocation5 + $0x20] sm:$0xff]
        %v3307 = vld [vmem:[#allocation5 + $0x28] sm:$0xff]
        %v3308 = vld [vmem:[#allocation5 + $0x30] sm:$0xff]
        %v3309 = vld [vmem:[#allocation5 + $0x38] sm:$0xff]
        %v3310 = vld [vmem:[#allocation5 + $0x40] sm:$0xff]
        %v3311 = vld [vmem:[#allocation5 + $0x48] sm:$0xff]
        %v3312 = vld [vmem:[#allocation5 + $0x50] sm:$0xff]
        %v3313 = vld [vmem:[#allocation5 + $0x58] sm:$0xff]
        %v3314 = vld [vmem:[#allocation5 + $0x60] sm:$0xff]
        %v3315 = vld [vmem:[#allocation5 + $0x68] sm:$0xff]
        %v3316 = vld [vmem:[#allocation5 + $0x70] sm:$0xff]
        %v3317 = vld [vmem:[#allocation5 + $0x78] sm:$0xff]
        %v3318 = vld [vmem:[#allocation5 + $0x80] sm:$0xff]
        %v3319 = vld [vmem:[#allocation5 + $0x88] sm:$0xff]
        %v3320 = vld [vmem:[#allocation5 + $0x90] sm:$0xff]
        %v3321 = vld [vmem:[#allocation5 + $0x98] sm:$0xff]
        %v3322 = vld [vmem:[#allocation5 + $0xa0] sm:$0xff]
        %v3323 = vld [vmem:[#allocation5 + $0xa8] sm:$0xff]
        %v3324 = vld [vmem:[#allocation5 + $0xb0] sm:$0xff]
        %v3325 = vld [vmem:[#allocation5 + $0xb8] sm:$0xff]
        %v3326 = vld [vmem:[#allocation5 + $0xc0] sm:$0xff]
        %v3327 = vld [vmem:[#allocation5 + $0xc8] sm:$0xff]
        %v3328 = vld [vmem:[#allocation5 + $0xd0] sm:$0xff]
        %v3329 = vld [vmem:[#allocation5 + $0xd8] sm:$0xff]
        %v3330 = vld [vmem:[#allocation5 + $0xe0] sm:$0xff]
        %v3331 = vld [vmem:[#allocation5 + $0xe8] sm:$0xff]
        %v3332 = vld [vmem:[#allocation5 + $0xf0] sm:$0xff]
        %v3333 = vld [vmem:[#allocation5 + $0xf8] sm:$0xff]
        %v3366 = vunpack.c.l.b16 %v3302
        %v3367 = vunpack.c.h.b16 %v3302
        %v3368 = vunpack.c.l.b16 %v3303
        %v3369 = vunpack.c.h.b16 %v3303
        %v3370 = vunpack.c.l.b16 %v3304
        %v3371 = vunpack.c.h.b16 %v3304
        %v3372 = vunpack.c.l.b16 %v3305
        %v3373 = vunpack.c.h.b16 %v3305
        %v3374 = vunpack.c.l.b16 %v3306
        %v3375 = vunpack.c.h.b16 %v3306
        %v3376 = vunpack.c.l.b16 %v3307
        %v3377 = vunpack.c.h.b16 %v3307
        %v3378 = vunpack.c.l.b16 %v3308
        %v3379 = vunpack.c.h.b16 %v3308
        %v3380 = vunpack.c.l.b16 %v3309
        %v3381 = vunpack.c.h.b16 %v3309
        %v3382 = vunpack.c.l.b16 %v3310
        %v3383 = vunpack.c.h.b16 %v3310
        %v3384 = vunpack.c.l.b16 %v3311
        %v3385 = vunpack.c.h.b16 %v3311
        %v3386 = vunpack.c.l.b16 %v3312
        %v3387 = vunpack.c.h.b16 %v3312
        %v3388 = vunpack.c.l.b16 %v3313
        %v3389 = vunpack.c.h.b16 %v3313
        %v3390 = vunpack.c.l.b16 %v3314
        %v3391 = vunpack.c.h.b16 %v3314
        %v3392 = vunpack.c.l.b16 %v3315
        %v3393 = vunpack.c.h.b16 %v3315
        %v3394 = vunpack.c.l.b16 %v3316
        %v3395 = vunpack.c.h.b16 %v3316
        %v3396 = vunpack.c.l.b16 %v3317
        %v3397 = vunpack.c.h.b16 %v3317
        %v3398 = vunpack.c.l.b16 %v3318
        %v3399 = vunpack.c.h.b16 %v3318
        %v3400 = vunpack.c.l.b16 %v3319
        %v3401 = vunpack.c.h.b16 %v3319
        %v3402 = vunpack.c.l.b16 %v3320
        %v3403 = vunpack.c.h.b16 %v3320
        %v3404 = vunpack.c.l.b16 %v3321
        %v3405 = vunpack.c.h.b16 %v3321
        %v3406 = vunpack.c.l.b16 %v3322
        %v3407 = vunpack.c.h.b16 %v3322
        %v3408 = vunpack.c.l.b16 %v3323
        %v3409 = vunpack.c.h.b16 %v3323
        %v3410 = vunpack.c.l.b16 %v3324
        %v3411 = vunpack.c.h.b16 %v3324
        %v3412 = vunpack.c.l.b16 %v3325
        %v3413 = vunpack.c.h.b16 %v3325
        %v3414 = vunpack.c.l.b16 %v3326
        %v3415 = vunpack.c.h.b16 %v3326
        %v3416 = vunpack.c.l.b16 %v3327
        %v3417 = vunpack.c.h.b16 %v3327
        %v3418 = vunpack.c.l.b16 %v3328
        %v3419 = vunpack.c.h.b16 %v3328
        %v3420 = vunpack.c.l.b16 %v3329
        %v3421 = vunpack.c.h.b16 %v3329
        %v3422 = vunpack.c.l.b16 %v3330
        %v3423 = vunpack.c.h.b16 %v3330
        %v3424 = vunpack.c.l.b16 %v3331
        %v3425 = vunpack.c.h.b16 %v3331
        %v3426 = vunpack.c.l.b16 %v3332
        %v3427 = vunpack.c.h.b16 %v3332
        %v3428 = vunpack.c.l.b16 %v3333
        %v3429 = vunpack.c.h.b16 %v3333
        %v3430 = vpack.c.b16 %v3368, %v3366
        %v3431 = vpack.c.b16 %v3369, %v3367
        %v3432 = vpack.c.b16 %v3372, %v3370
        %v3433 = vpack.c.b16 %v3373, %v3371
        %v3434 = vpack.c.b16 %v3376, %v3374
        %v3435 = vpack.c.b16 %v3377, %v3375
        %v3436 = vpack.c.b16 %v3380, %v3378
        %v3437 = vpack.c.b16 %v3381, %v3379
        %v3438 = vpack.c.b16 %v3384, %v3382
        %v3439 = vpack.c.b16 %v3385, %v3383
        %v3440 = vpack.c.b16 %v3388, %v3386
        %v3441 = vpack.c.b16 %v3389, %v3387
        %v3442 = vpack.c.b16 %v3392, %v3390
        %v3443 = vpack.c.b16 %v3393, %v3391
        %v3444 = vpack.c.b16 %v3396, %v3394
        %v3445 = vpack.c.b16 %v3397, %v3395
        %v3446 = vpack.c.b16 %v3400, %v3398
        %v3447 = vpack.c.b16 %v3401, %v3399
        %v3448 = vpack.c.b16 %v3404, %v3402
        %v3449 = vpack.c.b16 %v3405, %v3403
        %v3450 = vpack.c.b16 %v3408, %v3406
        %v3451 = vpack.c.b16 %v3409, %v3407
        %v3452 = vpack.c.b16 %v3412, %v3410
        %v3453 = vpack.c.b16 %v3413, %v3411
        %v3454 = vpack.c.b16 %v3416, %v3414
        %v3455 = vpack.c.b16 %v3417, %v3415
        %v3456 = vpack.c.b16 %v3420, %v3418
        %v3457 = vpack.c.b16 %v3421, %v3419
        %v3458 = vpack.c.b16 %v3424, %v3422
        %v3459 = vpack.c.b16 %v3425, %v3423
        %v3460 = vpack.c.b16 %v3428, %v3426
        %v3461 = vpack.c.b16 %v3429, %v3427
        %vm3478 = vcmask 1014784
        %v3480 = vsel %vm3478, %v3431, 0
        %v3483 = vsel %vm3478, %v3433, 0
        %v3486 = vsel %vm3478, %v3435, 0
        %v3489 = vsel %vm3478, %v3437, 0
        %v3492 = vsel %vm3478, %v3439, 0
        %v3495 = vsel %vm3478, %v3441, 0
        %v3498 = vsel %vm3478, %v3443, 0
        %v3501 = vsel %vm3478, %v3445, 0
        %v3504 = vsel %vm3478, %v3447, 0
        %v3507 = vsel %vm3478, %v3449, 0
        %v3510 = vsel %vm3478, %v3451, 0
        %v3513 = vsel %vm3478, %v3453, 0
        %v3516 = vsel %vm3478, %v3455, 0
        %v3519 = vsel %vm3478, %v3457, 0
        %v3522 = vsel %vm3478, %v3459, 0
        %v3525 = vsel %vm3478, %v3461, 0
        %v3528 = vsel %vm2221, %v3301, 0
        %3530 = vmatprep.subr.bf16.mxu0 0
        %3531 = vmatpush1.bf16.msra.mxu0 %v3286
        %3532 = vmatprep.subr.bf16.mxu0 0
        %3533 = vmatpush1.bf16.msra.mxu0 %v3287
        %3534 = vmatprep.subr.bf16.mxu0 0
        %3535 = vmatpush1.bf16.msra.mxu0 %v3288
        %3536 = vmatprep.subr.bf16.mxu0 0
        %3537 = vmatpush1.bf16.msra.mxu0 %v3289
        %3538 = vmatprep.subr.bf16.mxu0 0
        %3539 = vmatpush1.bf16.msra.mxu0 %v3290
        %3540 = vmatprep.subr.bf16.mxu0 0
        %3541 = vmatpush1.bf16.msra.mxu0 %v3291
        %3542 = vmatprep.subr.bf16.mxu0 0
        %3543 = vmatpush1.bf16.msra.mxu0 %v3292
        %3544 = vmatprep.subr.bf16.mxu0 0
        %3545 = vmatpush1.bf16.msra.mxu0 %v3293
        %3546 = vmatprep.subr.bf16.mxu0 0
        %3547 = vmatpush1.bf16.msra.mxu0 %v3294
        %3548 = vmatprep.subr.bf16.mxu0 0
        %3549 = vmatpush1.bf16.msra.mxu0 %v3295
        %3550 = vmatprep.subr.bf16.mxu0 0
        %3551 = vmatpush1.bf16.msra.mxu0 %v3296
        %3552 = vmatprep.subr.bf16.mxu0 0
        %3553 = vmatpush1.bf16.msra.mxu0 %v3297
        %3554 = vmatprep.subr.bf16.mxu0 0
        %3555 = vmatpush1.bf16.msra.mxu0 %v3298
        %3556 = vmatprep.subr.bf16.mxu0 0
        %3557 = vmatpush1.bf16.msra.mxu0 %v3299
        %3558 = vmatprep.subr.bf16.mxu0 0
        %3559 = vmatpush1.bf16.msra.mxu0 %v3300
        %3560 = vmatprep.subr.bf16.mxu0 0
        %3561 = vmatpush1.bf16.msra.mxu0 %v3528
        %3562 = vmatprep.mubr.bf16.mxu0 %v3480
        %3563 = vmatmul.mubr.bf16.gmra.mrb[0].mxu0 %v3430
        %v3564 = vpop.f32.mrb[0].mxu0
        %v3565 = vadd.f32 0.0, %v3564
        %v3566 = vpop.f32.mrb[0].mxu0
        %v3567 = vpop.f32.mrb[0].mxu0
        %v3568 = vadd.f32 0.0, %v3567
        %v3569 = vpop.f32.mrb[0].mxu0
        %3570 = vmatprep.mubr.bf16.mxu0 %v3483
        %3571 = vmatmul.mubr.bf16.gmra.mrb[0].mxu0 %v3432
        %v3572 = vpop.f32.mrb[0].mxu0
        %v3573 = vadd.f32 0.0, %v3572
        %v3574 = vpop.f32.mrb[0].mxu0
        %v3575 = vpop.f32.mrb[0].mxu0
        %v3576 = vadd.f32 0.0, %v3575
        %v3577 = vpop.f32.mrb[0].mxu0
        %3578 = vmatprep.mubr.bf16.mxu0 %v3486
        %3579 = vmatmul.mubr.bf16.gmra.mrb[0].mxu0 %v3434
        %v3580 = vpop.f32.mrb[0].mxu0
        %v3581 = vadd.f32 0.0, %v3580
        %v3582 = vpop.f32.mrb[0].mxu0
        %v3583 = vpop.f32.mrb[0].mxu0
        %v3584 = vadd.f32 0.0, %v3583
        %v3585 = vpop.f32.mrb[0].mxu0
        %3586 = vmatprep.mubr.bf16.mxu0 %v3489
        %3587 = vmatmul.mubr.bf16.gmra.mrb[0].mxu0 %v3436
        %v3588 = vpop.f32.mrb[0].mxu0
        %v3589 = vadd.f32 0.0, %v3588
        %v3590 = vpop.f32.mrb[0].mxu0
        %v3591 = vpop.f32.mrb[0].mxu0
        %v3592 = vadd.f32 0.0, %v3591
        %v3593 = vpop.f32.mrb[0].mxu0
        %3594 = vmatprep.mubr.bf16.mxu0 %v3492
        %3595 = vmatmul.mubr.bf16.gmra.mrb[0].mxu0 %v3438
        %v3596 = vpop.f32.mrb[0].mxu0
        %v3597 = vadd.f32 0.0, %v3596
        %v3598 = vpop.f32.mrb[0].mxu0
        %v3599 = vpop.f32.mrb[0].mxu0
        %v3600 = vadd.f32 0.0, %v3599
        %v3601 = vpop.f32.mrb[0].mxu0
        %3602 = vmatprep.mubr.bf16.mxu0 %v3495
        %3603 = vmatmul.mubr.bf16.gmra.mrb[0].mxu0 %v3440
        %v3604 = vpop.f32.mrb[0].mxu0
        %v3605 = vadd.f32 0.0, %v3604
        %v3606 = vpop.f32.mrb[0].mxu0
        %v3607 = vpop.f32.mrb[0].mxu0
        %v3608 = vadd.f32 0.0, %v3607
        %v3609 = vpop.f32.mrb[0].mxu0
        %3610 = vmatprep.mubr.bf16.mxu0 %v3498
        %3611 = vmatmul.mubr.bf16.gmra.mrb[0].mxu0 %v3442
        %v3612 = vpop.f32.mrb[0].mxu0
        %v3613 = vadd.f32 0.0, %v3612
        %v3614 = vpop.f32.mrb[0].mxu0
        %v3615 = vpop.f32.mrb[0].mxu0
        %v3616 = vadd.f32 0.0, %v3615
        %v3617 = vpop.f32.mrb[0].mxu0
        %3618 = vmatprep.mubr.bf16.mxu0 %v3501
        %3619 = vmatmul.mubr.bf16.gmra.mrb[0].mxu0 %v3444
        %v3620 = vpop.f32.mrb[0].mxu0
        %v3621 = vadd.f32 0.0, %v3620
        %v3622 = vpop.f32.mrb[0].mxu0
        %v3623 = vpop.f32.mrb[0].mxu0
        %v3624 = vadd.f32 0.0, %v3623
        %v3625 = vpop.f32.mrb[0].mxu0
        %3626 = vmatprep.mubr.bf16.mxu0 %v3504
        %3627 = vmatmul.mubr.bf16.gmra.mrb[0].mxu0 %v3446
        %v3628 = vpop.f32.mrb[0].mxu0
        %v3629 = vadd.f32 0.0, %v3628
        %v3630 = vpop.f32.mrb[0].mxu0
        %v3631 = vpop.f32.mrb[0].mxu0
        %v3632 = vadd.f32 0.0, %v3631
        %v3633 = vpop.f32.mrb[0].mxu0
        %3634 = vmatprep.mubr.bf16.mxu0 %v3507
        %3635 = vmatmul.mubr.bf16.gmra.mrb[0].mxu0 %v3448
        %v3636 = vpop.f32.mrb[0].mxu0
        %v3637 = vadd.f32 0.0, %v3636
        %v3638 = vpop.f32.mrb[0].mxu0
        %v3639 = vpop.f32.mrb[0].mxu0
        %v3640 = vadd.f32 0.0, %v3639
        %v3641 = vpop.f32.mrb[0].mxu0
        %3642 = vmatprep.mubr.bf16.mxu0 %v3510
        %3643 = vmatmul.mubr.bf16.gmra.mrb[0].mxu0 %v3450
        %v3644 = vpop.f32.mrb[0].mxu0
        %v3645 = vadd.f32 0.0, %v3644
        %v3646 = vpop.f32.mrb[0].mxu0
        %v3647 = vpop.f32.mrb[0].mxu0
        %v3648 = vadd.f32 0.0, %v3647
        %v3649 = vpop.f32.mrb[0].mxu0
        %3650 = vmatprep.mubr.bf16.mxu0 %v3513
        %3651 = vmatmul.mubr.bf16.gmra.mrb[0].mxu0 %v3452
        %v3652 = vpop.f32.mrb[0].mxu0
        %v3653 = vadd.f32 0.0, %v3652
        %v3654 = vpop.f32.mrb[0].mxu0
        %v3655 = vpop.f32.mrb[0].mxu0
        %v3656 = vadd.f32 0.0, %v3655
        %v3657 = vpop.f32.mrb[0].mxu0
        %3658 = vmatprep.mubr.bf16.mxu0 %v3516
        %3659 = vmatmul.mubr.bf16.gmra.mrb[0].mxu0 %v3454
        %v3660 = vpop.f32.mrb[0].mxu0
        %v3661 = vadd.f32 0.0, %v3660
        %v3662 = vpop.f32.mrb[0].mxu0
        %v3663 = vpop.f32.mrb[0].mxu0
        %v3664 = vadd.f32 0.0, %v3663
        %v3665 = vpop.f32.mrb[0].mxu0
        %3666 = vmatprep.mubr.bf16.mxu0 %v3519
        %3667 = vmatmul.mubr.bf16.gmra.mrb[0].mxu0 %v3456
        %v3668 = vpop.f32.mrb[0].mxu0
        %v3669 = vadd.f32 0.0, %v3668
        %v3670 = vpop.f32.mrb[0].mxu0
        %v3671 = vpop.f32.mrb[0].mxu0
        %v3672 = vadd.f32 0.0, %v3671
        %v3673 = vpop.f32.mrb[0].mxu0
        %3674 = vmatprep.mubr.bf16.mxu0 %v3522
        %3675 = vmatmul.mubr.bf16.gmra.mrb[0].mxu0 %v3458
        %v3676 = vpop.f32.mrb[0].mxu0
        %v3677 = vadd.f32 0.0, %v3676
        %v3678 = vpop.f32.mrb[0].mxu0
        %v3679 = vpop.f32.mrb[0].mxu0
        %v3680 = vadd.f32 0.0, %v3679
        %v3681 = vpop.f32.mrb[0].mxu0
        %3682 = vmatprep.mubr.bf16.mxu0 %v3525
        %3683 = vmatmul.mubr.bf16.gmra.mrb[0].mxu0 %v3460
        %v3684 = vpop.f32.mrb[0].mxu0
        %v3685 = vadd.f32 0.0, %v3684
        %v3686 = vpop.f32.mrb[0].mxu0
        %v3687 = vpop.f32.mrb[0].mxu0
        %v3688 = vadd.f32 0.0, %v3687
        %v3689 = vpop.f32.mrb[0].mxu0
        %3690 = vdwg.mxu0
        %v3691 = vmax.f32 %v3565, %v3629
        %v3692 = vmax.f32 %v3568, %v3632
        %v3693 = vmax.f32 %v3573, %v3637
        %v3694 = vmax.f32 %v3576, %v3640
        %v3695 = vmax.f32 %v3581, %v3645
        %v3696 = vmax.f32 %v3584, %v3648
        %v3697 = vmax.f32 %v3589, %v3653
        %v3698 = vmax.f32 %v3592, %v3656
        %v3699 = vmax.f32 %v3597, %v3661
        %v3700 = vmax.f32 %v3600, %v3664
        %v3701 = vmax.f32 %v3605, %v3669
        %v3702 = vmax.f32 %v3608, %v3672
        %v3703 = vmax.f32 %v3613, %v3677
        %v3704 = vmax.f32 %v3616, %v3680
        %v3705 = vmax.f32 %v3621, %v3685
        %v3706 = vmax.f32 %v3624, %v3688
        %v3707 = vpack.c.bf16 %v3692, %v3691
        %v3708 = vpack.c.bf16 %v3694, %v3693
        %v3709 = vpack.c.bf16 %v3696, %v3695
        %v3710 = vpack.c.bf16 %v3698, %v3697
        %v3711 = vpack.c.bf16 %v3700, %v3699
        %v3712 = vpack.c.bf16 %v3702, %v3701
        %v3713 = vpack.c.bf16 %v3704, %v3703
        %v3714 = vpack.c.bf16 %v3706, %v3705
        %v3715 = vld [vmem:[%s4] sm:$0xff]
        %v3716 = vld [vmem:[%s4 + $0x8] sm:$0xff]
        %v3717 = vld [vmem:[%s4 + $0x10] sm:$0xff]
        %v3718 = vld [vmem:[%s4 + $0x18] sm:$0xff]
        %v3719 = vld [vmem:[%s4 + $0x20] sm:$0xff]
        %v3720 = vld [vmem:[%s4 + $0x28] sm:$0xff]
        %v3721 = vld [vmem:[%s4 + $0x30] sm:$0xff]
        %v3722 = vld [vmem:[%s4 + $0x38] sm:$0xff]
        %v3723 = vld [vmem:[%s4 + $0x40] sm:$0xff]
        %v3724 = vld [vmem:[%s4 + $0x48] sm:$0xff]
        %v3725 = vld [vmem:[%s4 + $0x50] sm:$0xff]
        %v3726 = vld [vmem:[%s4 + $0x58] sm:$0xff]
        %v3727 = vld [vmem:[%s4 + $0x60] sm:$0xff]
        %v3728 = vld [vmem:[%s4 + $0x68] sm:$0xff]
        %v3729 = vld [vmem:[%s4 + $0x70] sm:$0xff]
        %v3730 = vld [vmem:[%s4 + $0x78] sm:$0xff]
        %v3731 = vld [vmem:[%s4 + $0x80] sm:$0xff]
        %v3732 = vld [vmem:[%s4 + $0x88] sm:$0xff]
        %v3733 = vld [vmem:[%s4 + $0x90] sm:$0xff]
        %v3734 = vld [vmem:[%s4 + $0x98] sm:$0xff]
        %v3735 = vld [vmem:[%s4 + $0xa0] sm:$0xff]
        %v3736 = vld [vmem:[%s4 + $0xa8] sm:$0xff]
        %v3737 = vld [vmem:[%s4 + $0xb0] sm:$0xff]
        %v3738 = vld [vmem:[%s4 + $0xb8] sm:$0xff]
        %v3739 = vld [vmem:[%s4 + $0xc0] sm:$0xff]
        %v3740 = vld [vmem:[%s4 + $0xc8] sm:$0xff]
        %v3741 = vld [vmem:[%s4 + $0xd0] sm:$0xff]
        %v3742 = vld [vmem:[%s4 + $0xd8] sm:$0xff]
        %v3743 = vld [vmem:[%s4 + $0xe0] sm:$0xff]
        %v3744 = vld [vmem:[%s4 + $0xe8] sm:$0xff]
        %v3745 = vld [vmem:[%s4 + $0xf0] sm:$0xff]
        %v3746 = vld [vmem:[%s4 + $0xf8] sm:$0xff]
        %v3747 = vld [vmem:[%s4 + $0x100] sm:$0xff]
        %v3748 = vld [vmem:[%s4 + $0x108] sm:$0xff]
        %v3749 = vld [vmem:[%s4 + $0x110] sm:$0xff]
        %v3750 = vld [vmem:[%s4 + $0x118] sm:$0xff]
        %v3751 = vld [vmem:[%s4 + $0x120] sm:$0xff]
        %v3752 = vld [vmem:[%s4 + $0x128] sm:$0xff]
        %v3753 = vld [vmem:[%s4 + $0x130] sm:$0xff]
        %v3754 = vld [vmem:[%s4 + $0x138] sm:$0xff]
        %v3755 = vld [vmem:[%s4 + $0x140] sm:$0xff]
        %v3756 = vld [vmem:[%s4 + $0x148] sm:$0xff]
        %v3757 = vld [vmem:[%s4 + $0x150] sm:$0xff]
        %v3758 = vld [vmem:[%s4 + $0x158] sm:$0xff]
        %v3759 = vld [vmem:[%s4 + $0x160] sm:$0xff]
        %v3760 = vld [vmem:[%s4 + $0x168] sm:$0xff]
        %v3761 = vld [vmem:[%s4 + $0x170] sm:$0xff]
        %v3762 = vld [vmem:[%s4 + $0x178] sm:$0xff]
        %v3763 = vld [vmem:[%s4 + $0x180] sm:$0xff]
        %v3764 = vld [vmem:[%s4 + $0x188] sm:$0xff]
        %v3765 = vld [vmem:[%s4 + $0x190] sm:$0xff]
        %v3766 = vld [vmem:[%s4 + $0x198] sm:$0xff]
        %v3767 = vld [vmem:[%s4 + $0x1a0] sm:$0xff]
        %v3768 = vld [vmem:[%s4 + $0x1a8] sm:$0xff]
        %v3769 = vld [vmem:[%s4 + $0x1b0] sm:$0xff]
        %v3770 = vld [vmem:[%s4 + $0x1b8] sm:$0xff]
        %v3771 = vld [vmem:[%s4 + $0x1c0] sm:$0xff]
        %v3772 = vld [vmem:[%s4 + $0x1c8] sm:$0xff]
        %v3773 = vld [vmem:[%s4 + $0x1d0] sm:$0xff]
        %v3774 = vld [vmem:[%s4 + $0x1d8] sm:$0xff]
        %v3775 = vld [vmem:[%s4 + $0x1e0] sm:$0xff]
        %v3776 = vld [vmem:[%s4 + $0x1e8] sm:$0xff]
        %v3777 = vld [vmem:[%s4 + $0x1f0] sm:$0xff]
        %v3778 = vld [vmem:[%s4 + $0x1f8] sm:$0xff]
        %v3779 = vld [vmem:[%s4 + $0x200] sm:$0xff]
        %v3780 = vld [vmem:[%s4 + $0x208] sm:$0xff]
        %v3781 = vld [vmem:[%s4 + $0x210] sm:$0xff]
        %v3782 = vld [vmem:[%s4 + $0x218] sm:$0xff]
        %v3783 = vld [vmem:[%s4 + $0x220] sm:$0xff]
        %v3784 = vld [vmem:[%s4 + $0x228] sm:$0xff]
        %v3785 = vld [vmem:[%s4 + $0x230] sm:$0xff]
        %v3786 = vld [vmem:[%s4 + $0x238] sm:$0xff]
        %v3787 = vld [vmem:[%s4 + $0x240] sm:$0xff]
        %v3788 = vld [vmem:[%s4 + $0x248] sm:$0xff]
        %v3789 = vld [vmem:[%s4 + $0x250] sm:$0xff]
        %v3790 = vld [vmem:[%s4 + $0x258] sm:$0xff]
        %v3791 = vld [vmem:[%s4 + $0x260] sm:$0xff]
        %v3792 = vld [vmem:[%s4 + $0x268] sm:$0xff]
        %v3793 = vld [vmem:[%s4 + $0x270] sm:$0xff]
        %v3794 = vld [vmem:[%s4 + $0x278] sm:$0xff]
        %v3875 = vunpack.c.l.b16 %v3715
        %v3876 = vunpack.c.h.b16 %v3715
        %v3877 = vunpack.c.l.b16 %v3716
        %v3878 = vunpack.c.h.b16 %v3716
        %v3879 = vunpack.c.l.b16 %v3717
        %v3880 = vunpack.c.h.b16 %v3717
        %v3881 = vunpack.c.l.b16 %v3718
        %v3882 = vunpack.c.h.b16 %v3718
        %v3883 = vunpack.c.l.b16 %v3719
        %v3884 = vunpack.c.h.b16 %v3719
        %v3885 = vunpack.c.l.b16 %v3720
        %v3886 = vunpack.c.h.b16 %v3720
        %v3887 = vunpack.c.l.b16 %v3721
        %v3888 = vunpack.c.h.b16 %v3721
        %v3889 = vunpack.c.l.b16 %v3722
        %v3890 = vunpack.c.h.b16 %v3722
        %v3891 = vunpack.c.l.b16 %v3723
        %v3892 = vunpack.c.h.b16 %v3723
        %v3893 = vunpack.c.l.b16 %v3724
        %v3894 = vunpack.c.h.b16 %v3724
        %v3895 = vunpack.c.l.b16 %v3725
        %v3896 = vunpack.c.h.b16 %v3725
        %v3897 = vunpack.c.l.b16 %v3726
        %v3898 = vunpack.c.h.b16 %v3726
        %v3899 = vunpack.c.l.b16 %v3727
        %v3900 = vunpack.c.h.b16 %v3727
        %v3901 = vunpack.c.l.b16 %v3728
        %v3902 = vunpack.c.h.b16 %v3728
        %v3903 = vunpack.c.l.b16 %v3729
        %v3904 = vunpack.c.h.b16 %v3729
        %v3905 = vunpack.c.l.b16 %v3730
        %v3906 = vunpack.c.h.b16 %v3730
        %v3907 = vunpack.c.l.b16 %v3731
        %v3908 = vunpack.c.h.b16 %v3731
        %v3909 = vunpack.c.l.b16 %v3732
        %v3910 = vunpack.c.h.b16 %v3732
        %v3911 = vunpack.c.l.b16 %v3733
        %v3912 = vunpack.c.h.b16 %v3733
        %v3913 = vunpack.c.l.b16 %v3734
        %v3914 = vunpack.c.h.b16 %v3734
        %v3915 = vunpack.c.l.b16 %v3735
        %v3916 = vunpack.c.h.b16 %v3735
        %v3917 = vunpack.c.l.b16 %v3736
        %v3918 = vunpack.c.h.b16 %v3736
        %v3919 = vunpack.c.l.b16 %v3737
        %v3920 = vunpack.c.h.b16 %v3737
        %v3921 = vunpack.c.l.b16 %v3738
        %v3922 = vunpack.c.h.b16 %v3738
        %v3923 = vunpack.c.l.b16 %v3739
        %v3924 = vunpack.c.h.b16 %v3739
        %v3925 = vunpack.c.l.b16 %v3740
        %v3926 = vunpack.c.h.b16 %v3740
        %v3927 = vunpack.c.l.b16 %v3741
        %v3928 = vunpack.c.h.b16 %v3741
        %v3929 = vunpack.c.l.b16 %v3742
        %v3930 = vunpack.c.h.b16 %v3742
        %v3931 = vunpack.c.l.b16 %v3743
        %v3932 = vunpack.c.h.b16 %v3743
        %v3933 = vunpack.c.l.b16 %v3744
        %v3934 = vunpack.c.h.b16 %v3744
        %v3935 = vunpack.c.l.b16 %v3745
        %v3936 = vunpack.c.h.b16 %v3745
        %v3937 = vunpack.c.l.b16 %v3746
        %v3938 = vunpack.c.h.b16 %v3746
        %v3939 = vunpack.c.l.b16 %v3747
        %v3940 = vunpack.c.h.b16 %v3747
        %v3941 = vunpack.c.l.b16 %v3748
        %v3942 = vunpack.c.h.b16 %v3748
        %v3943 = vunpack.c.l.b16 %v3749
        %v3944 = vunpack.c.h.b16 %v3749
        %v3945 = vunpack.c.l.b16 %v3750
        %v3946 = vunpack.c.h.b16 %v3750
        %v3947 = vunpack.c.l.b16 %v3751
        %v3948 = vunpack.c.h.b16 %v3751
        %v3949 = vunpack.c.l.b16 %v3752
        %v3950 = vunpack.c.h.b16 %v3752
        %v3951 = vunpack.c.l.b16 %v3753
        %v3952 = vunpack.c.h.b16 %v3753
        %v3953 = vunpack.c.l.b16 %v3754
        %v3954 = vunpack.c.h.b16 %v3754
        %v3955 = vunpack.c.l.b16 %v3755
        %v3956 = vunpack.c.h.b16 %v3755
        %v3957 = vunpack.c.l.b16 %v3756
        %v3958 = vunpack.c.h.b16 %v3756
        %v3959 = vunpack.c.l.b16 %v3757
        %v3960 = vunpack.c.h.b16 %v3757
        %v3961 = vunpack.c.l.b16 %v3758
        %v3962 = vunpack.c.h.b16 %v3758
        %v3963 = vunpack.c.l.b16 %v3759
        %v3964 = vunpack.c.h.b16 %v3759
        %v3965 = vunpack.c.l.b16 %v3760
        %v3966 = vunpack.c.h.b16 %v3760
        %v3967 = vunpack.c.l.b16 %v3761
        %v3968 = vunpack.c.h.b16 %v3761
        %v3969 = vunpack.c.l.b16 %v3762
        %v3970 = vunpack.c.h.b16 %v3762
        %v3971 = vunpack.c.l.b16 %v3763
        %v3972 = vunpack.c.h.b16 %v3763
        %v3973 = vunpack.c.l.b16 %v3764
        %v3974 = vunpack.c.h.b16 %v3764
        %v3975 = vunpack.c.l.b16 %v3765
        %v3976 = vunpack.c.h.b16 %v3765
        %v3977 = vunpack.c.l.b16 %v3766
        %v3978 = vunpack.c.h.b16 %v3766
        %v3979 = vunpack.c.l.b16 %v3767
        %v3980 = vunpack.c.h.b16 %v3767
        %v3981 = vunpack.c.l.b16 %v3768
        %v3982 = vunpack.c.h.b16 %v3768
        %v3983 = vunpack.c.l.b16 %v3769
        %v3984 = vunpack.c.h.b16 %v3769
        %v3985 = vunpack.c.l.b16 %v3770
        %v3986 = vunpack.c.h.b16 %v3770
        %v3987 = vunpack.c.l.b16 %v3771
        %v3988 = vunpack.c.h.b16 %v3771
        %v3989 = vunpack.c.l.b16 %v3772
        %v3990 = vunpack.c.h.b16 %v3772
        %v3991 = vunpack.c.l.b16 %v3773
        %v3992 = vunpack.c.h.b16 %v3773
        %v3993 = vunpack.c.l.b16 %v3774
        %v3994 = vunpack.c.h.b16 %v3774
        %v3995 = vunpack.c.l.b16 %v3775
        %v3996 = vunpack.c.h.b16 %v3775
        %v3997 = vunpack.c.l.b16 %v3776
        %v3998 = vunpack.c.h.b16 %v3776
        %v3999 = vunpack.c.l.b16 %v3777
        %v4000 = vunpack.c.h.b16 %v3777
        %v4001 = vunpack.c.l.b16 %v3778
        %v4002 = vunpack.c.h.b16 %v3778
        %v4003 = vunpack.c.l.b16 %v3779
        %v4004 = vunpack.c.h.b16 %v3779
        %v4005 = vunpack.c.l.b16 %v3780
        %v4006 = vunpack.c.h.b16 %v3780
        %v4007 = vunpack.c.l.b16 %v3781
        %v4008 = vunpack.c.h.b16 %v3781
        %v4009 = vunpack.c.l.b16 %v3782
        %v4010 = vunpack.c.h.b16 %v3782
        %v4011 = vunpack.c.l.b16 %v3783
        %v4012 = vunpack.c.h.b16 %v3783
        %v4013 = vunpack.c.l.b16 %v3784
        %v4014 = vunpack.c.h.b16 %v3784
        %v4015 = vunpack.c.l.b16 %v3785
        %v4016 = vunpack.c.h.b16 %v3785
        %v4017 = vunpack.c.l.b16 %v3786
        %v4018 = vunpack.c.h.b16 %v3786
        %v4019 = vunpack.c.l.b16 %v3787
        %v4020 = vunpack.c.h.b16 %v3787
        %v4021 = vunpack.c.l.b16 %v3788
        %v4022 = vunpack.c.h.b16 %v3788
        %v4023 = vunpack.c.l.b16 %v3789
        %v4024 = vunpack.c.h.b16 %v3789
        %v4025 = vunpack.c.l.b16 %v3790
        %v4026 = vunpack.c.h.b16 %v3790
        %v4027 = vunpack.c.l.b16 %v3791
        %v4028 = vunpack.c.h.b16 %v3791
        %v4029 = vunpack.c.l.b16 %v3792
        %v4030 = vunpack.c.h.b16 %v3792
        %v4031 = vunpack.c.l.b16 %v3793
        %v4032 = vunpack.c.h.b16 %v3793
        %v4033 = vunpack.c.l.b16 %v3794
        %v4034 = vunpack.c.h.b16 %v3794
        %v4035 = vpack.c.b16 %v3885, %v3875
        %v4036 = vpack.c.b16 %v3886, %v3876
        %v4037 = vpack.c.b16 %v3887, %v3877
        %v4038 = vpack.c.b16 %v3888, %v3878
        %v4039 = vpack.c.b16 %v3889, %v3879
        %v4040 = vpack.c.b16 %v3890, %v3880
        %v4041 = vpack.c.b16 %v3891, %v3881
        %v4042 = vpack.c.b16 %v3892, %v3882
        %v4043 = vpack.c.b16 %v3893, %v3883
        %v4044 = vpack.c.b16 %v3894, %v3884
        %v4045 = vpack.c.b16 %v3905, %v3895
        %v4046 = vpack.c.b16 %v3906, %v3896
        %v4047 = vpack.c.b16 %v3907, %v3897
        %v4048 = vpack.c.b16 %v3908, %v3898
        %v4049 = vpack.c.b16 %v3909, %v3899
        %v4050 = vpack.c.b16 %v3910, %v3900
        %v4051 = vpack.c.b16 %v3911, %v3901
        %v4052 = vpack.c.b16 %v3912, %v3902
        %v4053 = vpack.c.b16 %v3913, %v3903
        %v4054 = vpack.c.b16 %v3914, %v3904
        %v4055 = vpack.c.b16 %v3925, %v3915
        %v4056 = vpack.c.b16 %v3926, %v3916
        %v4057 = vpack.c.b16 %v3927, %v3917
        %v4058 = vpack.c.b16 %v3928, %v3918
        %v4059 = vpack.c.b16 %v3929, %v3919
        %v4060 = vpack.c.b16 %v3930, %v3920
        %v4061 = vpack.c.b16 %v3931, %v3921
        %v4062 = vpack.c.b16 %v3932, %v3922
        %v4063 = vpack.c.b16 %v3933, %v3923
        %v4064 = vpack.c.b16 %v3934, %v3924
        %v4065 = vpack.c.b16 %v3945, %v3935
        %v4066 = vpack.c.b16 %v3946, %v3936
        %v4067 = vpack.c.b16 %v3947, %v3937
        %v4068 = vpack.c.b16 %v3948, %v3938
        %v4069 = vpack.c.b16 %v3949, %v3939
        %v4070 = vpack.c.b16 %v3950, %v3940
        %v4071 = vpack.c.b16 %v3951, %v3941
        %v4072 = vpack.c.b16 %v3952, %v3942
        %v4073 = vpack.c.b16 %v3953, %v3943
        %v4074 = vpack.c.b16 %v3954, %v3944
        %v4075 = vpack.c.b16 %v3965, %v3955
        %v4076 = vpack.c.b16 %v3966, %v3956
        %v4077 = vpack.c.b16 %v3967, %v3957
        %v4078 = vpack.c.b16 %v3968, %v3958
        %v4079 = vpack.c.b16 %v3969, %v3959
        %v4080 = vpack.c.b16 %v3970, %v3960
        %v4081 = vpack.c.b16 %v3971, %v3961
        %v4082 = vpack.c.b16 %v3972, %v3962
        %v4083 = vpack.c.b16 %v3973, %v3963
        %v4084 = vpack.c.b16 %v3974, %v3964
        %v4085 = vpack.c.b16 %v3985, %v3975
        %v4086 = vpack.c.b16 %v3986, %v3976
        %v4087 = vpack.c.b16 %v3987, %v3977
        %v4088 = vpack.c.b16 %v3988, %v3978
        %v4089 = vpack.c.b16 %v3989, %v3979
        %v4090 = vpack.c.b16 %v3990, %v3980
        %v4091 = vpack.c.b16 %v3991, %v3981
        %v4092 = vpack.c.b16 %v3992, %v3982
        %v4093 = vpack.c.b16 %v3993, %v3983
        %v4094 = vpack.c.b16 %v3994, %v3984
        %v4095 = vpack.c.b16 %v4005, %v3995
        %v4096 = vpack.c.b16 %v4006, %v3996
        %v4097 = vpack.c.b16 %v4007, %v3997
        %v4098 = vpack.c.b16 %v4008, %v3998
        %v4099 = vpack.c.b16 %v4009, %v3999
        %v4100 = vpack.c.b16 %v4010, %v4000
        %v4101 = vpack.c.b16 %v4011, %v4001
        %v4102 = vpack.c.b16 %v4012, %v4002
        %v4103 = vpack.c.b16 %v4013, %v4003
        %v4104 = vpack.c.b16 %v4014, %v4004
        %v4105 = vpack.c.b16 %v4025, %v4015
        %v4106 = vpack.c.b16 %v4026, %v4016
        %v4107 = vpack.c.b16 %v4027, %v4017
        %v4108 = vpack.c.b16 %v4028, %v4018
        %v4109 = vpack.c.b16 %v4029, %v4019
        %v4110 = vpack.c.b16 %v4030, %v4020
        %v4111 = vpack.c.b16 %v4031, %v4021
        %v4112 = vpack.c.b16 %v4032, %v4022
        %v4113 = vpack.c.b16 %v4033, %v4023
        %v4114 = vpack.c.b16 %v4034, %v4024
        %4195 = vmatprep.subr.bf16.mxu0 %v4036
        %4196 = vmatpush1.bf16.msra.mxu0 %v4035
        %4197 = vmatprep.subr.bf16.mxu0 %v4046
        %4198 = vmatpush1.bf16.msra.mxu0 %v4045
        %4199 = vmatprep.subr.bf16.mxu0 %v4056
        %4200 = vmatpush1.bf16.msra.mxu0 %v4055
        %4201 = vmatprep.subr.bf16.mxu0 %v4066
        %4202 = vmatpush1.bf16.msra.mxu0 %v4065
        %4203 = vmatprep.subr.bf16.mxu0 %v4076
        %4204 = vmatpush1.bf16.msra.mxu0 %v4075
        %4205 = vmatprep.subr.bf16.mxu0 %v4086
        %4206 = vmatpush1.bf16.msra.mxu0 %v4085
        %4207 = vmatprep.subr.bf16.mxu0 %v4096
        %4208 = vmatpush1.bf16.msra.mxu0 %v4095
        %4209 = vmatprep.subr.bf16.mxu0 %v4106
        %4210 = vmatpush1.bf16.msra.mxu0 %v4105
        %4211 = vmatprep.subr.bf16.mxu0 0
        %4212 = vmatpush1.bf16.msra.mxu0 0
        %4213 = vmatprep.subr.bf16.mxu0 0
        %4214 = vmatpush1.bf16.msra.mxu0 0
        %4215 = vmatprep.subr.bf16.mxu0 0
        %4216 = vmatpush1.bf16.msra.mxu0 0
        %4217 = vmatprep.subr.bf16.mxu0 0
        %4218 = vmatpush1.bf16.msra.mxu0 0
        %4219 = vmatprep.subr.bf16.mxu0 0
        %4220 = vmatpush1.bf16.msra.mxu0 0
        %4221 = vmatprep.subr.bf16.mxu0 0
        %4222 = vmatpush1.bf16.msra.mxu0 0
        %4223 = vmatprep.subr.bf16.mxu0 0
        %4224 = vmatpush1.bf16.msra.mxu0 0
        %4225 = vmatprep.subr.bf16.mxu0 0
        %4226 = vmatpush1.bf16.msra.mxu0 0
        %4227 = vmatprep.mubr.bf16.mxu0 0
        %4228 = vmatmul.mubr.bf16.gmra.mrb[0].mxu0 %v3707
        %v4229 = vpop.f32.mrb[0].mxu0
        %v4230 = vadd.f32 0.0, %v4229
        %v4231 = vpop.f32.mrb[0].mxu0
        %v4232 = vadd.f32 0.0, %v4231
        %v4233 = vpop.f32.mrb[0].mxu0
        %v4234 = vadd.f32 0.0, %v4233
        %v4235 = vpop.f32.mrb[0].mxu0
        %v4236 = vadd.f32 0.0, %v4235
        %4237 = vmatprep.mubr.bf16.mxu0 0
        %4238 = vmatmul.mubr.bf16.gmra.mrb[0].mxu0 %v3708
        %v4239 = vpop.f32.mrb[0].mxu0
        %v4240 = vadd.f32 0.0, %v4239
        %v4241 = vpop.f32.mrb[0].mxu0
        %v4242 = vadd.f32 0.0, %v4241
        %v4243 = vpop.f32.mrb[0].mxu0
        %v4244 = vadd.f32 0.0, %v4243
        %v4245 = vpop.f32.mrb[0].mxu0
        %v4246 = vadd.f32 0.0, %v4245
        %4247 = vmatprep.mubr.bf16.mxu0 0
        %4248 = vmatmul.mubr.bf16.gmra.mrb[0].mxu0 %v3709
        %v4249 = vpop.f32.mrb[0].mxu0
        %v4250 = vadd.f32 0.0, %v4249
        %v4251 = vpop.f32.mrb[0].mxu0
        %v4252 = vadd.f32 0.0, %v4251
        %v4253 = vpop.f32.mrb[0].mxu0
        %v4254 = vadd.f32 0.0, %v4253
        %v4255 = vpop.f32.mrb[0].mxu0
        %v4256 = vadd.f32 0.0, %v4255
        %4257 = vmatprep.mubr.bf16.mxu0 0
        %4258 = vmatmul.mubr.bf16.gmra.mrb[0].mxu0 %v3710
        %v4259 = vpop.f32.mrb[0].mxu0
        %v4260 = vadd.f32 0.0, %v4259
        %v4261 = vpop.f32.mrb[0].mxu0
        %v4262 = vadd.f32 0.0, %v4261
        %v4263 = vpop.f32.mrb[0].mxu0
        %v4264 = vadd.f32 0.0, %v4263
        %v4265 = vpop.f32.mrb[0].mxu0
        %v4266 = vadd.f32 0.0, %v4265
        %4267 = vmatprep.mubr.bf16.mxu0 0
        %4268 = vmatmul.mubr.bf16.gmra.mrb[0].mxu0 %v3711
        %v4269 = vpop.f32.mrb[0].mxu0
        %v4270 = vadd.f32 0.0, %v4269
        %v4271 = vpop.f32.mrb[0].mxu0
        %v4272 = vadd.f32 0.0, %v4271
        %v4273 = vpop.f32.mrb[0].mxu0
        %v4274 = vadd.f32 0.0, %v4273
        %v4275 = vpop.f32.mrb[0].mxu0
        %v4276 = vadd.f32 0.0, %v4275
        %4277 = vmatprep.mubr.bf16.mxu0 0
        %4278 = vmatmul.mubr.bf16.gmra.mrb[0].mxu0 %v3712
        %v4279 = vpop.f32.mrb[0].mxu0
        %v4280 = vadd.f32 0.0, %v4279
        %v4281 = vpop.f32.mrb[0].mxu0
        %v4282 = vadd.f32 0.0, %v4281
        %v4283 = vpop.f32.mrb[0].mxu0
        %v4284 = vadd.f32 0.0, %v4283
        %v4285 = vpop.f32.mrb[0].mxu0
        %v4286 = vadd.f32 0.0, %v4285
        %4287 = vmatprep.mubr.bf16.mxu0 0
        %4288 = vmatmul.mubr.bf16.gmra.mrb[0].mxu0 %v3713
        %v4289 = vpop.f32.mrb[0].mxu0
        %v4290 = vadd.f32 0.0, %v4289
        %v4291 = vpop.f32.mrb[0].mxu0
        %v4292 = vadd.f32 0.0, %v4291
        %v4293 = vpop.f32.mrb[0].mxu0
        %v4294 = vadd.f32 0.0, %v4293
        %v4295 = vpop.f32.mrb[0].mxu0
        %v4296 = vadd.f32 0.0, %v4295
        %4297 = vmatprep.mubr.bf16.mxu0 0
        %4298 = vmatmul.mubr.bf16.gmra.mrb[0].mxu0 %v3714
        %v4299 = vpop.f32.mrb[0].mxu0
        %v4300 = vadd.f32 0.0, %v4299
        %v4301 = vpop.f32.mrb[0].mxu0
        %v4302 = vadd.f32 0.0, %v4301
        %v4303 = vpop.f32.mrb[0].mxu0
        %v4304 = vadd.f32 0.0, %v4303
        %v4305 = vpop.f32.mrb[0].mxu0
        %v4306 = vadd.f32 0.0, %v4305
        %4307 = vdwg.mxu0
        %4308 = vmatprep.subr.bf16.mxu0 %v4038
        %4309 = vmatpush1.bf16.msra.mxu0 %v4037
        %4310 = vmatprep.subr.bf16.mxu0 %v4048
        %4311 = vmatpush1.bf16.msra.mxu0 %v4047
        %4312 = vmatprep.subr.bf16.mxu0 %v4058
        %4313 = vmatpush1.bf16.msra.mxu0 %v4057
        %4314 = vmatprep.subr.bf16.mxu0 %v4068
        %4315 = vmatpush1.bf16.msra.mxu0 %v4067
        %4316 = vmatprep.subr.bf16.mxu0 %v4078
        %4317 = vmatpush1.bf16.msra.mxu0 %v4077
        %4318 = vmatprep.subr.bf16.mxu0 %v4088
        %4319 = vmatpush1.bf16.msra.mxu0 %v4087
        %4320 = vmatprep.subr.bf16.mxu0 %v4098
        %4321 = vmatpush1.bf16.msra.mxu0 %v4097
        %4322 = vmatprep.subr.bf16.mxu0 %v4108
        %4323 = vmatpush1.bf16.msra.mxu0 %v4107
        %4324 = vmatprep.subr.bf16.mxu0 0
        %4325 = vmatpush1.bf16.msra.mxu0 0
        %4326 = vmatprep.subr.bf16.mxu0 0
        %4327 = vmatpush1.bf16.msra.mxu0 0
        %4328 = vmatprep.subr.bf16.mxu0 0
        %4329 = vmatpush1.bf16.msra.mxu0 0
        %4330 = vmatprep.subr.bf16.mxu0 0
        %4331 = vmatpush1.bf16.msra.mxu0 0
        %4332 = vmatprep.subr.bf16.mxu0 0
        %4333 = vmatpush1.bf16.msra.mxu0 0
        %4334 = vmatprep.subr.bf16.mxu0 0
        %4335 = vmatpush1.bf16.msra.mxu0 0
        %4336 = vmatprep.subr.bf16.mxu0 0
        %4337 = vmatpush1.bf16.msra.mxu0 0
        %4338 = vmatprep.subr.bf16.mxu0 0
        %4339 = vmatpush1.bf16.msra.mxu0 0
        %4340 = vmatprep.mubr.bf16.mxu0 0
        %4341 = vmatmul.mubr.bf16.gmra.mrb[0].mxu0 %v3707
        %v4342 = vpop.f32.mrb[0].mxu0
        %v4343 = vadd.f32 0.0, %v4342
        %v4344 = vpop.f32.mrb[0].mxu0
        %v4345 = vadd.f32 0.0, %v4344
        %v4346 = vpop.f32.mrb[0].mxu0
        %v4347 = vadd.f32 0.0, %v4346
        %v4348 = vpop.f32.mrb[0].mxu0
        %v4349 = vadd.f32 0.0, %v4348
        %4350 = vmatprep.mubr.bf16.mxu0 0
        %4351 = vmatmul.mubr.bf16.gmra.mrb[0].mxu0 %v3708
        %v4352 = vpop.f32.mrb[0].mxu0
        %v4353 = vadd.f32 0.0, %v4352
        %v4354 = vpop.f32.mrb[0].mxu0
        %v4355 = vadd.f32 0.0, %v4354
        %v4356 = vpop.f32.mrb[0].mxu0
        %v4357 = vadd.f32 0.0, %v4356
        %v4358 = vpop.f32.mrb[0].mxu0
        %v4359 = vadd.f32 0.0, %v4358
        %4360 = vmatprep.mubr.bf16.mxu0 0
        %4361 = vmatmul.mubr.bf16.gmra.mrb[0].mxu0 %v3709
        %v4362 = vpop.f32.mrb[0].mxu0
        %v4363 = vadd.f32 0.0, %v4362
        %v4364 = vpop.f32.mrb[0].mxu0
        %v4365 = vadd.f32 0.0, %v4364
        %v4366 = vpop.f32.mrb[0].mxu0
        %v4367 = vadd.f32 0.0, %v4366
        %v4368 = vpop.f32.mrb[0].mxu0
        %v4369 = vadd.f32 0.0, %v4368
        %4370 = vmatprep.mubr.bf16.mxu0 0
        %4371 = vmatmul.mubr.bf16.gmra.mrb[0].mxu0 %v3710
        %v4372 = vpop.f32.mrb[0].mxu0
        %v4373 = vadd.f32 0.0, %v4372
        %v4374 = vpop.f32.mrb[0].mxu0
        %v4375 = vadd.f32 0.0, %v4374
        %v4376 = vpop.f32.mrb[0].mxu0
        %v4377 = vadd.f32 0.0, %v4376
        %v4378 = vpop.f32.mrb[0].mxu0
        %v4379 = vadd.f32 0.0, %v4378
        %4380 = vmatprep.mubr.bf16.mxu0 0
        %4381 = vmatmul.mubr.bf16.gmra.mrb[0].mxu0 %v3711
        %v4382 = vpop.f32.mrb[0].mxu0
        %v4383 = vadd.f32 0.0, %v4382
        %v4384 = vpop.f32.mrb[0].mxu0
        %v4385 = vadd.f32 0.0, %v4384
        %v4386 = vpop.f32.mrb[0].mxu0
        %v4387 = vadd.f32 0.0, %v4386
        %v4388 = vpop.f32.mrb[0].mxu0
        %v4389 = vadd.f32 0.0, %v4388
        %4390 = vmatprep.mubr.bf16.mxu0 0
        %4391 = vmatmul.mubr.bf16.gmra.mrb[0].mxu0 %v3712
        %v4392 = vpop.f32.mrb[0].mxu0
        %v4393 = vadd.f32 0.0, %v4392
        %v4394 = vpop.f32.mrb[0].mxu0
        %v4395 = vadd.f32 0.0, %v4394
        %v4396 = vpop.f32.mrb[0].mxu0
        %v4397 = vadd.f32 0.0, %v4396
        %v4398 = vpop.f32.mrb[0].mxu0
        %v4399 = vadd.f32 0.0, %v4398
        %4400 = vmatprep.mubr.bf16.mxu0 0
        %4401 = vmatmul.mubr.bf16.gmra.mrb[0].mxu0 %v3713
        %v4402 = vpop.f32.mrb[0].mxu0
        %v4403 = vadd.f32 0.0, %v4402
        %v4404 = vpop.f32.mrb[0].mxu0
        %v4405 = vadd.f32 0.0, %v4404
        %v4406 = vpop.f32.mrb[0].mxu0
        %v4407 = vadd.f32 0.0, %v4406
        %v4408 = vpop.f32.mrb[0].mxu0
        %v4409 = vadd.f32 0.0, %v4408
        %4410 = vmatprep.mubr.bf16.mxu0 0
        %4411 = vmatmul.mubr.bf16.gmra.mrb[0].mxu0 %v3714
        %v4412 = vpop.f32.mrb[0].mxu0
        %v4413 = vadd.f32 0.0, %v4412
        %v4414 = vpop.f32.mrb[0].mxu0
        %v4415 = vadd.f32 0.0, %v4414
        %v4416 = vpop.f32.mrb[0].mxu0
        %v4417 = vadd.f32 0.0, %v4416
        %v4418 = vpop.f32.mrb[0].mxu0
        %v4419 = vadd.f32 0.0, %v4418
        %4420 = vdwg.mxu0
        %4421 = vmatprep.subr.bf16.mxu0 %v4040
        %4422 = vmatpush1.bf16.msra.mxu0 %v4039
        %4423 = vmatprep.subr.bf16.mxu0 %v4050
        %4424 = vmatpush1.bf16.msra.mxu0 %v4049
        %4425 = vmatprep.subr.bf16.mxu0 %v4060
        %4426 = vmatpush1.bf16.msra.mxu0 %v4059
        %4427 = vmatprep.subr.bf16.mxu0 %v4070
        %4428 = vmatpush1.bf16.msra.mxu0 %v4069
        %4429 = vmatprep.subr.bf16.mxu0 %v4080
        %4430 = vmatpush1.bf16.msra.mxu0 %v4079
        %4431 = vmatprep.subr.bf16.mxu0 %v4090
        %4432 = vmatpush1.bf16.msra.mxu0 %v4089
        %4433 = vmatprep.subr.bf16.mxu0 %v4100
        %4434 = vmatpush1.bf16.msra.mxu0 %v4099
        %4435 = vmatprep.subr.bf16.mxu0 %v4110
        %4436 = vmatpush1.bf16.msra.mxu0 %v4109
        %4437 = vmatprep.subr.bf16.mxu0 0
        %4438 = vmatpush1.bf16.msra.mxu0 0
        %4439 = vmatprep.subr.bf16.mxu0 0
        %4440 = vmatpush1.bf16.msra.mxu0 0
        %4441 = vmatprep.subr.bf16.mxu0 0
        %4442 = vmatpush1.bf16.msra.mxu0 0
        %4443 = vmatprep.subr.bf16.mxu0 0
        %4444 = vmatpush1.bf16.msra.mxu0 0
        %4445 = vmatprep.subr.bf16.mxu0 0
        %4446 = vmatpush1.bf16.msra.mxu0 0
        %4447 = vmatprep.subr.bf16.mxu0 0
        %4448 = vmatpush1.bf16.msra.mxu0 0
        %4449 = vmatprep.subr.bf16.mxu0 0
        %4450 = vmatpush1.bf16.msra.mxu0 0
        %4451 = vmatprep.subr.bf16.mxu0 0
        %4452 = vmatpush1.bf16.msra.mxu0 0
        %4453 = vmatprep.mubr.bf16.mxu0 0
        %4454 = vmatmul.mubr.bf16.gmra.mrb[0].mxu0 %v3707
        %v4455 = vpop.f32.mrb[0].mxu0
        %v4456 = vadd.f32 0.0, %v4455
        %v4457 = vpop.f32.mrb[0].mxu0
        %v4458 = vadd.f32 0.0, %v4457
        %v4459 = vpop.f32.mrb[0].mxu0
        %v4460 = vadd.f32 0.0, %v4459
        %v4461 = vpop.f32.mrb[0].mxu0
        %v4462 = vadd.f32 0.0, %v4461
        %4463 = vmatprep.mubr.bf16.mxu0 0
        %4464 = vmatmul.mubr.bf16.gmra.mrb[0].mxu0 %v3708
        %v4465 = vpop.f32.mrb[0].mxu0
        %v4466 = vadd.f32 0.0, %v4465
        %v4467 = vpop.f32.mrb[0].mxu0
        %v4468 = vadd.f32 0.0, %v4467
        %v4469 = vpop.f32.mrb[0].mxu0
        %v4470 = vadd.f32 0.0, %v4469
        %v4471 = vpop.f32.mrb[0].mxu0
        %v4472 = vadd.f32 0.0, %v4471
        %4473 = vmatprep.mubr.bf16.mxu0 0
        %4474 = vmatmul.mubr.bf16.gmra.mrb[0].mxu0 %v3709
        %v4475 = vpop.f32.mrb[0].mxu0
        %v4476 = vadd.f32 0.0, %v4475
        %v4477 = vpop.f32.mrb[0].mxu0
        %v4478 = vadd.f32 0.0, %v4477
        %v4479 = vpop.f32.mrb[0].mxu0
        %v4480 = vadd.f32 0.0, %v4479
        %v4481 = vpop.f32.mrb[0].mxu0
        %v4482 = vadd.f32 0.0, %v4481
        %4483 = vmatprep.mubr.bf16.mxu0 0
        %4484 = vmatmul.mubr.bf16.gmra.mrb[0].mxu0 %v3710
        %v4485 = vpop.f32.mrb[0].mxu0
        %v4486 = vadd.f32 0.0, %v4485
        %v4487 = vpop.f32.mrb[0].mxu0
        %v4488 = vadd.f32 0.0, %v4487
        %v4489 = vpop.f32.mrb[0].mxu0
        %v4490 = vadd.f32 0.0, %v4489
        %v4491 = vpop.f32.mrb[0].mxu0
        %v4492 = vadd.f32 0.0, %v4491
        %4493 = vmatprep.mubr.bf16.mxu0 0
        %4494 = vmatmul.mubr.bf16.gmra.mrb[0].mxu0 %v3711
        %v4495 = vpop.f32.mrb[0].mxu0
        %v4496 = vadd.f32 0.0, %v4495
        %v4497 = vpop.f32.mrb[0].mxu0
        %v4498 = vadd.f32 0.0, %v4497
        %v4499 = vpop.f32.mrb[0].mxu0
        %v4500 = vadd.f32 0.0, %v4499
        %v4501 = vpop.f32.mrb[0].mxu0
        %v4502 = vadd.f32 0.0, %v4501
        %4503 = vmatprep.mubr.bf16.mxu0 0
        %4504 = vmatmul.mubr.bf16.gmra.mrb[0].mxu0 %v3712
        %v4505 = vpop.f32.mrb[0].mxu0
        %v4506 = vadd.f32 0.0, %v4505
        %v4507 = vpop.f32.mrb[0].mxu0
        %v4508 = vadd.f32 0.0, %v4507
        %v4509 = vpop.f32.mrb[0].mxu0
        %v4510 = vadd.f32 0.0, %v4509
        %v4511 = vpop.f32.mrb[0].mxu0
        %v4512 = vadd.f32 0.0, %v4511
        %4513 = vmatprep.mubr.bf16.mxu0 0
        %4514 = vmatmul.mubr.bf16.gmra.mrb[0].mxu0 %v3713
        %v4515 = vpop.f32.mrb[0].mxu0
        %v4516 = vadd.f32 0.0, %v4515
        %v4517 = vpop.f32.mrb[0].mxu0
        %v4518 = vadd.f32 0.0, %v4517
        %v4519 = vpop.f32.mrb[0].mxu0
        %v4520 = vadd.f32 0.0, %v4519
        %v4521 = vpop.f32.mrb[0].mxu0
        %v4522 = vadd.f32 0.0, %v4521
        %4523 = vmatprep.mubr.bf16.mxu0 0
        %4524 = vmatmul.mubr.bf16.gmra.mrb[0].mxu0 %v3714
        %v4525 = vpop.f32.mrb[0].mxu0
        %v4526 = vadd.f32 0.0, %v4525
        %v4527 = vpop.f32.mrb[0].mxu0
        %v4528 = vadd.f32 0.0, %v4527
        %v4529 = vpop.f32.mrb[0].mxu0
        %v4530 = vadd.f32 0.0, %v4529
        %v4531 = vpop.f32.mrb[0].mxu0
        %v4532 = vadd.f32 0.0, %v4531
        %4533 = vdwg.mxu0
        %4534 = vmatprep.subr.bf16.mxu0 %v4042
        %4535 = vmatpush1.bf16.msra.mxu0 %v4041
        %4536 = vmatprep.subr.bf16.mxu0 %v4052
        %4537 = vmatpush1.bf16.msra.mxu0 %v4051
        %4538 = vmatprep.subr.bf16.mxu0 %v4062
        %4539 = vmatpush1.bf16.msra.mxu0 %v4061
        %4540 = vmatprep.subr.bf16.mxu0 %v4072
        %4541 = vmatpush1.bf16.msra.mxu0 %v4071
        %4542 = vmatprep.subr.bf16.mxu0 %v4082
        %4543 = vmatpush1.bf16.msra.mxu0 %v4081
        %4544 = vmatprep.subr.bf16.mxu0 %v4092
        %4545 = vmatpush1.bf16.msra.mxu0 %v4091
        %4546 = vmatprep.subr.bf16.mxu0 %v4102
        %4547 = vmatpush1.bf16.msra.mxu0 %v4101
        %4548 = vmatprep.subr.bf16.mxu0 %v4112
        %4549 = vmatpush1.bf16.msra.mxu0 %v4111
        %4550 = vmatprep.subr.bf16.mxu0 0
        %4551 = vmatpush1.bf16.msra.mxu0 0
        %4552 = vmatprep.subr.bf16.mxu0 0
        %4553 = vmatpush1.bf16.msra.mxu0 0
        %4554 = vmatprep.subr.bf16.mxu0 0
        %4555 = vmatpush1.bf16.msra.mxu0 0
        %4556 = vmatprep.subr.bf16.mxu0 0
        %4557 = vmatpush1.bf16.msra.mxu0 0
        %4558 = vmatprep.subr.bf16.mxu0 0
        %4559 = vmatpush1.bf16.msra.mxu0 0
        %4560 = vmatprep.subr.bf16.mxu0 0
        %4561 = vmatpush1.bf16.msra.mxu0 0
        %4562 = vmatprep.subr.bf16.mxu0 0
        %4563 = vmatpush1.bf16.msra.mxu0 0
        %4564 = vmatprep.subr.bf16.mxu0 0
        %4565 = vmatpush1.bf16.msra.mxu0 0
        %4566 = vmatprep.mubr.bf16.mxu0 0
        %4567 = vmatmul.mubr.bf16.gmra.mrb[0].mxu0 %v3707
        %v4568 = vpop.f32.mrb[0].mxu0
        %v4569 = vadd.f32 0.0, %v4568
        %v4570 = vpop.f32.mrb[0].mxu0
        %v4571 = vadd.f32 0.0, %v4570
        %v4572 = vpop.f32.mrb[0].mxu0
        %v4573 = vadd.f32 0.0, %v4572
        %v4574 = vpop.f32.mrb[0].mxu0
        %v4575 = vadd.f32 0.0, %v4574
        %4576 = vmatprep.mubr.bf16.mxu0 0
        %4577 = vmatmul.mubr.bf16.gmra.mrb[0].mxu0 %v3708
        %v4578 = vpop.f32.mrb[0].mxu0
        %v4579 = vadd.f32 0.0, %v4578
        %v4580 = vpop.f32.mrb[0].mxu0
        %v4581 = vadd.f32 0.0, %v4580
        %v4582 = vpop.f32.mrb[0].mxu0
        %v4583 = vadd.f32 0.0, %v4582
        %v4584 = vpop.f32.mrb[0].mxu0
        %v4585 = vadd.f32 0.0, %v4584
        %4586 = vmatprep.mubr.bf16.mxu0 0
        %4587 = vmatmul.mubr.bf16.gmra.mrb[0].mxu0 %v3709
        %v4588 = vpop.f32.mrb[0].mxu0
        %v4589 = vadd.f32 0.0, %v4588
        %v4590 = vpop.f32.mrb[0].mxu0
        %v4591 = vadd.f32 0.0, %v4590
        %v4592 = vpop.f32.mrb[0].mxu0
        %v4593 = vadd.f32 0.0, %v4592
        %v4594 = vpop.f32.mrb[0].mxu0
        %v4595 = vadd.f32 0.0, %v4594
        %4596 = vmatprep.mubr.bf16.mxu0 0
        %4597 = vmatmul.mubr.bf16.gmra.mrb[0].mxu0 %v3710
        %v4598 = vpop.f32.mrb[0].mxu0
        %v4599 = vadd.f32 0.0, %v4598
        %v4600 = vpop.f32.mrb[0].mxu0
        %v4601 = vadd.f32 0.0, %v4600
        %v4602 = vpop.f32.mrb[0].mxu0
        %v4603 = vadd.f32 0.0, %v4602
        %v4604 = vpop.f32.mrb[0].mxu0
        %v4605 = vadd.f32 0.0, %v4604
        %4606 = vmatprep.mubr.bf16.mxu0 0
        %4607 = vmatmul.mubr.bf16.gmra.mrb[0].mxu0 %v3711
        %v4608 = vpop.f32.mrb[0].mxu0
        %v4609 = vadd.f32 0.0, %v4608
        %v4610 = vpop.f32.mrb[0].mxu0
        %v4611 = vadd.f32 0.0, %v4610
        %v4612 = vpop.f32.mrb[0].mxu0
        %v4613 = vadd.f32 0.0, %v4612
        %v4614 = vpop.f32.mrb[0].mxu0
        %v4615 = vadd.f32 0.0, %v4614
        %4616 = vmatprep.mubr.bf16.mxu0 0
        %4617 = vmatmul.mubr.bf16.gmra.mrb[0].mxu0 %v3712
        %v4618 = vpop.f32.mrb[0].mxu0
        %v4619 = vadd.f32 0.0, %v4618
        %v4620 = vpop.f32.mrb[0].mxu0
        %v4621 = vadd.f32 0.0, %v4620
        %v4622 = vpop.f32.mrb[0].mxu0
        %v4623 = vadd.f32 0.0, %v4622
        %v4624 = vpop.f32.mrb[0].mxu0
        %v4625 = vadd.f32 0.0, %v4624
        %4626 = vmatprep.mubr.bf16.mxu0 0
        %4627 = vmatmul.mubr.bf16.gmra.mrb[0].mxu0 %v3713
        %v4628 = vpop.f32.mrb[0].mxu0
        %v4629 = vadd.f32 0.0, %v4628
        %v4630 = vpop.f32.mrb[0].mxu0
        %v4631 = vadd.f32 0.0, %v4630
        %v4632 = vpop.f32.mrb[0].mxu0
        %v4633 = vadd.f32 0.0, %v4632
        %v4634 = vpop.f32.mrb[0].mxu0
        %v4635 = vadd.f32 0.0, %v4634
        %4636 = vmatprep.mubr.bf16.mxu0 0
        %4637 = vmatmul.mubr.bf16.gmra.mrb[0].mxu0 %v3714
        %v4638 = vpop.f32.mrb[0].mxu0
        %v4639 = vadd.f32 0.0, %v4638
        %v4640 = vpop.f32.mrb[0].mxu0
        %v4641 = vadd.f32 0.0, %v4640
        %v4642 = vpop.f32.mrb[0].mxu0
        %v4643 = vadd.f32 0.0, %v4642
        %v4644 = vpop.f32.mrb[0].mxu0
        %v4645 = vadd.f32 0.0, %v4644
        %4646 = vdwg.mxu0
        %4647 = vmatprep.subr.bf16.mxu0 %v4044
        %4648 = vmatpush1.bf16.msra.mxu0 %v4043
        %4649 = vmatprep.subr.bf16.mxu0 %v4054
        %4650 = vmatpush1.bf16.msra.mxu0 %v4053
        %4651 = vmatprep.subr.bf16.mxu0 %v4064
        %4652 = vmatpush1.bf16.msra.mxu0 %v4063
        %4653 = vmatprep.subr.bf16.mxu0 %v4074
        %4654 = vmatpush1.bf16.msra.mxu0 %v4073
        %4655 = vmatprep.subr.bf16.mxu0 %v4084
        %4656 = vmatpush1.bf16.msra.mxu0 %v4083
        %4657 = vmatprep.subr.bf16.mxu0 %v4094
        %4658 = vmatpush1.bf16.msra.mxu0 %v4093
        %4659 = vmatprep.subr.bf16.mxu0 %v4104
        %4660 = vmatpush1.bf16.msra.mxu0 %v4103
        %4661 = vmatprep.subr.bf16.mxu0 %v4114
        %4662 = vmatpush1.bf16.msra.mxu0 %v4113
        %4663 = vmatprep.subr.bf16.mxu0 0
        %4664 = vmatpush1.bf16.msra.mxu0 0
        %4665 = vmatprep.subr.bf16.mxu0 0
        %4666 = vmatpush1.bf16.msra.mxu0 0
        %4667 = vmatprep.subr.bf16.mxu0 0
        %4668 = vmatpush1.bf16.msra.mxu0 0
        %4669 = vmatprep.subr.bf16.mxu0 0
        %4670 = vmatpush1.bf16.msra.mxu0 0
        %4671 = vmatprep.subr.bf16.mxu0 0
        %4672 = vmatpush1.bf16.msra.mxu0 0
        %4673 = vmatprep.subr.bf16.mxu0 0
        %4674 = vmatpush1.bf16.msra.mxu0 0
        %4675 = vmatprep.subr.bf16.mxu0 0
        %4676 = vmatpush1.bf16.msra.mxu0 0
        %4677 = vmatprep.subr.bf16.mxu0 0
        %4678 = vmatpush1.bf16.msra.mxu0 0
        %4679 = vmatprep.mubr.bf16.mxu0 0
        %4680 = vmatmul.mubr.bf16.gmra.mrb[0].mxu0 %v3707
        %v4681 = vpop.f32.mrb[0].mxu0
        %v4682 = vadd.f32 0.0, %v4681
        %v4683 = vpop.f32.mrb[0].mxu0
        %v4684 = vadd.f32 0.0, %v4683
        %v4685 = vpop.f32.mrb[0].mxu0
        %v4686 = vadd.f32 0.0, %v4685
        %v4687 = vpop.f32.mrb[0].mxu0
        %v4688 = vadd.f32 0.0, %v4687
        %4689 = vmatprep.mubr.bf16.mxu0 0
        %4690 = vmatmul.mubr.bf16.gmra.mrb[0].mxu0 %v3708
        %v4691 = vpop.f32.mrb[0].mxu0
        %v4692 = vadd.f32 0.0, %v4691
        %v4693 = vpop.f32.mrb[0].mxu0
        %v4694 = vadd.f32 0.0, %v4693
        %v4695 = vpop.f32.mrb[0].mxu0
        %v4696 = vadd.f32 0.0, %v4695
        %v4697 = vpop.f32.mrb[0].mxu0
        %v4698 = vadd.f32 0.0, %v4697
        %4699 = vmatprep.mubr.bf16.mxu0 0
        %4700 = vmatmul.mubr.bf16.gmra.mrb[0].mxu0 %v3709
        %v4701 = vpop.f32.mrb[0].mxu0
        %v4702 = vadd.f32 0.0, %v4701
        %v4703 = vpop.f32.mrb[0].mxu0
        %v4704 = vadd.f32 0.0, %v4703
        %v4705 = vpop.f32.mrb[0].mxu0
        %v4706 = vadd.f32 0.0, %v4705
        %v4707 = vpop.f32.mrb[0].mxu0
        %v4708 = vadd.f32 0.0, %v4707
        %4709 = vmatprep.mubr.bf16.mxu0 0
        %4710 = vmatmul.mubr.bf16.gmra.mrb[0].mxu0 %v3710
        %v4711 = vpop.f32.mrb[0].mxu0
        %v4712 = vadd.f32 0.0, %v4711
        %v4713 = vpop.f32.mrb[0].mxu0
        %v4714 = vadd.f32 0.0, %v4713
        %v4715 = vpop.f32.mrb[0].mxu0
        %v4716 = vadd.f32 0.0, %v4715
        %v4717 = vpop.f32.mrb[0].mxu0
        %v4718 = vadd.f32 0.0, %v4717
        %4719 = vmatprep.mubr.bf16.mxu0 0
        %4720 = vmatmul.mubr.bf16.gmra.mrb[0].mxu0 %v3711
        %v4721 = vpop.f32.mrb[0].mxu0
        %v4722 = vadd.f32 0.0, %v4721
        %v4723 = vpop.f32.mrb[0].mxu0
        %v4724 = vadd.f32 0.0, %v4723
        %v4725 = vpop.f32.mrb[0].mxu0
        %v4726 = vadd.f32 0.0, %v4725
        %v4727 = vpop.f32.mrb[0].mxu0
        %v4728 = vadd.f32 0.0, %v4727
        %4729 = vmatprep.mubr.bf16.mxu0 0
        %4730 = vmatmul.mubr.bf16.gmra.mrb[0].mxu0 %v3712
        %v4731 = vpop.f32.mrb[0].mxu0
        %v4732 = vadd.f32 0.0, %v4731
        %v4733 = vpop.f32.mrb[0].mxu0
        %v4734 = vadd.f32 0.0, %v4733
        %v4735 = vpop.f32.mrb[0].mxu0
        %v4736 = vadd.f32 0.0, %v4735
        %v4737 = vpop.f32.mrb[0].mxu0
        %v4738 = vadd.f32 0.0, %v4737
        %4739 = vmatprep.mubr.bf16.mxu0 0
        %4740 = vmatmul.mubr.bf16.gmra.mrb[0].mxu0 %v3713
        %v4741 = vpop.f32.mrb[0].mxu0
        %v4742 = vadd.f32 0.0, %v4741
        %v4743 = vpop.f32.mrb[0].mxu0
        %v4744 = vadd.f32 0.0, %v4743
        %v4745 = vpop.f32.mrb[0].mxu0
        %v4746 = vadd.f32 0.0, %v4745
        %v4747 = vpop.f32.mrb[0].mxu0
        %v4748 = vadd.f32 0.0, %v4747
        %4749 = vmatprep.mubr.bf16.mxu0 0
        %4750 = vmatmul.mubr.bf16.gmra.mrb[0].mxu0 %v3714
        %v4751 = vpop.f32.mrb[0].mxu0
        %v4752 = vadd.f32 0.0, %v4751
        %v4753 = vpop.f32.mrb[0].mxu0
        %v4754 = vadd.f32 0.0, %v4753
        %v4755 = vpop.f32.mrb[0].mxu0
        %v4756 = vadd.f32 0.0, %v4755
        %v4757 = vpop.f32.mrb[0].mxu0
        %v4758 = vadd.f32 0.0, %v4757
        %4759 = vdwg.mxu0
        %v4792 = vrot.slane %v4343, 1
        %v4793 = vrot.slane %v4347, 1
        %v4794 = vsel %vm1902, %v4792, %v4793
        %v4795 = vrot.slane %v4345, 1
        %v4796 = vrot.slane %v4349, 1
        %v4797 = vsel %vm1902, %v4795, %v4796
        %v4798 = vrot.slane %v4353, 1
        %v4799 = vsel %vm1902, %v4793, %v4798
        %v4800 = vrot.slane %v4355, 1
        %v4801 = vsel %vm1902, %v4796, %v4800
        %v4802 = vrot.slane %v4357, 1
        %v4803 = vsel %vm1902, %v4798, %v4802
        %v4804 = vrot.slane %v4359, 1
        %v4805 = vsel %vm1902, %v4800, %v4804
        %v4806 = vrot.slane %v4363, 1
        %v4807 = vsel %vm1902, %v4802, %v4806
        %v4808 = vrot.slane %v4365, 1
        %v4809 = vsel %vm1902, %v4804, %v4808
        %v4810 = vrot.slane %v4367, 1
        %v4811 = vsel %vm1902, %v4806, %v4810
        %v4812 = vrot.slane %v4369, 1
        %v4813 = vsel %vm1902, %v4808, %v4812
        %v4814 = vrot.slane %v4373, 1
        %v4815 = vsel %vm1902, %v4810, %v4814
        %v4816 = vrot.slane %v4375, 1
        %v4817 = vsel %vm1902, %v4812, %v4816
        %v4818 = vrot.slane %v4377, 1
        %v4819 = vsel %vm1902, %v4814, %v4818
        %v4820 = vrot.slane %v4379, 1
        %v4821 = vsel %vm1902, %v4816, %v4820
        %v4822 = vrot.slane %v4383, 1
        %v4823 = vsel %vm1902, %v4818, %v4822
        %v4824 = vrot.slane %v4385, 1
        %v4825 = vsel %vm1902, %v4820, %v4824
        %v4826 = vrot.slane %v4387, 1
        %v4827 = vsel %vm1902, %v4822, %v4826
        %v4828 = vrot.slane %v4389, 1
        %v4829 = vsel %vm1902, %v4824, %v4828
        %v4830 = vrot.slane %v4393, 1
        %v4831 = vsel %vm1902, %v4826, %v4830
        %v4832 = vrot.slane %v4395, 1
        %v4833 = vsel %vm1902, %v4828, %v4832
        %v4834 = vrot.slane %v4397, 1
        %v4835 = vsel %vm1902, %v4830, %v4834
        %v4836 = vrot.slane %v4399, 1
        %v4837 = vsel %vm1902, %v4832, %v4836
        %v4838 = vrot.slane %v4403, 1
        %v4839 = vsel %vm1902, %v4834, %v4838
        %v4840 = vrot.slane %v4405, 1
        %v4841 = vsel %vm1902, %v4836, %v4840
        %v4842 = vrot.slane %v4407, 1
        %v4843 = vsel %vm1902, %v4838, %v4842
        %v4844 = vrot.slane %v4409, 1
        %v4845 = vsel %vm1902, %v4840, %v4844
        %v4846 = vrot.slane %v4413, 1
        %v4847 = vsel %vm1902, %v4842, %v4846
        %v4848 = vrot.slane %v4415, 1
        %v4849 = vsel %vm1902, %v4844, %v4848
        %v4850 = vrot.slane %v4417, 1
        %v4851 = vsel %vm1902, %v4846, %v4850
        %v4852 = vrot.slane %v4419, 1
        %v4853 = vsel %vm1902, %v4848, %v4852
        %v4886 = vadd.f32 %v4230, %v4794
        %v4887 = vadd.f32 %v4232, %v4797
        %v4888 = vadd.f32 %v4234, %v4799
        %v4889 = vadd.f32 %v4236, %v4801
        %v4890 = vadd.f32 %v4240, %v4803
        %v4891 = vadd.f32 %v4242, %v4805
        %v4892 = vadd.f32 %v4244, %v4807
        %v4893 = vadd.f32 %v4246, %v4809
        %v4894 = vadd.f32 %v4250, %v4811
        %v4895 = vadd.f32 %v4252, %v4813
        %v4896 = vadd.f32 %v4254, %v4815
        %v4897 = vadd.f32 %v4256, %v4817
        %v4898 = vadd.f32 %v4260, %v4819
        %v4899 = vadd.f32 %v4262, %v4821
        %v4900 = vadd.f32 %v4264, %v4823
        %v4901 = vadd.f32 %v4266, %v4825
        %v4902 = vadd.f32 %v4270, %v4827
        %v4903 = vadd.f32 %v4272, %v4829
        %v4904 = vadd.f32 %v4274, %v4831
        %v4905 = vadd.f32 %v4276, %v4833
        %v4906 = vadd.f32 %v4280, %v4835
        %v4907 = vadd.f32 %v4282, %v4837
        %v4908 = vadd.f32 %v4284, %v4839
        %v4909 = vadd.f32 %v4286, %v4841
        %v4910 = vadd.f32 %v4290, %v4843
        %v4911 = vadd.f32 %v4292, %v4845
        %v4912 = vadd.f32 %v4294, %v4847
        %v4913 = vadd.f32 %v4296, %v4849
        %v4914 = vadd.f32 %v4300, %v4851
        %v4915 = vadd.f32 %v4302, %v4853
        %v4916 = vadd.f32 %v4304, %v4850
        %v4917 = vadd.f32 %v4306, %v4852
        %v4950 = vrot.slane %v4456, 2
        %v4951 = vrot.slane %v4460, 2
        %v4952 = vsel %vm2221, %v4950, %v4951
        %v4953 = vrot.slane %v4458, 2
        %v4954 = vrot.slane %v4462, 2
        %v4955 = vsel %vm2221, %v4953, %v4954
        %v4956 = vrot.slane %v4466, 2
        %v4957 = vsel %vm2221, %v4951, %v4956
        %v4958 = vrot.slane %v4468, 2
        %v4959 = vsel %vm2221, %v4954, %v4958
        %v4960 = vrot.slane %v4470, 2
        %v4961 = vsel %vm2221, %v4956, %v4960
        %v4962 = vrot.slane %v4472, 2
        %v4963 = vsel %vm2221, %v4958, %v4962
        %v4964 = vrot.slane %v4476, 2
        %v4965 = vsel %vm2221, %v4960, %v4964
        %v4966 = vrot.slane %v4478, 2
        %v4967 = vsel %vm2221, %v4962, %v4966
        %v4968 = vrot.slane %v4480, 2
        %v4969 = vsel %vm2221, %v4964, %v4968
        %v4970 = vrot.slane %v4482, 2
        %v4971 = vsel %vm2221, %v4966, %v4970
        %v4972 = vrot.slane %v4486, 2
        %v4973 = vsel %vm2221, %v4968, %v4972
        %v4974 = vrot.slane %v4488, 2
        %v4975 = vsel %vm2221, %v4970, %v4974
        %v4976 = vrot.slane %v4490, 2
        %v4977 = vsel %vm2221, %v4972, %v4976
        %v4978 = vrot.slane %v4492, 2
        %v4979 = vsel %vm2221, %v4974, %v4978
        %v4980 = vrot.slane %v4496, 2
        %v4981 = vsel %vm2221, %v4976, %v4980
        %v4982 = vrot.slane %v4498, 2
        %v4983 = vsel %vm2221, %v4978, %v4982
        %v4984 = vrot.slane %v4500, 2
        %v4985 = vsel %vm2221, %v4980, %v4984
        %v4986 = vrot.slane %v4502, 2
        %v4987 = vsel %vm2221, %v4982, %v4986
        %v4988 = vrot.slane %v4506, 2
        %v4989 = vsel %vm2221, %v4984, %v4988
        %v4990 = vrot.slane %v4508, 2
        %v4991 = vsel %vm2221, %v4986, %v4990
        %v4992 = vrot.slane %v4510, 2
        %v4993 = vsel %vm2221, %v4988, %v4992
        %v4994 = vrot.slane %v4512, 2
        %v4995 = vsel %vm2221, %v4990, %v4994
        %v4996 = vrot.slane %v4516, 2
        %v4997 = vsel %vm2221, %v4992, %v4996
        %v4998 = vrot.slane %v4518, 2
        %v4999 = vsel %vm2221, %v4994, %v4998
        %v5000 = vrot.slane %v4520, 2
        %v5001 = vsel %vm2221, %v4996, %v5000
        %v5002 = vrot.slane %v4522, 2
        %v5003 = vsel %vm2221, %v4998, %v5002
        %v5004 = vrot.slane %v4526, 2
        %v5005 = vsel %vm2221, %v5000, %v5004
        %v5006 = vrot.slane %v4528, 2
        %v5007 = vsel %vm2221, %v5002, %v5006
        %v5008 = vrot.slane %v4530, 2
        %v5009 = vsel %vm2221, %v5004, %v5008
        %v5010 = vrot.slane %v4532, 2
        %v5011 = vsel %vm2221, %v5006, %v5010
        %v5044 = vadd.f32 %v4886, %v4952
        %v5045 = vadd.f32 %v4887, %v4955
        %v5046 = vadd.f32 %v4888, %v4957
        %v5047 = vadd.f32 %v4889, %v4959
        %v5048 = vadd.f32 %v4890, %v4961
        %v5049 = vadd.f32 %v4891, %v4963
        %v5050 = vadd.f32 %v4892, %v4965
        %v5051 = vadd.f32 %v4893, %v4967
        %v5052 = vadd.f32 %v4894, %v4969
        %v5053 = vadd.f32 %v4895, %v4971
        %v5054 = vadd.f32 %v4896, %v4973
        %v5055 = vadd.f32 %v4897, %v4975
        %v5056 = vadd.f32 %v4898, %v4977
        %v5057 = vadd.f32 %v4899, %v4979
        %v5058 = vadd.f32 %v4900, %v4981
        %v5059 = vadd.f32 %v4901, %v4983
        %v5060 = vadd.f32 %v4902, %v4985
        %v5061 = vadd.f32 %v4903, %v4987
        %v5062 = vadd.f32 %v4904, %v4989
        %v5063 = vadd.f32 %v4905, %v4991
        %v5064 = vadd.f32 %v4906, %v4993
        %v5065 = vadd.f32 %v4907, %v4995
        %v5066 = vadd.f32 %v4908, %v4997
        %v5067 = vadd.f32 %v4909, %v4999
        %v5068 = vadd.f32 %v4910, %v5001
        %v5069 = vadd.f32 %v4911, %v5003
        %v5070 = vadd.f32 %v4912, %v5005
        %v5071 = vadd.f32 %v4913, %v5007
        %v5072 = vadd.f32 %v4914, %v5009
        %v5073 = vadd.f32 %v4915, %v5011
        %v5074 = vadd.f32 %v4916, %v5008
        %v5075 = vadd.f32 %v4917, %v5010
        %v5108 = vrot.slane %v4569, 3
        %v5109 = vrot.slane %v4573, 3
        %v5110 = vsel %vm2540, %v5108, %v5109
        %v5111 = vrot.slane %v4571, 3
        %v5112 = vrot.slane %v4575, 3
        %v5113 = vsel %vm2540, %v5111, %v5112
        %v5114 = vrot.slane %v4579, 3
        %v5115 = vsel %vm2540, %v5109, %v5114
        %v5116 = vrot.slane %v4581, 3
        %v5117 = vsel %vm2540, %v5112, %v5116
        %v5118 = vrot.slane %v4583, 3
        %v5119 = vsel %vm2540, %v5114, %v5118
        %v5120 = vrot.slane %v4585, 3
        %v5121 = vsel %vm2540, %v5116, %v5120
        %v5122 = vrot.slane %v4589, 3
        %v5123 = vsel %vm2540, %v5118, %v5122
        %v5124 = vrot.slane %v4591, 3
        %v5125 = vsel %vm2540, %v5120, %v5124
        %v5126 = vrot.slane %v4593, 3
        %v5127 = vsel %vm2540, %v5122, %v5126
        %v5128 = vrot.slane %v4595, 3
        %v5129 = vsel %vm2540, %v5124, %v5128
        %v5130 = vrot.slane %v4599, 3
        %v5131 = vsel %vm2540, %v5126, %v5130
        %v5132 = vrot.slane %v4601, 3
        %v5133 = vsel %vm2540, %v5128, %v5132
        %v5134 = vrot.slane %v4603, 3
        %v5135 = vsel %vm2540, %v5130, %v5134
        %v5136 = vrot.slane %v4605, 3
        %v5137 = vsel %vm2540, %v5132, %v5136
        %v5138 = vrot.slane %v4609, 3
        %v5139 = vsel %vm2540, %v5134, %v5138
        %v5140 = vrot.slane %v4611, 3
        %v5141 = vsel %vm2540, %v5136, %v5140
        %v5142 = vrot.slane %v4613, 3
        %v5143 = vsel %vm2540, %v5138, %v5142
        %v5144 = vrot.slane %v4615, 3
        %v5145 = vsel %vm2540, %v5140, %v5144
        %v5146 = vrot.slane %v4619, 3
        %v5147 = vsel %vm2540, %v5142, %v5146
        %v5148 = vrot.slane %v4621, 3
        %v5149 = vsel %vm2540, %v5144, %v5148
        %v5150 = vrot.slane %v4623, 3
        %v5151 = vsel %vm2540, %v5146, %v5150
        %v5152 = vrot.slane %v4625, 3
        %v5153 = vsel %vm2540, %v5148, %v5152
        %v5154 = vrot.slane %v4629, 3
        %v5155 = vsel %vm2540, %v5150, %v5154
        %v5156 = vrot.slane %v4631, 3
        %v5157 = vsel %vm2540, %v5152, %v5156
        %v5158 = vrot.slane %v4633, 3
        %v5159 = vsel %vm2540, %v5154, %v5158
        %v5160 = vrot.slane %v4635, 3
        %v5161 = vsel %vm2540, %v5156, %v5160
        %v5162 = vrot.slane %v4639, 3
        %v5163 = vsel %vm2540, %v5158, %v5162
        %v5164 = vrot.slane %v4641, 3
        %v5165 = vsel %vm2540, %v5160, %v5164
        %v5166 = vrot.slane %v4643, 3
        %v5167 = vsel %vm2540, %v5162, %v5166
        %v5168 = vrot.slane %v4645, 3
        %v5169 = vsel %vm2540, %v5164, %v5168
        %v5202 = vadd.f32 %v5044, %v5110
        %v5203 = vadd.f32 %v5045, %v5113
        %v5204 = vadd.f32 %v5046, %v5115
        %v5205 = vadd.f32 %v5047, %v5117
        %v5206 = vadd.f32 %v5048, %v5119
        %v5207 = vadd.f32 %v5049, %v5121
        %v5208 = vadd.f32 %v5050, %v5123
        %v5209 = vadd.f32 %v5051, %v5125
        %v5210 = vadd.f32 %v5052, %v5127
        %v5211 = vadd.f32 %v5053, %v5129
        %v5212 = vadd.f32 %v5054, %v5131
        %v5213 = vadd.f32 %v5055, %v5133
        %v5214 = vadd.f32 %v5056, %v5135
        %v5215 = vadd.f32 %v5057, %v5137
        %v5216 = vadd.f32 %v5058, %v5139
        %v5217 = vadd.f32 %v5059, %v5141
        %v5218 = vadd.f32 %v5060, %v5143
        %v5219 = vadd.f32 %v5061, %v5145
        %v5220 = vadd.f32 %v5062, %v5147
        %v5221 = vadd.f32 %v5063, %v5149
        %v5222 = vadd.f32 %v5064, %v5151
        %v5223 = vadd.f32 %v5065, %v5153
        %v5224 = vadd.f32 %v5066, %v5155
        %v5225 = vadd.f32 %v5067, %v5157
        %v5226 = vadd.f32 %v5068, %v5159
        %v5227 = vadd.f32 %v5069, %v5161
        %v5228 = vadd.f32 %v5070, %v5163
        %v5229 = vadd.f32 %v5071, %v5165
        %v5230 = vadd.f32 %v5072, %v5167
        %v5231 = vadd.f32 %v5073, %v5169
        %v5232 = vadd.f32 %v5074, %v5166
        %v5233 = vadd.f32 %v5075, %v5168
        %v5266 = vrot.slane %v4682, 4
        %v5267 = vrot.slane %v4686, 4
        %v5268 = vsel %vm2859, %v5266, %v5267
        %v5269 = vrot.slane %v4684, 4
        %v5270 = vrot.slane %v4688, 4
        %v5271 = vsel %vm2859, %v5269, %v5270
        %v5272 = vrot.slane %v4692, 4
        %v5273 = vsel %vm2859, %v5267, %v5272
        %v5274 = vrot.slane %v4694, 4
        %v5275 = vsel %vm2859, %v5270, %v5274
        %v5276 = vrot.slane %v4696, 4
        %v5277 = vsel %vm2859, %v5272, %v5276
        %v5278 = vrot.slane %v4698, 4
        %v5279 = vsel %vm2859, %v5274, %v5278
        %v5280 = vrot.slane %v4702, 4
        %v5281 = vsel %vm2859, %v5276, %v5280
        %v5282 = vrot.slane %v4704, 4
        %v5283 = vsel %vm2859, %v5278, %v5282
        %v5284 = vrot.slane %v4706, 4
        %v5285 = vsel %vm2859, %v5280, %v5284
        %v5286 = vrot.slane %v4708, 4
        %v5287 = vsel %vm2859, %v5282, %v5286
        %v5288 = vrot.slane %v4712, 4
        %v5289 = vsel %vm2859, %v5284, %v5288
        %v5290 = vrot.slane %v4714, 4
        %v5291 = vsel %vm2859, %v5286, %v5290
        %v5292 = vrot.slane %v4716, 4
        %v5293 = vsel %vm2859, %v5288, %v5292
        %v5294 = vrot.slane %v4718, 4
        %v5295 = vsel %vm2859, %v5290, %v5294
        %v5296 = vrot.slane %v4722, 4
        %v5297 = vsel %vm2859, %v5292, %v5296
        %v5298 = vrot.slane %v4724, 4
        %v5299 = vsel %vm2859, %v5294, %v5298
        %v5300 = vrot.slane %v4726, 4
        %v5301 = vsel %vm2859, %v5296, %v5300
        %v5302 = vrot.slane %v4728, 4
        %v5303 = vsel %vm2859, %v5298, %v5302
        %v5304 = vrot.slane %v4732, 4
        %v5305 = vsel %vm2859, %v5300, %v5304
        %v5306 = vrot.slane %v4734, 4
        %v5307 = vsel %vm2859, %v5302, %v5306
        %v5308 = vrot.slane %v4736, 4
        %v5309 = vsel %vm2859, %v5304, %v5308
        %v5310 = vrot.slane %v4738, 4
        %v5311 = vsel %vm2859, %v5306, %v5310
        %v5312 = vrot.slane %v4742, 4
        %v5313 = vsel %vm2859, %v5308, %v5312
        %v5314 = vrot.slane %v4744, 4
        %v5315 = vsel %vm2859, %v5310, %v5314
        %v5316 = vrot.slane %v4746, 4
        %v5317 = vsel %vm2859, %v5312, %v5316
        %v5318 = vrot.slane %v4748, 4
        %v5319 = vsel %vm2859, %v5314, %v5318
        %v5320 = vrot.slane %v4752, 4
        %v5321 = vsel %vm2859, %v5316, %v5320
        %v5322 = vrot.slane %v4754, 4
        %v5323 = vsel %vm2859, %v5318, %v5322
        %v5324 = vrot.slane %v4756, 4
        %v5325 = vsel %vm2859, %v5320, %v5324
        %v5326 = vrot.slane %v4758, 4
        %v5327 = vsel %vm2859, %v5322, %v5326
        %v5360 = vadd.f32 %v5202, %v5268
        %v5361 = vadd.f32 %v5203, %v5271
        %v5362 = vadd.f32 %v5204, %v5273
        %v5363 = vadd.f32 %v5205, %v5275
        %v5364 = vadd.f32 %v5206, %v5277
        %v5365 = vadd.f32 %v5207, %v5279
        %v5366 = vadd.f32 %v5208, %v5281
        %v5367 = vadd.f32 %v5209, %v5283
        %v5368 = vadd.f32 %v5210, %v5285
        %v5369 = vadd.f32 %v5211, %v5287
        %v5370 = vadd.f32 %v5212, %v5289
        %v5371 = vadd.f32 %v5213, %v5291
        %v5372 = vadd.f32 %v5214, %v5293
        %v5373 = vadd.f32 %v5215, %v5295
        %v5374 = vadd.f32 %v5216, %v5297
        %v5375 = vadd.f32 %v5217, %v5299
        %v5376 = vadd.f32 %v5218, %v5301
        %v5377 = vadd.f32 %v5219, %v5303
        %v5378 = vadd.f32 %v5220, %v5305
        %v5379 = vadd.f32 %v5221, %v5307
        %v5380 = vadd.f32 %v5222, %v5309
        %v5381 = vadd.f32 %v5223, %v5311
        %v5382 = vadd.f32 %v5224, %v5313
        %v5383 = vadd.f32 %v5225, %v5315
        %v5384 = vadd.f32 %v5226, %v5317
        %v5385 = vadd.f32 %v5227, %v5319
        %v5386 = vadd.f32 %v5228, %v5321
        %v5387 = vadd.f32 %v5229, %v5323
        %v5388 = vadd.f32 %v5230, %v5325
        %v5389 = vadd.f32 %v5231, %v5327
        %v5390 = vadd.f32 %v5232, %v5324
        %v5391 = vadd.f32 %v5233, %v5326
        %v5392 = vld [vmem:[#allocation7] sm:$0x3]
        %v5394 = vlaneseq
        %v5395 = vshrl.u32 %v5394, 7
        %v5396 = vsub.s32 0, %v5395
        %v5397 = vrot.slane %v5392, %v5396
        %v5398 = vlaneseq
        %v5399 = vshrl.u32 %v5398, 7
        %v5400 = vsub.s32 1, %v5399
        %v5401 = vrot.slane %v5392, %v5400
        %v5404 = vadd.f32 %v5360, %v5397
        %v5405 = vadd.f32 %v5361, %v5401
        %v5406 = vadd.f32 %v5362, %v5397
        %v5407 = vadd.f32 %v5363, %v5401
        %v5408 = vadd.f32 %v5364, %v5397
        %v5409 = vadd.f32 %v5365, %v5401
        %v5410 = vadd.f32 %v5366, %v5397
        %v5411 = vadd.f32 %v5367, %v5401
        %v5412 = vadd.f32 %v5368, %v5397
        %v5413 = vadd.f32 %v5369, %v5401
        %v5414 = vadd.f32 %v5370, %v5397
        %v5415 = vadd.f32 %v5371, %v5401
        %v5416 = vadd.f32 %v5372, %v5397
        %v5417 = vadd.f32 %v5373, %v5401
        %v5418 = vadd.f32 %v5374, %v5397
        %v5419 = vadd.f32 %v5375, %v5401
        %v5420 = vadd.f32 %v5376, %v5397
        %v5421 = vadd.f32 %v5377, %v5401
        %v5422 = vadd.f32 %v5378, %v5397
        %v5423 = vadd.f32 %v5379, %v5401
        %v5424 = vadd.f32 %v5380, %v5397
        %v5425 = vadd.f32 %v5381, %v5401
        %v5426 = vadd.f32 %v5382, %v5397
        %v5427 = vadd.f32 %v5383, %v5401
        %v5428 = vadd.f32 %v5384, %v5397
        %v5429 = vadd.f32 %v5385, %v5401
        %v5430 = vadd.f32 %v5386, %v5397
        %v5431 = vadd.f32 %v5387, %v5401
        %v5432 = vadd.f32 %v5388, %v5397
        %v5433 = vadd.f32 %v5389, %v5401
        %v5434 = vadd.f32 %v5390, %v5397
        %v5435 = vadd.f32 %v5391, %v5401
        %v5436 = vmax.f32 %v5404, 0.0
        %v5437 = vmax.f32 %v5405, 0.0
        %v5438 = vmax.f32 %v5406, 0.0
        %v5439 = vmax.f32 %v5407, 0.0
        %v5440 = vmax.f32 %v5408, 0.0
        %v5441 = vmax.f32 %v5409, 0.0
        %v5442 = vmax.f32 %v5410, 0.0
        %v5443 = vmax.f32 %v5411, 0.0
        %v5444 = vmax.f32 %v5412, 0.0
        %v5445 = vmax.f32 %v5413, 0.0
        %v5446 = vmax.f32 %v5414, 0.0
        %v5447 = vmax.f32 %v5415, 0.0
        %v5448 = vmax.f32 %v5416, 0.0
        %v5449 = vmax.f32 %v5417, 0.0
        %v5450 = vmax.f32 %v5418, 0.0
        %v5451 = vmax.f32 %v5419, 0.0
        %v5452 = vmax.f32 %v5420, 0.0
        %v5453 = vmax.f32 %v5421, 0.0
        %v5454 = vmax.f32 %v5422, 0.0
        %v5455 = vmax.f32 %v5423, 0.0
        %v5456 = vmax.f32 %v5424, 0.0
        %v5457 = vmax.f32 %v5425, 0.0
        %v5458 = vmax.f32 %v5426, 0.0
        %v5459 = vmax.f32 %v5427, 0.0
        %v5460 = vmax.f32 %v5428, 0.0
        %v5461 = vmax.f32 %v5429, 0.0
        %v5462 = vmax.f32 %v5430, 0.0
        %v5463 = vmax.f32 %v5431, 0.0
        %v5464 = vmax.f32 %v5432, 0.0
        %v5465 = vmax.f32 %v5433, 0.0
        %v5466 = vmax.f32 %v5434, 0.0
        %v5467 = vmax.f32 %v5435, 0.0
        %v5468 = vmax.f32 %v5436, %v5437
        %v5469 = vmax.f32 %v5438, %v5439
        %v5470 = vmax.f32 %v5440, %v5441
        %v5471 = vmax.f32 %v5442, %v5443
        %v5472 = vmax.f32 %v5444, %v5445
        %v5473 = vmax.f32 %v5446, %v5447
        %v5474 = vmax.f32 %v5448, %v5449
        %v5475 = vmax.f32 %v5450, %v5451
        %v5476 = vmax.f32 %v5452, %v5453
        %v5477 = vmax.f32 %v5454, %v5455
        %v5478 = vmax.f32 %v5456, %v5457
        %v5479 = vmax.f32 %v5458, %v5459
        %v5480 = vmax.f32 %v5460, %v5461
        %v5481 = vmax.f32 %v5462, %v5463
        %v5482 = vmax.f32 %v5464, %v5465
        %v5483 = vmax.f32 %v5466, %v5467
        %v5484 = vpack.c.bf16 %v5469, %v5468
        %v5485 = vpack.c.bf16 %v5471, %v5470
        %v5486 = vpack.c.bf16 %v5473, %v5472
        %v5487 = vpack.c.bf16 %v5475, %v5474
        %v5488 = vpack.c.bf16 %v5477, %v5476
        %v5489 = vpack.c.bf16 %v5479, %v5478
        %v5490 = vpack.c.bf16 %v5481, %v5480
        %v5491 = vpack.c.bf16 %v5483, %v5482
        %v5492 = vld [vmem:[#allocation8] sm:$0xf]
        %v5493 = vld [vmem:[#allocation8 + $0x4] sm:$0xf]
        %v5494 = vld [vmem:[#allocation8 + $0x8] sm:$0xf]
        %v5495 = vld [vmem:[#allocation8 + $0xc] sm:$0xf]
        %v5496 = vld [vmem:[#allocation8 + $0x10] sm:$0xf]
        %v5497 = vld [vmem:[#allocation8 + $0x14] sm:$0xf]
        %v5498 = vld [vmem:[#allocation8 + $0x18] sm:$0xf]
        %v5499 = vld [vmem:[#allocation8 + $0x1c] sm:$0xf]
        %v5500 = vld [vmem:[#allocation8 + $0x20] sm:$0xf]
        %v5501 = vld [vmem:[#allocation8 + $0x24] sm:$0xf]
        %v5502 = vld [vmem:[#allocation8 + $0x28] sm:$0xf]
        %v5503 = vld [vmem:[#allocation8 + $0x2c] sm:$0xf]
        %v5504 = vld [vmem:[#allocation8 + $0x30] sm:$0xf]
        %v5505 = vld [vmem:[#allocation8 + $0x34] sm:$0xf]
        %v5506 = vld [vmem:[#allocation8 + $0x38] sm:$0xf]
        %v5507 = vld [vmem:[#allocation8 + $0x3c] sm:$0xf]
        %v5524 = vunpack.c.l.b16 %v5492
        %v5525 = vunpack.c.l.b16 %v5493
        %v5526 = vunpack.c.l.b16 %v5494
        %v5527 = vunpack.c.l.b16 %v5495
        %v5528 = vunpack.c.l.b16 %v5496
        %v5529 = vunpack.c.l.b16 %v5497
        %v5530 = vunpack.c.l.b16 %v5498
        %v5531 = vunpack.c.l.b16 %v5499
        %v5532 = vunpack.c.l.b16 %v5500
        %v5533 = vunpack.c.l.b16 %v5501
        %v5534 = vunpack.c.l.b16 %v5502
        %v5535 = vunpack.c.l.b16 %v5503
        %v5536 = vunpack.c.l.b16 %v5504
        %v5537 = vunpack.c.l.b16 %v5505
        %v5538 = vunpack.c.l.b16 %v5506
        %v5539 = vunpack.c.l.b16 %v5507
        %v5540 = vpack.c.b16 %v5525, %v5524
        %v5541 = vpack.c.b16 %v5527, %v5526
        %v5542 = vpack.c.b16 %v5529, %v5528
        %v5543 = vpack.c.b16 %v5531, %v5530
        %v5544 = vpack.c.b16 %v5533, %v5532
        %v5545 = vpack.c.b16 %v5535, %v5534
        %v5546 = vpack.c.b16 %v5537, %v5536
        %v5547 = vpack.c.b16 %v5539, %v5538
        %v5549 = vsel %vm3478, %v5540, 0
        %v5552 = vsel %vm3478, %v5541, 0
        %v5555 = vsel %vm3478, %v5542, 0
        %v5558 = vsel %vm3478, %v5543, 0
        %v5561 = vsel %vm3478, %v5544, 0
        %v5564 = vsel %vm3478, %v5545, 0
        %v5567 = vsel %vm3478, %v5546, 0
        %v5570 = vsel %vm3478, %v5547, 0
        %v5573 = vsel %vm2221, %v5491, 0
        %5575 = vmatprep.subr.bf16.mxu0 0
        %5576 = vmatpush1.bf16.msra.mxu0 %v5484
        %5577 = vmatprep.subr.bf16.mxu0 0
        %5578 = vmatpush1.bf16.msra.mxu0 %v5485
        %5579 = vmatprep.subr.bf16.mxu0 0
        %5580 = vmatpush1.bf16.msra.mxu0 %v5486
        %5581 = vmatprep.subr.bf16.mxu0 0
        %5582 = vmatpush1.bf16.msra.mxu0 %v5487
        %5583 = vmatprep.subr.bf16.mxu0 0
        %5584 = vmatpush1.bf16.msra.mxu0 %v5488
        %5585 = vmatprep.subr.bf16.mxu0 0
        %5586 = vmatpush1.bf16.msra.mxu0 %v5489
        %5587 = vmatprep.subr.bf16.mxu0 0
        %5588 = vmatpush1.bf16.msra.mxu0 %v5490
        %5589 = vmatprep.subr.bf16.mxu0 0
        %5590 = vmatpush1.bf16.msra.mxu0 %v5573
        %5591 = vmatprep.subr.bf16.mxu0 0
        %5592 = vmatpush1.bf16.msra.mxu0 0
        %5593 = vmatprep.subr.bf16.mxu0 0
        %5594 = vmatpush1.bf16.msra.mxu0 0
        %5595 = vmatprep.subr.bf16.mxu0 0
        %5596 = vmatpush1.bf16.msra.mxu0 0
        %5597 = vmatprep.subr.bf16.mxu0 0
        %5598 = vmatpush1.bf16.msra.mxu0 0
        %5599 = vmatprep.subr.bf16.mxu0 0
        %5600 = vmatpush1.bf16.msra.mxu0 0
        %5601 = vmatprep.subr.bf16.mxu0 0
        %5602 = vmatpush1.bf16.msra.mxu0 0
        %5603 = vmatprep.subr.bf16.mxu0 0
        %5604 = vmatpush1.bf16.msra.mxu0 0
        %5605 = vmatprep.subr.bf16.mxu0 0
        %5606 = vmatpush1.bf16.msra.mxu0 0
        %5607 = vmatprep.mubr.bf16.mxu0 0
        %5608 = vmatmul.mubr.bf16.gmra.mrb[0].mxu0 %v5549
        %v5609 = vpop.f32.mrb[0].mxu0
        %v5610 = vadd.f32 0.0, %v5609
        %v5611 = vpop.f32.mrb[0].mxu0
        %v5612 = vpop.f32.mrb[0].mxu0
        %v5613 = vadd.f32 0.0, %v5612
        %v5614 = vpop.f32.mrb[0].mxu0
        %5615 = vmatprep.mubr.bf16.mxu0 0
        %5616 = vmatmul.mubr.bf16.gmra.mrb[0].mxu0 %v5552
        %v5617 = vpop.f32.mrb[0].mxu0
        %v5618 = vadd.f32 0.0, %v5617
        %v5619 = vpop.f32.mrb[0].mxu0
        %v5620 = vpop.f32.mrb[0].mxu0
        %v5621 = vadd.f32 0.0, %v5620
        %v5622 = vpop.f32.mrb[0].mxu0
        %5623 = vmatprep.mubr.bf16.mxu0 0
        %5624 = vmatmul.mubr.bf16.gmra.mrb[0].mxu0 %v5555
        %v5625 = vpop.f32.mrb[0].mxu0
        %v5626 = vadd.f32 0.0, %v5625
        %v5627 = vpop.f32.mrb[0].mxu0
        %v5628 = vpop.f32.mrb[0].mxu0
        %v5629 = vadd.f32 0.0, %v5628
        %v5630 = vpop.f32.mrb[0].mxu0
        %5631 = vmatprep.mubr.bf16.mxu0 0
        %5632 = vmatmul.mubr.bf16.gmra.mrb[0].mxu0 %v5558
        %v5633 = vpop.f32.mrb[0].mxu0
        %v5634 = vadd.f32 0.0, %v5633
        %v5635 = vpop.f32.mrb[0].mxu0
        %v5636 = vpop.f32.mrb[0].mxu0
        %v5637 = vadd.f32 0.0, %v5636
        %v5638 = vpop.f32.mrb[0].mxu0
        %5639 = vmatprep.mubr.bf16.mxu0 0
        %5640 = vmatmul.mubr.bf16.gmra.mrb[0].mxu0 %v5561
        %v5641 = vpop.f32.mrb[0].mxu0
        %v5642 = vadd.f32 0.0, %v5641
        %v5643 = vpop.f32.mrb[0].mxu0
        %v5644 = vpop.f32.mrb[0].mxu0
        %v5645 = vadd.f32 0.0, %v5644
        %v5646 = vpop.f32.mrb[0].mxu0
        %5647 = vmatprep.mubr.bf16.mxu0 0
        %5648 = vmatmul.mubr.bf16.gmra.mrb[0].mxu0 %v5564
        %v5649 = vpop.f32.mrb[0].mxu0
        %v5650 = vadd.f32 0.0, %v5649
        %v5651 = vpop.f32.mrb[0].mxu0
        %v5652 = vpop.f32.mrb[0].mxu0
        %v5653 = vadd.f32 0.0, %v5652
        %v5654 = vpop.f32.mrb[0].mxu0
        %5655 = vmatprep.mubr.bf16.mxu0 0
        %5656 = vmatmul.mubr.bf16.gmra.mrb[0].mxu0 %v5567
        %v5657 = vpop.f32.mrb[0].mxu0
        %v5658 = vadd.f32 0.0, %v5657
        %v5659 = vpop.f32.mrb[0].mxu0
        %v5660 = vpop.f32.mrb[0].mxu0
        %v5661 = vadd.f32 0.0, %v5660
        %v5662 = vpop.f32.mrb[0].mxu0
        %5663 = vmatprep.mubr.bf16.mxu0 0
        %5664 = vmatmul.mubr.bf16.gmra.mrb[0].mxu0 %v5570
        %v5665 = vpop.f32.mrb[0].mxu0
        %v5666 = vadd.f32 0.0, %v5665
        %v5667 = vpop.f32.mrb[0].mxu0
        %v5668 = vpop.f32.mrb[0].mxu0
        %v5669 = vadd.f32 0.0, %v5668
        %v5670 = vpop.f32.mrb[0].mxu0
        %5671 = vdwg.mxu0
        %v5672 = vmax.f32 %v5610, %v5642
        %v5673 = vmax.f32 %v5613, %v5645
        %v5674 = vmax.f32 %v5618, %v5650
        %v5675 = vmax.f32 %v5621, %v5653
        %v5676 = vmax.f32 %v5626, %v5658
        %v5677 = vmax.f32 %v5629, %v5661
        %v5678 = vmax.f32 %v5634, %v5666
        %v5679 = vmax.f32 %v5637, %v5669
        %v5680 = vpack.c.bf16 %v5673, %v5672
        %v5681 = vpack.c.bf16 %v5675, %v5674
        %v5682 = vpack.c.bf16 %v5677, %v5676
        %v5683 = vpack.c.bf16 %v5679, %v5678
        %v5684 = vld [vmem:[#allocation10] sm:$0xff]
        %v5685 = vld [vmem:[#allocation10 + $0x8] sm:$0xff]
        %v5686 = vld [vmem:[#allocation10 + $0x10] sm:$0xf]
        %v5687 = vld [vmem:[#allocation10 + $0x14] sm:$0xff]
        %v5688 = vld [vmem:[#allocation10 + $0x1c] sm:$0xff]
        %v5689 = vld [vmem:[#allocation10 + $0x24] sm:$0xf]
        %v5690 = vld [vmem:[#allocation10 + $0x28] sm:$0xff]
        %v5691 = vld [vmem:[#allocation10 + $0x30] sm:$0xff]
        %v5692 = vld [vmem:[#allocation10 + $0x38] sm:$0xf]
        %v5693 = vld [vmem:[#allocation10 + $0x3c] sm:$0xff]
        %v5694 = vld [vmem:[#allocation10 + $0x44] sm:$0xff]
        %v5695 = vld [vmem:[#allocation10 + $0x4c] sm:$0xf]
        %v5696 = vld [vmem:[#allocation10 + $0x50] sm:$0xff]
        %v5697 = vld [vmem:[#allocation10 + $0x58] sm:$0xff]
        %v5698 = vld [vmem:[#allocation10 + $0x60] sm:$0xf]
        %v5699 = vld [vmem:[#allocation10 + $0x64] sm:$0xff]
        %v5700 = vld [vmem:[#allocation10 + $0x6c] sm:$0xff]
        %v5701 = vld [vmem:[#allocation10 + $0x74] sm:$0xf]
        %v5702 = vld [vmem:[#allocation10 + $0x78] sm:$0xff]
        %v5703 = vld [vmem:[#allocation10 + $0x80] sm:$0xff]
        %v5704 = vld [vmem:[#allocation10 + $0x88] sm:$0xf]
        %v5705 = vld [vmem:[#allocation10 + $0x8c] sm:$0xff]
        %v5706 = vld [vmem:[#allocation10 + $0x94] sm:$0xff]
        %v5707 = vld [vmem:[#allocation10 + $0x9c] sm:$0xf]
        %v5708 = vld [vmem:[#allocation10 + $0xa0] sm:$0xff]
        %v5709 = vld [vmem:[#allocation10 + $0xa8] sm:$0xff]
        %v5710 = vld [vmem:[#allocation10 + $0xb0] sm:$0xf]
        %v5711 = vld [vmem:[#allocation10 + $0xb4] sm:$0xff]
        %v5712 = vld [vmem:[#allocation10 + $0xbc] sm:$0xff]
        %v5713 = vld [vmem:[#allocation10 + $0xc4] sm:$0xf]
        %v5714 = vld [vmem:[#allocation10 + $0xc8] sm:$0xff]
        %v5715 = vld [vmem:[#allocation10 + $0xd0] sm:$0xff]
        %v5716 = vld [vmem:[#allocation10 + $0xd8] sm:$0xf]
        %v5717 = vld [vmem:[#allocation10 + $0xdc] sm:$0xff]
        %v5718 = vld [vmem:[#allocation10 + $0xe4] sm:$0xff]
        %v5719 = vld [vmem:[#allocation10 + $0xec] sm:$0xf]
        %v5720 = vld [vmem:[#allocation10 + $0xf0] sm:$0xff]
        %v5721 = vld [vmem:[#allocation10 + $0xf8] sm:$0xff]
        %v5722 = vld [vmem:[#allocation10 + $0x100] sm:$0xf]
        %v5723 = vld [vmem:[#allocation10 + $0x104] sm:$0xff]
        %v5724 = vld [vmem:[#allocation10 + $0x10c] sm:$0xff]
        %v5725 = vld [vmem:[#allocation10 + $0x114] sm:$0xf]
        %v5726 = vld [vmem:[#allocation10 + $0x118] sm:$0xff]
        %v5727 = vld [vmem:[#allocation10 + $0x120] sm:$0xff]
        %v5728 = vld [vmem:[#allocation10 + $0x128] sm:$0xf]
        %v5729 = vld [vmem:[#allocation10 + $0x12c] sm:$0xff]
        %v5730 = vld [vmem:[#allocation10 + $0x134] sm:$0xff]
        %v5731 = vld [vmem:[#allocation10 + $0x13c] sm:$0xf]
        %v5780 = vunpack.c.l.b16 %v5684
        %v5781 = vunpack.c.h.b16 %v5684
        %v5782 = vunpack.c.l.b16 %v5685
        %v5783 = vunpack.c.h.b16 %v5685
        %v5784 = vunpack.c.l.b16 %v5686
        %v5785 = vunpack.c.l.b16 %v5687
        %v5786 = vunpack.c.h.b16 %v5687
        %v5787 = vunpack.c.l.b16 %v5688
        %v5788 = vunpack.c.h.b16 %v5688
        %v5789 = vunpack.c.l.b16 %v5689
        %v5790 = vunpack.c.l.b16 %v5690
        %v5791 = vunpack.c.h.b16 %v5690
        %v5792 = vunpack.c.l.b16 %v5691
        %v5793 = vunpack.c.h.b16 %v5691
        %v5794 = vunpack.c.l.b16 %v5692
        %v5795 = vunpack.c.l.b16 %v5693
        %v5796 = vunpack.c.h.b16 %v5693
        %v5797 = vunpack.c.l.b16 %v5694
        %v5798 = vunpack.c.h.b16 %v5694
        %v5799 = vunpack.c.l.b16 %v5695
        %v5800 = vunpack.c.l.b16 %v5696
        %v5801 = vunpack.c.h.b16 %v5696
        %v5802 = vunpack.c.l.b16 %v5697
        %v5803 = vunpack.c.h.b16 %v5697
        %v5804 = vunpack.c.l.b16 %v5698
        %v5805 = vunpack.c.l.b16 %v5699
        %v5806 = vunpack.c.h.b16 %v5699
        %v5807 = vunpack.c.l.b16 %v5700
        %v5808 = vunpack.c.h.b16 %v5700
        %v5809 = vunpack.c.l.b16 %v5701
        %v5810 = vunpack.c.l.b16 %v5702
        %v5811 = vunpack.c.h.b16 %v5702
        %v5812 = vunpack.c.l.b16 %v5703
        %v5813 = vunpack.c.h.b16 %v5703
        %v5814 = vunpack.c.l.b16 %v5704
        %v5815 = vunpack.c.l.b16 %v5705
        %v5816 = vunpack.c.h.b16 %v5705
        %v5817 = vunpack.c.l.b16 %v5706
        %v5818 = vunpack.c.h.b16 %v5706
        %v5819 = vunpack.c.l.b16 %v5707
        %v5820 = vunpack.c.l.b16 %v5708
        %v5821 = vunpack.c.h.b16 %v5708
        %v5822 = vunpack.c.l.b16 %v5709
        %v5823 = vunpack.c.h.b16 %v5709
        %v5824 = vunpack.c.l.b16 %v5710
        %v5825 = vunpack.c.l.b16 %v5711
        %v5826 = vunpack.c.h.b16 %v5711
        %v5827 = vunpack.c.l.b16 %v5712
        %v5828 = vunpack.c.h.b16 %v5712
        %v5829 = vunpack.c.l.b16 %v5713
        %v5830 = vunpack.c.l.b16 %v5714
        %v5831 = vunpack.c.h.b16 %v5714
        %v5832 = vunpack.c.l.b16 %v5715
        %v5833 = vunpack.c.h.b16 %v5715
        %v5834 = vunpack.c.l.b16 %v5716
        %v5835 = vunpack.c.l.b16 %v5717
        %v5836 = vunpack.c.h.b16 %v5717
        %v5837 = vunpack.c.l.b16 %v5718
        %v5838 = vunpack.c.h.b16 %v5718
        %v5839 = vunpack.c.l.b16 %v5719
        %v5840 = vunpack.c.l.b16 %v5720
        %v5841 = vunpack.c.h.b16 %v5720
        %v5842 = vunpack.c.l.b16 %v5721
        %v5843 = vunpack.c.h.b16 %v5721
        %v5844 = vunpack.c.l.b16 %v5722
        %v5845 = vunpack.c.l.b16 %v5723
        %v5846 = vunpack.c.h.b16 %v5723
        %v5847 = vunpack.c.l.b16 %v5724
        %v5848 = vunpack.c.h.b16 %v5724
        %v5849 = vunpack.c.l.b16 %v5725
        %v5850 = vunpack.c.l.b16 %v5726
        %v5851 = vunpack.c.h.b16 %v5726
        %v5852 = vunpack.c.l.b16 %v5727
        %v5853 = vunpack.c.h.b16 %v5727
        %v5854 = vunpack.c.l.b16 %v5728
        %v5855 = vunpack.c.l.b16 %v5729
        %v5856 = vunpack.c.h.b16 %v5729
        %v5857 = vunpack.c.l.b16 %v5730
        %v5858 = vunpack.c.h.b16 %v5730
        %v5859 = vunpack.c.l.b16 %v5731
        %v5860 = vpack.c.b16 %v5785, %v5780
        %v5861 = vpack.c.b16 %v5786, %v5781
        %v5862 = vpack.c.b16 %v5787, %v5782
        %v5863 = vpack.c.b16 %v5788, %v5783
        %v5864 = vpack.c.b16 %v5789, %v5784
        %v5865 = vpack.c.b16 %v5795, %v5790
        %v5866 = vpack.c.b16 %v5796, %v5791
        %v5867 = vpack.c.b16 %v5797, %v5792
        %v5868 = vpack.c.b16 %v5798, %v5793
        %v5869 = vpack.c.b16 %v5799, %v5794
        %v5870 = vpack.c.b16 %v5805, %v5800
        %v5871 = vpack.c.b16 %v5806, %v5801
        %v5872 = vpack.c.b16 %v5807, %v5802
        %v5873 = vpack.c.b16 %v5808, %v5803
        %v5874 = vpack.c.b16 %v5809, %v5804
        %v5875 = vpack.c.b16 %v5815, %v5810
        %v5876 = vpack.c.b16 %v5816, %v5811
        %v5877 = vpack.c.b16 %v5817, %v5812
        %v5878 = vpack.c.b16 %v5818, %v5813
        %v5879 = vpack.c.b16 %v5819, %v5814
        %v5880 = vpack.c.b16 %v5825, %v5820
        %v5881 = vpack.c.b16 %v5826, %v5821
        %v5882 = vpack.c.b16 %v5827, %v5822
        %v5883 = vpack.c.b16 %v5828, %v5823
        %v5884 = vpack.c.b16 %v5829, %v5824
        %v5885 = vpack.c.b16 %v5835, %v5830
        %v5886 = vpack.c.b16 %v5836, %v5831
        %v5887 = vpack.c.b16 %v5837, %v5832
        %v5888 = vpack.c.b16 %v5838, %v5833
        %v5889 = vpack.c.b16 %v5839, %v5834
        %v5890 = vpack.c.b16 %v5845, %v5840
        %v5891 = vpack.c.b16 %v5846, %v5841
        %v5892 = vpack.c.b16 %v5847, %v5842
        %v5893 = vpack.c.b16 %v5848, %v5843
        %v5894 = vpack.c.b16 %v5849, %v5844
        %v5895 = vpack.c.b16 %v5855, %v5850
        %v5896 = vpack.c.b16 %v5856, %v5851
        %v5897 = vpack.c.b16 %v5857, %v5852
        %v5898 = vpack.c.b16 %v5858, %v5853
        %v5899 = vpack.c.b16 %v5859, %v5854
        %5940 = vmatprep.subr.bf16.mxu0 %v5861
        %5941 = vmatpush1.bf16.msra.mxu0 %v5860
        %5942 = vmatprep.subr.bf16.mxu0 %v5866
        %5943 = vmatpush1.bf16.msra.mxu0 %v5865
        %5944 = vmatprep.subr.bf16.mxu0 %v5871
        %5945 = vmatpush1.bf16.msra.mxu0 %v5870
        %5946 = vmatprep.subr.bf16.mxu0 %v5876
        %5947 = vmatpush1.bf16.msra.mxu0 %v5875
        %5948 = vmatprep.subr.bf16.mxu0 %v5881
        %5949 = vmatpush1.bf16.msra.mxu0 %v5880
        %5950 = vmatprep.subr.bf16.mxu0 %v5886
        %5951 = vmatpush1.bf16.msra.mxu0 %v5885
        %5952 = vmatprep.subr.bf16.mxu0 %v5891
        %5953 = vmatpush1.bf16.msra.mxu0 %v5890
        %5954 = vmatprep.subr.bf16.mxu0 %v5896
        %5955 = vmatpush1.bf16.msra.mxu0 %v5895
        %5956 = vmatprep.subr.bf16.mxu0 0
        %5957 = vmatpush1.bf16.msra.mxu0 0
        %5958 = vmatprep.subr.bf16.mxu0 0
        %5959 = vmatpush1.bf16.msra.mxu0 0
        %5960 = vmatprep.subr.bf16.mxu0 0
        %5961 = vmatpush1.bf16.msra.mxu0 0
        %5962 = vmatprep.subr.bf16.mxu0 0
        %5963 = vmatpush1.bf16.msra.mxu0 0
        %5964 = vmatprep.subr.bf16.mxu0 0
        %5965 = vmatpush1.bf16.msra.mxu0 0
        %5966 = vmatprep.subr.bf16.mxu0 0
        %5967 = vmatpush1.bf16.msra.mxu0 0
        %5968 = vmatprep.subr.bf16.mxu0 0
        %5969 = vmatpush1.bf16.msra.mxu0 0
        %5970 = vmatprep.subr.bf16.mxu0 0
        %5971 = vmatpush1.bf16.msra.mxu0 0
        %5972 = vmatprep.mubr.bf16.mxu0 0
        %5973 = vmatmul.mubr.bf16.gmra.mrb[0].mxu0 %v5680
        %v5974 = vpop.f32.mrb[0].mxu0
        %v5975 = vadd.f32 0.0, %v5974
        %v5976 = vpop.f32.mrb[0].mxu0
        %v5977 = vadd.f32 0.0, %v5976
        %v5978 = vpop.f32.mrb[0].mxu0
        %v5979 = vadd.f32 0.0, %v5978
        %v5980 = vpop.f32.mrb[0].mxu0
        %v5981 = vadd.f32 0.0, %v5980
        %5982 = vmatprep.mubr.bf16.mxu0 0
        %5983 = vmatmul.mubr.bf16.gmra.mrb[0].mxu0 %v5681
        %v5984 = vpop.f32.mrb[0].mxu0
        %v5985 = vadd.f32 0.0, %v5984
        %v5986 = vpop.f32.mrb[0].mxu0
        %v5987 = vadd.f32 0.0, %v5986
        %v5988 = vpop.f32.mrb[0].mxu0
        %v5989 = vadd.f32 0.0, %v5988
        %v5990 = vpop.f32.mrb[0].mxu0
        %v5991 = vadd.f32 0.0, %v5990
        %5992 = vmatprep.mubr.bf16.mxu0 0
        %5993 = vmatmul.mubr.bf16.gmra.mrb[0].mxu0 %v5682
        %v5994 = vpop.f32.mrb[0].mxu0
        %v5995 = vadd.f32 0.0, %v5994
        %v5996 = vpop.f32.mrb[0].mxu0
        %v5997 = vadd.f32 0.0, %v5996
        %v5998 = vpop.f32.mrb[0].mxu0
        %v5999 = vadd.f32 0.0, %v5998
        %v6000 = vpop.f32.mrb[0].mxu0
        %v6001 = vadd.f32 0.0, %v6000
        %6002 = vmatprep.mubr.bf16.mxu0 0
        %6003 = vmatmul.mubr.bf16.gmra.mrb[0].mxu0 %v5683
        %v6004 = vpop.f32.mrb[0].mxu0
        %v6005 = vadd.f32 0.0, %v6004
        %v6006 = vpop.f32.mrb[0].mxu0
        %v6007 = vadd.f32 0.0, %v6006
        %v6008 = vpop.f32.mrb[0].mxu0
        %v6009 = vadd.f32 0.0, %v6008
        %v6010 = vpop.f32.mrb[0].mxu0
        %v6011 = vadd.f32 0.0, %v6010
        %6012 = vdwg.mxu0
        %6013 = vmatprep.subr.bf16.mxu0 %v5863
        %6014 = vmatpush1.bf16.msra.mxu0 %v5862
        %6015 = vmatprep.subr.bf16.mxu0 %v5868
        %6016 = vmatpush1.bf16.msra.mxu0 %v5867
        %6017 = vmatprep.subr.bf16.mxu0 %v5873
        %6018 = vmatpush1.bf16.msra.mxu0 %v5872
        %6019 = vmatprep.subr.bf16.mxu0 %v5878
        %6020 = vmatpush1.bf16.msra.mxu0 %v5877
        %6021 = vmatprep.subr.bf16.mxu0 %v5883
        %6022 = vmatpush1.bf16.msra.mxu0 %v5882
        %6023 = vmatprep.subr.bf16.mxu0 %v5888
        %6024 = vmatpush1.bf16.msra.mxu0 %v5887
        %6025 = vmatprep.subr.bf16.mxu0 %v5893
        %6026 = vmatpush1.bf16.msra.mxu0 %v5892
        %6027 = vmatprep.subr.bf16.mxu0 %v5898
        %6028 = vmatpush1.bf16.msra.mxu0 %v5897
        %6029 = vmatprep.subr.bf16.mxu0 0
        %6030 = vmatpush1.bf16.msra.mxu0 0
        %6031 = vmatprep.subr.bf16.mxu0 0
        %6032 = vmatpush1.bf16.msra.mxu0 0
        %6033 = vmatprep.subr.bf16.mxu0 0
        %6034 = vmatpush1.bf16.msra.mxu0 0
        %6035 = vmatprep.subr.bf16.mxu0 0
        %6036 = vmatpush1.bf16.msra.mxu0 0
        %6037 = vmatprep.subr.bf16.mxu0 0
        %6038 = vmatpush1.bf16.msra.mxu0 0
        %6039 = vmatprep.subr.bf16.mxu0 0
        %6040 = vmatpush1.bf16.msra.mxu0 0
        %6041 = vmatprep.subr.bf16.mxu0 0
        %6042 = vmatpush1.bf16.msra.mxu0 0
        %6043 = vmatprep.subr.bf16.mxu0 0
        %6044 = vmatpush1.bf16.msra.mxu0 0
        %6045 = vmatprep.mubr.bf16.mxu0 0
        %6046 = vmatmul.mubr.bf16.gmra.mrb[0].mxu0 %v5680
        %v6047 = vpop.f32.mrb[0].mxu0
        %v6048 = vadd.f32 0.0, %v6047
        %v6049 = vpop.f32.mrb[0].mxu0
        %v6050 = vadd.f32 0.0, %v6049
        %v6051 = vpop.f32.mrb[0].mxu0
        %v6052 = vadd.f32 0.0, %v6051
        %v6053 = vpop.f32.mrb[0].mxu0
        %v6054 = vadd.f32 0.0, %v6053
        %6055 = vmatprep.mubr.bf16.mxu0 0
        %6056 = vmatmul.mubr.bf16.gmra.mrb[0].mxu0 %v5681
        %v6057 = vpop.f32.mrb[0].mxu0
        %v6058 = vadd.f32 0.0, %v6057
        %v6059 = vpop.f32.mrb[0].mxu0
        %v6060 = vadd.f32 0.0, %v6059
        %v6061 = vpop.f32.mrb[0].mxu0
        %v6062 = vadd.f32 0.0, %v6061
        %v6063 = vpop.f32.mrb[0].mxu0
        %v6064 = vadd.f32 0.0, %v6063
        %6065 = vmatprep.mubr.bf16.mxu0 0
        %6066 = vmatmul.mubr.bf16.gmra.mrb[0].mxu0 %v5682
        %v6067 = vpop.f32.mrb[0].mxu0
        %v6068 = vadd.f32 0.0, %v6067
        %v6069 = vpop.f32.mrb[0].mxu0
        %v6070 = vadd.f32 0.0, %v6069
        %v6071 = vpop.f32.mrb[0].mxu0
        %v6072 = vadd.f32 0.0, %v6071
        %v6073 = vpop.f32.mrb[0].mxu0
        %v6074 = vadd.f32 0.0, %v6073
        %6075 = vmatprep.mubr.bf16.mxu0 0
        %6076 = vmatmul.mubr.bf16.gmra.mrb[0].mxu0 %v5683
        %v6077 = vpop.f32.mrb[0].mxu0
        %v6078 = vadd.f32 0.0, %v6077
        %v6079 = vpop.f32.mrb[0].mxu0
        %v6080 = vadd.f32 0.0, %v6079
        %v6081 = vpop.f32.mrb[0].mxu0
        %v6082 = vadd.f32 0.0, %v6081
        %v6083 = vpop.f32.mrb[0].mxu0
        %v6084 = vadd.f32 0.0, %v6083
        %6085 = vdwg.mxu0
        %6086 = vmatprep.subr.bf16.mxu0 0
        %6087 = vmatpush1.bf16.msra.mxu0 %v5864
        %6088 = vmatprep.subr.bf16.mxu0 0
        %6089 = vmatpush1.bf16.msra.mxu0 %v5869
        %6090 = vmatprep.subr.bf16.mxu0 0
        %6091 = vmatpush1.bf16.msra.mxu0 %v5874
        %6092 = vmatprep.subr.bf16.mxu0 0
        %6093 = vmatpush1.bf16.msra.mxu0 %v5879
        %6094 = vmatprep.subr.bf16.mxu0 0
        %6095 = vmatpush1.bf16.msra.mxu0 %v5884
        %6096 = vmatprep.subr.bf16.mxu0 0
        %6097 = vmatpush1.bf16.msra.mxu0 %v5889
        %6098 = vmatprep.subr.bf16.mxu0 0
        %6099 = vmatpush1.bf16.msra.mxu0 %v5894
        %6100 = vmatprep.subr.bf16.mxu0 0
        %6101 = vmatpush1.bf16.msra.mxu0 %v5899
        %6102 = vmatprep.subr.bf16.mxu0 0
        %6103 = vmatpush1.bf16.msra.mxu0 0
        %6104 = vmatprep.subr.bf16.mxu0 0
        %6105 = vmatpush1.bf16.msra.mxu0 0
        %6106 = vmatprep.subr.bf16.mxu0 0
        %6107 = vmatpush1.bf16.msra.mxu0 0
        %6108 = vmatprep.subr.bf16.mxu0 0
        %6109 = vmatpush1.bf16.msra.mxu0 0
        %6110 = vmatprep.subr.bf16.mxu0 0
        %6111 = vmatpush1.bf16.msra.mxu0 0
        %6112 = vmatprep.subr.bf16.mxu0 0
        %6113 = vmatpush1.bf16.msra.mxu0 0
        %6114 = vmatprep.subr.bf16.mxu0 0
        %6115 = vmatpush1.bf16.msra.mxu0 0
        %6116 = vmatprep.subr.bf16.mxu0 0
        %6117 = vmatpush1.bf16.msra.mxu0 0
        %6118 = vmatprep.mubr.bf16.mxu0 0
        %6119 = vmatmul.mubr.bf16.gmra.mrb[0].mxu0 %v5680
        %v6120 = vpop.f32.mrb[0].mxu0
        %v6121 = vadd.f32 0.0, %v6120
        %v6122 = vpop.f32.mrb[0].mxu0
        %v6123 = vpop.f32.mrb[0].mxu0
        %v6124 = vadd.f32 0.0, %v6123
        %v6125 = vpop.f32.mrb[0].mxu0
        %6126 = vmatprep.mubr.bf16.mxu0 0
        %6127 = vmatmul.mubr.bf16.gmra.mrb[0].mxu0 %v5681
        %v6128 = vpop.f32.mrb[0].mxu0
        %v6129 = vadd.f32 0.0, %v6128
        %v6130 = vpop.f32.mrb[0].mxu0
        %v6131 = vpop.f32.mrb[0].mxu0
        %v6132 = vadd.f32 0.0, %v6131
        %v6133 = vpop.f32.mrb[0].mxu0
        %6134 = vmatprep.mubr.bf16.mxu0 0
        %6135 = vmatmul.mubr.bf16.gmra.mrb[0].mxu0 %v5682
        %v6136 = vpop.f32.mrb[0].mxu0
        %v6137 = vadd.f32 0.0, %v6136
        %v6138 = vpop.f32.mrb[0].mxu0
        %v6139 = vpop.f32.mrb[0].mxu0
        %v6140 = vadd.f32 0.0, %v6139
        %v6141 = vpop.f32.mrb[0].mxu0
        %6142 = vmatprep.mubr.bf16.mxu0 0
        %6143 = vmatmul.mubr.bf16.gmra.mrb[0].mxu0 %v5683
        %v6144 = vpop.f32.mrb[0].mxu0
        %v6145 = vadd.f32 0.0, %v6144
        %v6146 = vpop.f32.mrb[0].mxu0
        %v6147 = vpop.f32.mrb[0].mxu0
        %v6148 = vadd.f32 0.0, %v6147
        %v6149 = vpop.f32.mrb[0].mxu0
        %6150 = vdwg.mxu0
        %v6159 = vrot.slane %v5977, 1
        %v6160 = vrot.slane %v5981, 1
        %v6161 = vsel %vm1902, %v6159, %v6160
        %v6162 = vrot.slane %v5987, 1
        %v6163 = vsel %vm1902, %v6160, %v6162
        %v6164 = vrot.slane %v5991, 1
        %v6165 = vsel %vm1902, %v6162, %v6164
        %v6166 = vrot.slane %v5997, 1
        %v6167 = vsel %vm1902, %v6164, %v6166
        %v6168 = vrot.slane %v6001, 1
        %v6169 = vsel %vm1902, %v6166, %v6168
        %v6170 = vrot.slane %v6007, 1
        %v6171 = vsel %vm1902, %v6168, %v6170
        %v6172 = vrot.slane %v6011, 1
        %v6173 = vsel %vm1902, %v6170, %v6172
        %v6182 = vadd.f32 %v5975, %v6161
        %v6183 = vadd.f32 %v5979, %v6163
        %v6184 = vadd.f32 %v5985, %v6165
        %v6185 = vadd.f32 %v5989, %v6167
        %v6186 = vadd.f32 %v5995, %v6169
        %v6187 = vadd.f32 %v5999, %v6171
        %v6188 = vadd.f32 %v6005, %v6173
        %v6189 = vadd.f32 %v6009, %v6172
        %v6198 = vrot.slane %v6048, 2
        %v6199 = vrot.slane %v6052, 2
        %v6200 = vsel %vm2221, %v6198, %v6199
        %v6201 = vrot.slane %v6058, 2
        %v6202 = vsel %vm2221, %v6199, %v6201
        %v6203 = vrot.slane %v6062, 2
        %v6204 = vsel %vm2221, %v6201, %v6203
        %v6205 = vrot.slane %v6068, 2
        %v6206 = vsel %vm2221, %v6203, %v6205
        %v6207 = vrot.slane %v6072, 2
        %v6208 = vsel %vm2221, %v6205, %v6207
        %v6209 = vrot.slane %v6078, 2
        %v6210 = vsel %vm2221, %v6207, %v6209
        %v6211 = vrot.slane %v6082, 2
        %v6212 = vsel %vm2221, %v6209, %v6211
        %v6221 = vadd.f32 %v6182, %v6200
        %v6222 = vadd.f32 %v6183, %v6202
        %v6223 = vadd.f32 %v6184, %v6204
        %v6224 = vadd.f32 %v6185, %v6206
        %v6225 = vadd.f32 %v6186, %v6208
        %v6226 = vadd.f32 %v6187, %v6210
        %v6227 = vadd.f32 %v6188, %v6212
        %v6228 = vadd.f32 %v6189, %v6211
        %v6237 = vrot.slane %v6050, 3
        %v6238 = vrot.slane %v6054, 3
        %v6239 = vsel %vm2540, %v6237, %v6238
        %v6240 = vrot.slane %v6060, 3
        %v6241 = vsel %vm2540, %v6238, %v6240
        %v6242 = vrot.slane %v6064, 3
        %v6243 = vsel %vm2540, %v6240, %v6242
        %v6244 = vrot.slane %v6070, 3
        %v6245 = vsel %vm2540, %v6242, %v6244
        %v6246 = vrot.slane %v6074, 3
        %v6247 = vsel %vm2540, %v6244, %v6246
        %v6248 = vrot.slane %v6080, 3
        %v6249 = vsel %vm2540, %v6246, %v6248
        %v6250 = vrot.slane %v6084, 3
        %v6251 = vsel %vm2540, %v6248, %v6250
        %v6260 = vadd.f32 %v6221, %v6239
        %v6261 = vadd.f32 %v6222, %v6241
        %v6262 = vadd.f32 %v6223, %v6243
        %v6263 = vadd.f32 %v6224, %v6245
        %v6264 = vadd.f32 %v6225, %v6247
        %v6265 = vadd.f32 %v6226, %v6249
        %v6266 = vadd.f32 %v6227, %v6251
        %v6267 = vadd.f32 %v6228, %v6250
        %v6276 = vrot.slane %v6121, 4
        %v6277 = vrot.slane %v6124, 4
        %v6278 = vsel %vm2859, %v6276, %v6277
        %v6279 = vrot.slane %v6129, 4
        %v6280 = vsel %vm2859, %v6277, %v6279
        %v6281 = vrot.slane %v6132, 4
        %v6282 = vsel %vm2859, %v6279, %v6281
        %v6283 = vrot.slane %v6137, 4
        %v6284 = vsel %vm2859, %v6281, %v6283
        %v6285 = vrot.slane %v6140, 4
        %v6286 = vsel %vm2859, %v6283, %v6285
        %v6287 = vrot.slane %v6145, 4
        %v6288 = vsel %vm2859, %v6285, %v6287
        %v6289 = vrot.slane %v6148, 4
        %v6290 = vsel %vm2859, %v6287, %v6289
        %v6299 = vadd.f32 %v6260, %v6278
        %v6300 = vadd.f32 %v6261, %v6280
        %v6301 = vadd.f32 %v6262, %v6282
        %v6302 = vadd.f32 %v6263, %v6284
        %v6303 = vadd.f32 %v6264, %v6286
        %v6304 = vadd.f32 %v6265, %v6288
        %v6305 = vadd.f32 %v6266, %v6290
        %v6306 = vadd.f32 %v6267, %v6289
        %v6307 = vld [vmem:[%s13] sm:$0xff]
        %v6308 = vld [vmem:[%s8] sm:$0x1]
        %v6310 = vlaneseq
        %v6311 = vshrl.u32 %v6310, 7
        %v6312 = vsub.s32 0, %v6311
        %v6313 = vrot.slane %v6308, %v6312
        %vm6315 = vcmask 490496
        %v6317 = vsel %vm6315, %v6307, 0
        %v6320 = vsel %vm2859, %v6306, 0
        %6322 = vmatprep.subr.mxu0 0.0
        %6323 = vmatpush1.msra.mxu0 %v6299
        %6324 = vmatprep.subr.mxu0 0.0
        %6325 = vmatpush1.msra.mxu0 %v6300
        %6326 = vmatprep.subr.mxu0 0.0
        %6327 = vmatpush1.msra.mxu0 %v6301
        %6328 = vmatprep.subr.mxu0 0.0
        %6329 = vmatpush1.msra.mxu0 %v6302
        %6330 = vmatprep.subr.mxu0 0.0
        %6331 = vmatpush1.msra.mxu0 %v6303
        %6332 = vmatprep.subr.mxu0 0.0
        %6333 = vmatpush1.msra.mxu0 %v6304
        %6334 = vmatprep.subr.mxu0 0.0
        %6335 = vmatpush1.msra.mxu0 %v6305
        %6336 = vmatprep.subr.mxu0 0.0
        %6337 = vmatpush1.msra.mxu0 %v6320
        %6338 = vmatprep.subr.mxu0 0.0
        %6339 = vmatpush1.msra.mxu0 0.0
        %6340 = vmatprep.subr.mxu0 0.0
        %6341 = vmatpush1.msra.mxu0 0.0
        %6342 = vmatprep.subr.mxu0 0.0
        %6343 = vmatpush1.msra.mxu0 0.0
        %6344 = vmatprep.subr.mxu0 0.0
        %6345 = vmatpush1.msra.mxu0 0.0
        %6346 = vmatprep.subr.mxu0 0.0
        %6347 = vmatpush1.msra.mxu0 0.0
        %6348 = vmatprep.subr.mxu0 0.0
        %6349 = vmatpush1.msra.mxu0 0.0
        %6350 = vmatprep.subr.mxu0 0.0
        %6351 = vmatpush1.msra.mxu0 0.0
        %6352 = vmatprep.subr.mxu0 0.0
        %6353 = vmatpush1.msra.mxu0 0.0
        %6354 = vmatprep.subr.mxu0 0.0
        %6355 = vmatpush1.msra.mxu0 0.0
        %6356 = vmatprep.subr.mxu0 0.0
        %6357 = vmatpush1.msra.mxu0 0.0
        %6358 = vmatprep.subr.mxu0 0.0
        %6359 = vmatpush1.msra.mxu0 0.0
        %6360 = vmatprep.subr.mxu0 0.0
        %6361 = vmatpush1.msra.mxu0 0.0
        %6362 = vmatprep.subr.mxu0 0.0
        %6363 = vmatpush1.msra.mxu0 0.0
        %6364 = vmatprep.subr.mxu0 0.0
        %6365 = vmatpush1.msra.mxu0 0.0
        %6366 = vmatprep.subr.mxu0 0.0
        %6367 = vmatpush1.msra.mxu0 0.0
        %6368 = vmatprep.subr.mxu0 0.0
        %6369 = vmatpush1.msra.mxu0 0.0
        %6370 = vmatprep.subr.mxu0 0.0
        %6371 = vmatpush1.msra.mxu0 0.0
        %6372 = vmatprep.subr.mxu0 0.0
        %6373 = vmatpush1.msra.mxu0 0.0
        %6374 = vmatprep.subr.mxu0 0.0
        %6375 = vmatpush1.msra.mxu0 0.0
        %6376 = vmatprep.subr.mxu0 0.0
        %6377 = vmatpush1.msra.mxu0 0.0
        %6378 = vmatprep.subr.mxu0 0.0
        %6379 = vmatpush1.msra.mxu0 0.0
        %6380 = vmatprep.subr.mxu0 0.0
        %6381 = vmatpush1.msra.mxu0 0.0
        %6382 = vmatprep.subr.mxu0 0.0
        %6383 = vmatpush1.msra.mxu0 0.0
        %6384 = vmatprep.subr.mxu0 0.0
        %6385 = vmatpush1.msra.mxu0 0.0
        %6386 = vmatprep.mubr.f32.mxu0 0.0
        %6387 = vmatmul.mubr.f32.gmra.mrb[0].mxu0 %v6317
        %v6388 = vpop.f32.mrb[0].mxu0
        %v6389 = vadd.f32 %v6313, %v6388
        %v6390 = vpop.f32.mrb[0].mxu0
        %6391 = vdwg.mxu0
        %v6392 = vmax.f32 %v6389, 0.0
        %v6393 = vpack.c.bf16 %v6392, %v6392
        %v6394 = vld [vmem:[#allocation11] sm:$0xf]
        %v6395 = vld [vmem:[#allocation11 + $0x4] sm:$0xf]
        %v6396 = vld [vmem:[#allocation11 + $0x8] sm:$0xf]
        %v6397 = vld [vmem:[#allocation11 + $0xc] sm:$0xf]
        %v6398 = vld [vmem:[#allocation11 + $0x10] sm:$0xf]
        %v6399 = vld [vmem:[#allocation11 + $0x14] sm:$0xf]
        %v6400 = vld [vmem:[#allocation11 + $0x18] sm:$0xf]
        %v6401 = vld [vmem:[#allocation11 + $0x1c] sm:$0xf]
        %v6402 = vld [vmem:[#allocation11 + $0x20] sm:$0xf]
        %v6403 = vld [vmem:[#allocation11 + $0x24] sm:$0xf]
        %v6404 = vld [vmem:[#allocation11 + $0x28] sm:$0xf]
        %v6405 = vld [vmem:[#allocation11 + $0x2c] sm:$0xf]
        %v6406 = vld [vmem:[#allocation11 + $0x30] sm:$0xf]
        %v6407 = vld [vmem:[#allocation11 + $0x34] sm:$0xf]
        %v6408 = vld [vmem:[#allocation11 + $0x38] sm:$0xf]
        %v6409 = vld [vmem:[#allocation11 + $0x3c] sm:$0xf]
        %v6410 = vld [vmem:[#allocation13] sm:$0x1]
        %v6412 = vlaneseq
        %v6413 = vshrl.u32 %v6412, 7
        %v6414 = vsub.s32 0, %v6413
        %v6415 = vrot.slane %v6410, %v6414
        %v6433 = vunpack.c.l.b16 %v6394
        %v6434 = vunpack.c.l.b16 %v6395
        %v6435 = vunpack.c.l.b16 %v6396
        %v6436 = vunpack.c.l.b16 %v6397
        %v6437 = vunpack.c.l.b16 %v6398
        %v6438 = vunpack.c.l.b16 %v6399
        %v6439 = vunpack.c.l.b16 %v6400
        %v6440 = vunpack.c.l.b16 %v6401
        %v6441 = vunpack.c.l.b16 %v6402
        %v6442 = vunpack.c.l.b16 %v6403
        %v6443 = vunpack.c.l.b16 %v6404
        %v6444 = vunpack.c.l.b16 %v6405
        %v6445 = vunpack.c.l.b16 %v6406
        %v6446 = vunpack.c.l.b16 %v6407
        %v6447 = vunpack.c.l.b16 %v6408
        %v6448 = vunpack.c.l.b16 %v6409
        %v6449 = vpack.c.b16 %v6434, %v6433
        %v6450 = vpack.c.b16 %v6436, %v6435
        %v6451 = vpack.c.b16 %v6438, %v6437
        %v6452 = vpack.c.b16 %v6440, %v6439
        %v6453 = vpack.c.b16 %v6442, %v6441
        %v6454 = vpack.c.b16 %v6444, %v6443
        %v6455 = vpack.c.b16 %v6446, %v6445
        %v6456 = vpack.c.b16 %v6448, %v6447
        %6465 = vmatprep.subr.bf16.mxu0 0
        %6466 = vmatpush1.bf16.msra.mxu0 %v6449
        %6467 = vmatprep.subr.bf16.mxu0 0
        %6468 = vmatpush1.bf16.msra.mxu0 %v6450
        %6469 = vmatprep.subr.bf16.mxu0 0
        %6470 = vmatpush1.bf16.msra.mxu0 %v6451
        %6471 = vmatprep.subr.bf16.mxu0 0
        %6472 = vmatpush1.bf16.msra.mxu0 %v6452
        %6473 = vmatprep.subr.bf16.mxu0 0
        %6474 = vmatpush1.bf16.msra.mxu0 %v6453
        %6475 = vmatprep.subr.bf16.mxu0 0
        %6476 = vmatpush1.bf16.msra.mxu0 %v6454
        %6477 = vmatprep.subr.bf16.mxu0 0
        %6478 = vmatpush1.bf16.msra.mxu0 %v6455
        %6479 = vmatprep.subr.bf16.mxu0 0
        %6480 = vmatpush1.bf16.msra.mxu0 %v6456
        %6481 = vmatprep.subr.bf16.mxu0 0
        %6482 = vmatpush1.bf16.msra.mxu0 0
        %6483 = vmatprep.subr.bf16.mxu0 0
        %6484 = vmatpush1.bf16.msra.mxu0 0
        %6485 = vmatprep.subr.bf16.mxu0 0
        %6486 = vmatpush1.bf16.msra.mxu0 0
        %6487 = vmatprep.subr.bf16.mxu0 0
        %6488 = vmatpush1.bf16.msra.mxu0 0
        %6489 = vmatprep.subr.bf16.mxu0 0
        %6490 = vmatpush1.bf16.msra.mxu0 0
        %6491 = vmatprep.subr.bf16.mxu0 0
        %6492 = vmatpush1.bf16.msra.mxu0 0
        %6493 = vmatprep.subr.bf16.mxu0 0
        %6494 = vmatpush1.bf16.msra.mxu0 0
        %6495 = vmatprep.subr.bf16.mxu0 0
        %6496 = vmatpush1.bf16.msra.mxu0 0
        %6497 = vmatprep.mubr.bf16.mxu0 0
        %6498 = vmatmul.mubr.bf16.gmra.mrb[0].mxu0 %v6393
        %v6499 = vpop.f32.mrb[0].mxu0
        %v6500 = vadd.f32 %v6415, %v6499
        %v6501 = vpop.f32.mrb[0].mxu0
        %v6502 = vpop.f32.mrb[0].mxu0
        %v6503 = vpop.f32.mrb[0].mxu0
        %6504 = vdwg.mxu0
        %v6505 = vmax.f32 %v6500, 0.0
        %v6506 = vpack.c.bf16 %v6505, %v6505
        %v6507 = vld [vmem:[#allocation14] sm:$0xf]
        %v6508 = vld [vmem:[#allocation14 + $0x4] sm:$0xf]
        %v6509 = vld [vmem:[#allocation14 + $0x8] sm:$0xf]
        %v6510 = vld [vmem:[#allocation14 + $0xc] sm:$0xf]
        %v6511 = vld [vmem:[#allocation14 + $0x10] sm:$0xf]
        %v6512 = vld [vmem:[#allocation14 + $0x14] sm:$0xf]
        %v6513 = vld [vmem:[#allocation14 + $0x18] sm:$0xf]
        %v6514 = vld [vmem:[#allocation14 + $0x1c] sm:$0xf]
        %v6515 = vld [vmem:[#allocation14 + $0x20] sm:$0xf]
        %v6516 = vld [vmem:[#allocation14 + $0x24] sm:$0xf]
        %v6517 = vld [vmem:[#allocation14 + $0x28] sm:$0xf]
        %v6518 = vld [vmem:[#allocation14 + $0x2c] sm:$0xf]
        %v6519 = vld [vmem:[#allocation14 + $0x30] sm:$0xf]
        %v6520 = vld [vmem:[#allocation14 + $0x34] sm:$0xf]
        %v6521 = vld [vmem:[#allocation14 + $0x38] sm:$0xf]
        %v6522 = vld [vmem:[#allocation14 + $0x3c] sm:$0xf]
        %v6523 = vld [vmem:[#allocation16] sm:$0x1]
        %v6525 = vlaneseq
        %v6526 = vshrl.u32 %v6525, 7
        %v6527 = vsub.s32 0, %v6526
        %v6528 = vrot.slane %v6523, %v6527
        %v6546 = vunpack.c.l.b16 %v6507
        %v6547 = vunpack.c.l.b16 %v6508
        %v6548 = vunpack.c.l.b16 %v6509
        %v6549 = vunpack.c.l.b16 %v6510
        %v6550 = vunpack.c.l.b16 %v6511
        %v6551 = vunpack.c.l.b16 %v6512
        %v6552 = vunpack.c.l.b16 %v6513
        %v6553 = vunpack.c.l.b16 %v6514
        %v6554 = vunpack.c.l.b16 %v6515
        %v6555 = vunpack.c.l.b16 %v6516
        %v6556 = vunpack.c.l.b16 %v6517
        %v6557 = vunpack.c.l.b16 %v6518
        %v6558 = vunpack.c.l.b16 %v6519
        %v6559 = vunpack.c.l.b16 %v6520
        %v6560 = vunpack.c.l.b16 %v6521
        %v6561 = vunpack.c.l.b16 %v6522
        %v6562 = vpack.c.b16 %v6547, %v6546
        %v6563 = vpack.c.b16 %v6549, %v6548
        %v6564 = vpack.c.b16 %v6551, %v6550
        %v6565 = vpack.c.b16 %v6553, %v6552
        %v6566 = vpack.c.b16 %v6555, %v6554
        %v6567 = vpack.c.b16 %v6557, %v6556
        %v6568 = vpack.c.b16 %v6559, %v6558
        %v6569 = vpack.c.b16 %v6561, %v6560
        %6578 = vmatprep.subr.bf16.mxu0 0
        %6579 = vmatpush1.bf16.msra.mxu0 %v6562
        %6580 = vmatprep.subr.bf16.mxu0 0
        %6581 = vmatpush1.bf16.msra.mxu0 %v6563
        %6582 = vmatprep.subr.bf16.mxu0 0
        %6583 = vmatpush1.bf16.msra.mxu0 %v6564
        %6584 = vmatprep.subr.bf16.mxu0 0
        %6585 = vmatpush1.bf16.msra.mxu0 %v6565
        %6586 = vmatprep.subr.bf16.mxu0 0
        %6587 = vmatpush1.bf16.msra.mxu0 %v6566
        %6588 = vmatprep.subr.bf16.mxu0 0
        %6589 = vmatpush1.bf16.msra.mxu0 %v6567
        %6590 = vmatprep.subr.bf16.mxu0 0
        %6591 = vmatpush1.bf16.msra.mxu0 %v6568
        %6592 = vmatprep.subr.bf16.mxu0 0
        %6593 = vmatpush1.bf16.msra.mxu0 %v6569
        %6594 = vmatprep.subr.bf16.mxu0 0
        %6595 = vmatpush1.bf16.msra.mxu0 0
        %6596 = vmatprep.subr.bf16.mxu0 0
        %6597 = vmatpush1.bf16.msra.mxu0 0
        %6598 = vmatprep.subr.bf16.mxu0 0
        %6599 = vmatpush1.bf16.msra.mxu0 0
        %6600 = vmatprep.subr.bf16.mxu0 0
        %6601 = vmatpush1.bf16.msra.mxu0 0
        %6602 = vmatprep.subr.bf16.mxu0 0
        %6603 = vmatpush1.bf16.msra.mxu0 0
        %6604 = vmatprep.subr.bf16.mxu0 0
        %6605 = vmatpush1.bf16.msra.mxu0 0
        %6606 = vmatprep.subr.bf16.mxu0 0
        %6607 = vmatpush1.bf16.msra.mxu0 0
        %6608 = vmatprep.subr.bf16.mxu0 0
        %6609 = vmatpush1.bf16.msra.mxu0 0
        %6610 = vmatprep.mubr.bf16.mxu0 0
        %6611 = vmatmul.mubr.bf16.gmra.mrb[0].mxu0 %v6506
        %v6612 = vpop.f32.mrb[0].mxu0
        %v6613 = vadd.f32 %v6528, %v6612
        %v6614 = vpop.f32.mrb[0].mxu0
        %v6615 = vpop.f32.mrb[0].mxu0
        %v6616 = vpop.f32.mrb[0].mxu0
        %6617 = vdwg.mxu0
        %6618 = vst [vmem:[%s584] sm:$0xff] %v6613
        %s6619 = sand.u32 %s340, 1
        %s6620 = scalar_lea.sflag [#allocation4], %s6619
        %s6621 = sand.u32 %s340, 1
        %s6622 = smul.addr %s6621, 8
        %s6623 = scalar_lea.vmem [#allocation17], %s6622
        // Predicated region
        $region113: #{net_forward.1} parent=75 // pred_check
          %p6624 = pneg %p350
        $region114: #{net_forward.1} parent=75 // pred_check_branch
          %6626 = sbr.rel (%p6624) target = $region116
        $region115: #{net_forward.1} parent=75 // pred_region
          %s6628 = ssub.s32 128, 128
          %6629 = vsyncadd %s6620, %s6628
          %s6630 = smul.addr %s33, 128
          %s6631 = scalar_lea.hbm %s14, %s6630
          %s6633 = sshll.u32 %s6623, 4
          %s6634 = int_to_ptr.vmem [resolvable:$true] %s6633
          %6636 = dma.vmem_to_hbm [thread:$0]  %s6634, 128, %s6631, %s6620
        $region116: #{net_forward.1} parent=75 // pred_fallthru
          _
      $region76: #{net_forward.1} parent=5 // pred_fallthru
        _
      %p6637 = scmp.le.s32.totalorder 2, %s28
      // Predicated region
      $region117: #{net_forward.1} parent=5 // pred_check
        %p6638 = pneg %p6637
      $region118: #{net_forward.1} parent=5 // pred_check_branch
        %6640 = sbr.rel (%p6638) target = $region120
      $region119: #{net_forward.1} parent=5 // pred_region
        %s6641 = ssub.s32 %s28, 2
        // Predicated region
        $region121: #{net_forward.1} parent=119 // pred_check
          %p6642 = pneg %p356
        $region122: #{net_forward.1} parent=119 // pred_check_branch
          %6644 = sbr.rel (%p6642) target = $region124
        $region123: #{net_forward.1} parent=119 // pred_region
          %s6645 = sand.u32 %s341, 1
          %s6646 = scalar_lea.sflag [#allocation4], %s6645
          %s6647 = sand.u32 %s341, 1
          %s6648 = smul.addr %s6647, 8
          %s6649 = scalar_lea.vmem [#allocation17], %s6648
          %6650 = dma.done %s6646, 128
        $region124: #{net_forward.1} parent=119 // pred_fallthru
          _
      $region120: #{net_forward.1} parent=5 // pred_fallthru
        _
    $region6: #{net_forward.1} parent=1 // loop_footer
      %s32 = sadd.s32 1, %s28
    $region7: #{net_forward.1} parent=1 // loop_footer_branch
      %27 = sbr.rel target = $region3
    $region8: #{net_forward.1} parent=1 // loop_exit
      _
    %6651 = vsyncpa [#allocation3], 1
    %s6652 = scalar_lea.sflag [#allocation3], 1
    %6653 = vsyncpa %s6652, 1
    %6654 = vsyncpa [#allocation6], 1
    %6655 = vsyncpa [#allocation9], 1
    %6656 = vsyncpa [#allocation12], 1
    %6657 = vsyncpa [#allocation15], 1
    %6658 = vsyncpa [#allocation4], 1
    %s6659 = scalar_lea.sflag [#allocation4], 1
    %6660 = vsyncpa %s6659, 1

</llo_original>
